<compile_context>
chip_gen: v7x
topology: tpu7x:2x2x1
jax: 0.10.0
libtpu: 0.0.40
codegen_flags: <defaults>
</compile_context>

<pallas_src>
import functools

import jax
import jax.numpy as jnp
from jax.experimental import pallas as pl
from jax.experimental.pallas import tpu as pltpu


INPUT_SIZE = 20        # LSTM input_size
HIDDEN = 24            # max_length == LSTM hidden_size (real)
HP = 32                # padded hidden size (4*HP = 128 lanes = one vreg row)
GATES = 4 * HP         # 128
N_SEQS = 7             # pep + 6 CDRs
FC_HIDDEN = 64         # head hidden size

_VMEM = pl.BlockSpec(memory_space=pltpu.MemorySpace.VMEM)


# ----------------------------------------------------------------------------
# Fused Pallas kernel: BiLSTM final hidden states (both directions) + MLP head
# ----------------------------------------------------------------------------
def _fused_kernel(x_ref, wih_ref, b_ref, whh_f_ref, whh_b_ref,
                  w1_ref, b1_ref, w2_ref, b2_ref,
                  out_ref, gx_ref, *, seq_len, n_rows, batch):
    """x_ref:   (T*N, D) bf16   time-major stacked rows, row = t*N + s*B + b
       wih_ref: (D, 2*GATES) bf16  packed [fwd | bwd] input->gate weights
       b_ref:   (1, 2*GATES) f32   packed bias_ih + bias_hh, both directions
       whh_*:   (HP, GATES) bf16   packed hidden->gate weights per direction
       w1_ref:  (7, 2*HP, FC) bf16 head W1 per sequence, rows [fwd(32)|bwd(32)]
       b1/w2/b2: head params (f32); out_ref: (B, 1) f32
       gx_ref:  (T*N, 2*GATES) bf16 VMEM scratch for the hoisted input proj.
    """
    T, N, B = seq_len, n_rows, batch

    # Hoisted input projection (bf16 operands, f32 accumulation), bias folded.
    gx = jnp.dot(x_ref[...], wih_ref[...],
                 preferred_element_type=jnp.float32) + b_ref[...]
    gx_ref[...] = gx.astype(jnp.bfloat16)

    whh_f = whh_f_ref[...]                      # (HP, GATES) bf16
    whh_b = whh_b_ref[...]

    def lstm_cell(g_in, h, c, whh):
        # Recurrent matmul: bf16 operands, f32 accumulate.  Gate math in f32.
        g = g_in.astype(jnp.float32) + jnp.dot(
            h.astype(jnp.bfloat16), whh, preferred_element_type=jnp.float32)
        # Full-width transcendentals (2 EUP pushes per vreg instead of 4),
        # then cheap 32-lane slices per gate.
        sg = jax.nn.sigmoid(g)                  # (N, 128)
        tg = jnp.tanh(g)                        # (N, 128)
        i = sg[:, 0 * HP:1 * HP]
        f = sg[:, 1 * HP:2 * HP]
        u = tg[:, 2 * HP:3 * HP]
        o = sg[:, 3 * HP:4 * HP]
        c_new = f * c + i * u
        h_new = o * jnp.tanh(c_new)
        return h_new, c_new

    zeros = jnp.zeros((N, HP), jnp.float32)
    h_f, c_f, h_b, c_b = zeros, zeros, zeros, zeros

    # Fused fwd/bwd recurrence, fully unrolled (T is small and static).
    for t in range(T):
        gx_f = gx_ref[pl.ds(t * N, N), pl.ds(0, GATES)]
        gx_b = gx_ref[pl.ds((T - 1 - t) * N, N), pl.ds(GATES, GATES)]
        h_f, c_f = lstm_cell(gx_f, h_f, c_f, whh_f)
        h_b, c_b = lstm_cell(gx_b, h_b, c_b, whh_b)

    # Fused head.  Padded hidden channels of h_f/h_b are exactly 0 and the
    # matching W1 rows are 0; padded combined rows (>= 7*B) are never read.
    h_cat = jnp.concatenate([h_f, h_b], axis=1).astype(jnp.bfloat16)  # (N, 64)
    acc = jnp.zeros((B, FC_HIDDEN), jnp.float32)
    for s in range(N_SEQS):
        acc = acc + jnp.dot(h_cat[s * B:(s + 1) * B, :], w1_ref[s],
                            preferred_element_type=jnp.float32)
    # TODO(synk): dropout (p=0.5) is inference-mode identity here.
    hid = jnp.maximum(acc + b1_ref[...], 0.0)
    logits = jnp.dot(hid, w2_ref[...],
                     preferred_element_type=jnp.float32) + b2_ref[...]
    out_ref[...] = jax.nn.sigmoid(logits)


def _fused_call(x2d, p, *, seq_len, n_rows, batch):
    kernel = functools.partial(_fused_kernel, seq_len=seq_len,
                               n_rows=n_rows, batch=batch)
    return pl.pallas_call(
        kernel,
        out_shape=jax.ShapeDtypeStruct((batch, 1), jnp.float32),
        in_specs=[_VMEM] * 9,
        out_specs=_VMEM,
        scratch_shapes=[
            pltpu.VMEM((seq_len * n_rows, 2 * GATES), jnp.bfloat16)],
        compiler_params=pltpu.CompilerParams(
            # Explicit, conservative limit: safely under v7x's 64 MiB/TC,
            # well above what this kernel needs even at larger T*B.
            vmem_limit_bytes=48 * 1024 * 1024),
    )(x2d, p["wih"], p["b"], p["whh_f"], p["whh_b"],
      p["w1"], p["b1"], p["w2"], p["b2"])


# ----------------------------------------------------------------------------
# Forward wrapper
# ----------------------------------------------------------------------------
@jax.jit
def cdr123_bilstm_forward(packed_params, pep, cdr1a, cdr2a, cdr3a,
                          cdr1b, cdr2b, cdr3b):
    seqs = [pep, cdr1a, cdr2a, cdr3a, cdr1b, cdr2b, cdr3b]
    xs = jnp.stack(seqs, axis=0)                       # (7, B, T, D)
    n7, B, T, D = xs.shape
    R = n7 * B                                         # real combined rows
    N = ((R + 15) // 16) * 16                          # pad ONCE, 16-aligned
    x = xs.reshape(R, T, D)                            # row n = s*B + b
    if N != R:
        x = jnp.pad(x, ((0, N - R), (0, 0), (0, 0)))
    # time-major stacking (row = t*N + n) + bf16 cast; XLA fuses pad/transpose/
    # reshape/convert into a single relayout pass.
    x2d = x.transpose(1, 0, 2).reshape(T * N, D).astype(jnp.bfloat16)
    return _fused_call(x2d, packed_params, seq_len=T, n_rows=N, batch=B)


# ----------------------------------------------------------------------------
# Parameters: PyTorch-layout init + packing into the padded kernel layout
# ----------------------------------------------------------------------------
def init_raw_params(key):
    ks = jax.random.split(key, 12)

    def u(k, shape, scale):
        return jax.random.uniform(k, shape, jnp.float32, -scale, scale)

    s_l = 1.0 / (HIDDEN ** 0.5)
    s_1 = 1.0 / ((2 * N_SEQS * HIDDEN) ** 0.5)
    s_2 = 1.0 / (FC_HIDDEN ** 0.5)
    return {
        "w_ih_f": u(ks[0], (4 * HIDDEN, INPUT_SIZE), s_l),
        "w_hh_f": u(ks[1], (4 * HIDDEN, HIDDEN), s_l),
        "b_ih_f": u(ks[2], (4 * HIDDEN,), s_l),
        "b_hh_f": u(ks[3], (4 * HIDDEN,), s_l),
        "w_ih_b": u(ks[4], (4 * HIDDEN, INPUT_SIZE), s_l),
        "w_hh_b": u(ks[5], (4 * HIDDEN, HIDDEN), s_l),
        "b_ih_b": u(ks[6], (4 * HIDDEN,), s_l),
        "b_hh_b": u(ks[7], (4 * HIDDEN,), s_l),
        "lin_w": u(ks[8], (FC_HIDDEN, 2 * N_SEQS * HIDDEN), s_1),
        "lin_b": u(ks[9], (FC_HIDDEN,), s_1),
        "out_w": u(ks[10], (1, FC_HIDDEN), s_2),
        "out_b": u(ks[11], (1,), s_2),
    }


def pack_params(raw):
    """Repack PyTorch-layout weights into the padded (H=24 -> 32) kernel layout.
    Matmul weights are stored in bf16 (MXU operands); biases stay f32."""
    def pack_ih(w_ih):                                   # (4H, D) -> (D, GATES)
        out = jnp.zeros((INPUT_SIZE, GATES), jnp.float32)
        for g in range(4):
            out = out.at[:, g * HP:g * HP + HIDDEN].set(
                w_ih[g * HIDDEN:(g + 1) * HIDDEN, :].T)
        return out

    def pack_hh(w_hh):                                   # (4H, H) -> (HP, GATES)
        out = jnp.zeros((HP, GATES), jnp.float32)
        for g in range(4):
            out = out.at[:HIDDEN, g * HP:g * HP + HIDDEN].set(
                w_hh[g * HIDDEN:(g + 1) * HIDDEN, :].T)
        return out

    def pack_bias(b_ih, b_hh):                           # -> (1, GATES)
        b = b_ih + b_hh
        out = jnp.zeros((1, GATES), jnp.float32)
        for g in range(4):
            out = out.at[0, g * HP:g * HP + HIDDEN].set(
                b[g * HIDDEN:(g + 1) * HIDDEN])
        return out

    w1t = raw["lin_w"].T                                 # (336, 64)
    w1 = jnp.zeros((N_SEQS, 2 * HP, FC_HIDDEN), jnp.float32)
    for s in range(N_SEQS):
        w1 = w1.at[s, :HIDDEN, :].set(                   # fwd rows 0:24
            w1t[s * HIDDEN:(s + 1) * HIDDEN, :])
        w1 = w1.at[s, HP:HP + HIDDEN, :].set(            # bwd rows 32:56
            w1t[N_SEQS * HIDDEN + s * HIDDEN:
                N_SEQS * HIDDEN + (s + 1) * HIDDEN, :])

    return {
        "wih": jnp.concatenate([pack_ih(raw["w_ih_f"]),
                                pack_ih(raw["w_ih_b"])],
                               axis=1).astype(jnp.bfloat16),   # (20, 256)
        "b": jnp.concatenate([pack_bias(raw["b_ih_f"], raw["b_hh_f"]),
                              pack_bias(raw["b_ih_b"], raw["b_hh_b"])],
                             axis=1),                          # (1, 256) f32
        "whh_f": pack_hh(raw["w_hh_f"]).astype(jnp.bfloat16),  # (32, 128)
        "whh_b": pack_hh(raw["w_hh_b"]).astype(jnp.bfloat16),
        "w1": w1.astype(jnp.bfloat16),                         # (7, 64, 64)
        "b1": raw["lin_b"].reshape(1, FC_HIDDEN),
        "w2": raw["out_w"].T,                                  # (64, 1) f32
        "b2": raw["out_b"].reshape(1, 1),
    }


# ----------------------------------------------------------------------------
# Pure-JAX references (PyTorch semantics) for correctness checking
# ----------------------------------------------------------------------------
def _lstm_dir_ref(x, w_ih, w_hh, b_ih, b_hh, reverse):
    B, T, _ = x.shape
    H = w_hh.shape[1]
    hp = jax.lax.Precision.HIGHEST
    h = jnp.zeros((B, H), jnp.float32)
    c = jnp.zeros((B, H), jnp.float32)
    ts = range(T - 1, -1, -1) if reverse else range(T)
    for t in ts:
        g = (jnp.dot(x[:, t], w_ih.T, precision=hp)
             + jnp.dot(h, w_hh.T, precision=hp) + b_ih + b_hh)
        i = jax.nn.sigmoid(g[:, 0:H])
        f = jax.nn.sigmoid(g[:, H:2 * H])
        u = jnp.tanh(g[:, 2 * H:3 * H])
        o = jax.nn.sigmoid(g[:, 3 * H:4 * H])
        c = f * c + i * u
        h = o * jnp.tanh(c)
    return h


def reference_forward(raw, seqs):
    """Full-f32 (HIGHEST precision) reference."""
    hp = jax.lax.Precision.HIGHEST
    hf = [_lstm_dir_ref(x, raw["w_ih_f"], raw["w_hh_f"],
                        raw["b_ih_f"], raw["b_hh_f"], False) for x in seqs]
    hb = [_lstm_dir_ref(x, raw["w_ih_b"], raw["w_hh_b"],
                        raw["b_ih_b"], raw["b_hh_b"], True) for x in seqs]
    feat = jnp.concatenate(hf + hb, axis=1)              # (B, 336)
    hid = jnp.maximum(jnp.dot(feat, raw["lin_w"].T, precision=hp)
                      + raw["lin_b"], 0.0)
    return jax.nn.sigmoid(jnp.dot(hid, raw["out_w"].T, precision=hp)
                          + raw["out_b"])


def _lstm_dir_bf16(x, w_ih, w_hh, b_ih, b_hh, reverse):
    """Reference that mimics the kernel's precision: bf16 matmul operands,
    f32 accumulation, bf16 gx storage, f32 gate math."""
    B, T, _ = x.shape
    H = w_hh.shape[1]
    h = jnp.zeros((B, H), jnp.float32)
    c = jnp.zeros((B, H), jnp.float32)
    wiT = w_ih.T.astype(jnp.bfloat16)
    whT = w_hh.T.astype(jnp.bfloat16)
    bias = (b_ih + b_hh).astype(jnp.float32)
    ts = range(T - 1, -1, -1) if reverse else range(T)
    for t in ts:
        gx = (jnp.dot(x[:, t].astype(jnp.bfloat16), wiT,
                      preferred_element_type=jnp.float32)
              + bias).astype(jnp.bfloat16)
        g = gx.astype(jnp.float32) + jnp.dot(
            h.astype(jnp.bfloat16), whT, preferred_element_type=jnp.float32)
        i = jax.nn.sigmoid(g[:, 0:H])
        f = jax.nn.sigmoid(g[:, H:2 * H])
        u = jnp.tanh(g[:, 2 * H:3 * H])
        o = jax.nn.sigmoid(g[:, 3 * H:4 * H])
        c = f * c + i * u
        h = o * jnp.tanh(c)
    return h


def reference_forward_bf16(raw, seqs):
    hf = [_lstm_dir_bf16(x, raw["w_ih_f"], raw["w_hh_f"],
                         raw["b_ih_f"], raw["b_hh_f"], False) for x in seqs]
    hb = [_lstm_dir_bf16(x, raw["w_ih_b"], raw["w_hh_b"],
                         raw["b_ih_b"], raw["b_hh_b"], True) for x in seqs]
    feat = jnp.concatenate(hf + hb, axis=1)              # (B, 336)
    acc = jnp.dot(feat.astype(jnp.bfloat16),
                  raw["lin_w"].T.astype(jnp.bfloat16),
                  preferred_element_type=jnp.float32) + raw["lin_b"]
    hid = jnp.maximum(acc, 0.0)
    logit = jnp.dot(hid, raw["out_w"].T,
                    precision=jax.lax.Precision.HIGHEST) + raw["out_b"]
    return jax.nn.sigmoid(logit)


# ----------------------------------------------------------------------------
if __name__ == "__main__":
    B, T = 2, 8   # small shapes: batch=2, seq=8, features=20

    key = jax.random.PRNGKey(0)
    pkey, dkey = jax.random.split(key)

    raw = init_raw_params(pkey)
    packed = pack_params(raw)

    keys = jax.random.split(dkey, N_SEQS)
    seqs = [jax.random.normal(k, (B, T, INPUT_SIZE), jnp.float32) for k in keys]

    out = cdr123_bilstm_forward(packed, *seqs)
    out = jax.block_until_ready(out)

    assert out.shape == (B, 1), out.shape
    assert bool(jnp.all(jnp.isfinite(out)))

    # Strong structural check vs a reference with matching (bf16-operand)
    # matmul precision, plus a sanity check vs the full-f32 reference.
    ref_bf16 = reference_forward_bf16(raw, seqs)
    ref_f32 = reference_forward(raw, seqs)
    err_bf16 = float(jnp.max(jnp.abs(out - ref_bf16)))
    err_f32 = float(jnp.max(jnp.abs(out - ref_f32)))
    assert err_bf16 < 5e-3, f"mismatch vs bf16-matmul reference: {err_bf16}"
    assert err_f32 < 4e-2, f"mismatch vs f32 reference: {err_f32}"

    print("KERNEL_OK")
</pallas_src>

<mosaic_0001>
module attributes {stable_mosaic.version = 11 : i64} {
  func.func @_fused_kernel(%arg0: memref<128x20xbf16, #tpu.memory_space<vmem>>, %arg1: memref<20x256xbf16, #tpu.memory_space<vmem>>, %arg2: memref<1x256xf32, #tpu.memory_space<vmem>>, %arg3: memref<32x128xbf16, #tpu.memory_space<vmem>>, %arg4: memref<32x128xbf16, #tpu.memory_space<vmem>>, %arg5: memref<7x64x64xbf16, #tpu.memory_space<vmem>>, %arg6: memref<1x64xf32, #tpu.memory_space<vmem>>, %arg7: memref<64x1xf32, #tpu.memory_space<vmem>>, %arg8: memref<1x1xf32, #tpu.memory_space<vmem>>, %arg9: memref<2x1xf32, #tpu.memory_space<vmem>>, %arg10: memref<128x256xbf16, #tpu.memory_space<vmem>>) attributes {dimension_semantics = [], scalar_prefetch = 0 : i64, scratch_operands = 1 : i64, tpu.core_type = #tpu.core_type<tc>} {
    %c0 = arith.constant 0 : index
    %c0_0 = arith.constant 0 : index
    %0 = vector.load %arg0[%c0, %c0_0] : memref<128x20xbf16, #tpu.memory_space<vmem>>, vector<128x20xbf16>
    %c0_1 = arith.constant 0 : index
    %c0_2 = arith.constant 0 : index
    %1 = vector.load %arg1[%c0_1, %c0_2] : memref<20x256xbf16, #tpu.memory_space<vmem>>, vector<20x256xbf16>
    %cst = arith.constant dense<0.000000e+00> : vector<128x256xf32>
    %2 = tpu.matmul %0, %1, %cst {dimension_numbers = #tpu.dot_dimension_numbers<[1], [0], [0], [1], [0, 0, 1, 1], [], []>} : vector<128x20xbf16>, vector<20x256xbf16>, vector<128x256xf32> -> vector<128x256xf32>
    %c0_3 = arith.constant 0 : index
    %c0_4 = arith.constant 0 : index
    %3 = vector.load %arg2[%c0_3, %c0_4] : memref<1x256xf32, #tpu.memory_space<vmem>>, vector<1x256xf32>
    %4 = vector.broadcast %3 : vector<1x256xf32> to vector<128x256xf32>
    %5 = arith.addf %2, %4 : vector<128x256xf32>
    %6 = arith.truncf %5 : vector<128x256xf32> to vector<128x256xbf16>
    %c0_5 = arith.constant 0 : index
    %c0_6 = arith.constant 0 : index
    %7 = vector.load %arg10[%c0_5, %c0_6] : memref<128x256xbf16, #tpu.memory_space<vmem>>, vector<128x256xbf16>
    tpu.vector_store %arg10[%c0_5, %c0_6], %6 {strides = array<i32>} : memref<128x256xbf16, #tpu.memory_space<vmem>>, vector<128x256xbf16>,
    %c0_7 = arith.constant 0 : index
    %c0_8 = arith.constant 0 : index
    %8 = vector.load %arg3[%c0_7, %c0_8] : memref<32x128xbf16, #tpu.memory_space<vmem>>, vector<32x128xbf16>
    %c0_9 = arith.constant 0 : index
    %c0_10 = arith.constant 0 : index
    %9 = vector.load %arg4[%c0_9, %c0_10] : memref<32x128xbf16, #tpu.memory_space<vmem>>, vector<32x128xbf16>
    %cst_11 = arith.constant 0.000000e+00 : f32
    %10 = vector.broadcast %cst_11 : f32 to vector<16x32xf32>
    %c0_12 = arith.constant 0 : index
    %c0_13 = arith.constant 0 : index
    %11 = vector.load %arg10[%c0_12, %c0_13] : memref<128x256xbf16, #tpu.memory_space<vmem>>, vector<16x128xbf16>
    %c112 = arith.constant 112 : index
    %c128 = arith.constant 128 : index
    %12 = vector.load %arg10[%c112, %c128] : memref<128x256xbf16, #tpu.memory_space<vmem>>, vector<16x128xbf16>
    %13 = arith.extf %11 : vector<16x128xbf16> to vector<16x128xf32>
    %14 = arith.truncf %10 : vector<16x32xf32> to vector<16x32xbf16>
    %cst_14 = arith.constant dense<0.000000e+00> : vector<16x128xf32>
    %15 = tpu.matmul %14, %8, %cst_14 {dimension_numbers = #tpu.dot_dimension_numbers<[1], [0], [0], [1], [0, 0, 1, 1], [], []>} : vector<16x32xbf16>, vector<32x128xbf16>, vector<16x128xf32> -> vector<16x128xf32>
    %16 = arith.addf %13, %15 : vector<16x128xf32>
    %17 = arith.negf %16 : vector<16x128xf32>
    %18 = math.exp %17 : vector<16x128xf32>
    %cst_15 = arith.constant 1.000000e+00 : f32
    %19 = vector.broadcast %cst_15 : f32 to vector<16x128xf32>
    %20 = arith.addf %19, %18 : vector<16x128xf32>
    %21 = arith.divf %19, %20 : vector<16x128xf32>
    %22 = math.tanh %16 : vector<16x128xf32>
    %23 = vector.extract_strided_slice %21 {offsets = [0, 0], sizes = [16, 32], strides = [1, 1]} : vector<16x128xf32> to vector<16x32xf32>
    %24 = vector.extract_strided_slice %21 {offsets = [0, 32], sizes = [16, 32], strides = [1, 1]} : vector<16x128xf32> to vector<16x32xf32>
    %25 = vector.extract_strided_slice %22 {offsets = [0, 64], sizes = [16, 32], strides = [1, 1]} : vector<16x128xf32> to vector<16x32xf32>
    %26 = vector.extract_strided_slice %21 {offsets = [0, 96], sizes = [16, 32], strides = [1, 1]} : vector<16x128xf32> to vector<16x32xf32>
    %27 = arith.mulf %24, %10 : vector<16x32xf32>
    %28 = arith.mulf %23, %25 : vector<16x32xf32>
    %29 = arith.addf %27, %28 : vector<16x32xf32>
    %30 = math.tanh %29 : vector<16x32xf32>
    %31 = arith.mulf %26, %30 : vector<16x32xf32>
    %32 = arith.extf %12 : vector<16x128xbf16> to vector<16x128xf32>
    %33 = arith.truncf %10 : vector<16x32xf32> to vector<16x32xbf16>
    %cst_16 = arith.constant dense<0.000000e+00> : vector<16x128xf32>
    %34 = tpu.matmul %33, %9, %cst_16 {dimension_numbers = #tpu.dot_dimension_numbers<[1], [0], [0], [1], [0, 0, 1, 1], [], []>} : vector<16x32xbf16>, vector<32x128xbf16>, vector<16x128xf32> -> vector<16x128xf32>
    %35 = arith.addf %32, %34 : vector<16x128xf32>
    %36 = arith.negf %35 : vector<16x128xf32>
    %37 = math.exp %36 : vector<16x128xf32>
    %cst_17 = arith.constant 1.000000e+00 : f32
    %38 = vector.broadcast %cst_17 : f32 to vector<16x128xf32>
    %39 = arith.addf %38, %37 : vector<16x128xf32>
    %40 = arith.divf %38, %39 : vector<16x128xf32>
    %41 = math.tanh %35 : vector<16x128xf32>
    %42 = vector.extract_strided_slice %40 {offsets = [0, 0], sizes = [16, 32], strides = [1, 1]} : vector<16x128xf32> to vector<16x32xf32>
    %43 = vector.extract_strided_slice %40 {offsets = [0, 32], sizes = [16, 32], strides = [1, 1]} : vector<16x128xf32> to vector<16x32xf32>
    %44 = vector.extract_strided_slice %41 {offsets = [0, 64], sizes = [16, 32], strides = [1, 1]} : vector<16x128xf32> to vector<16x32xf32>
    %45 = vector.extract_strided_slice %40 {offsets = [0, 96], sizes = [16, 32], strides = [1, 1]} : vector<16x128xf32> to vector<16x32xf32>
    %46 = arith.mulf %43, %10 : vector<16x32xf32>
    %47 = arith.mulf %42, %44 : vector<16x32xf32>
    %48 = arith.addf %46, %47 : vector<16x32xf32>
    %49 = math.tanh %48 : vector<16x32xf32>
    %50 = arith.mulf %45, %49 : vector<16x32xf32>
    %c16 = arith.constant 16 : index
    %c0_18 = arith.constant 0 : index
    %51 = vector.load %arg10[%c16, %c0_18] : memref<128x256xbf16, #tpu.memory_space<vmem>>, vector<16x128xbf16>
    %c96 = arith.constant 96 : index
    %c128_19 = arith.constant 128 : index
    %52 = vector.load %arg10[%c96, %c128_19] : memref<128x256xbf16, #tpu.memory_space<vmem>>, vector<16x128xbf16>
    %53 = arith.extf %51 : vector<16x128xbf16> to vector<16x128xf32>
    %54 = arith.truncf %31 : vector<16x32xf32> to vector<16x32xbf16>
    %cst_20 = arith.constant dense<0.000000e+00> : vector<16x128xf32>
    %55 = tpu.matmul %54, %8, %cst_20 {dimension_numbers = #tpu.dot_dimension_numbers<[1], [0], [0], [1], [0, 0, 1, 1], [], []>} : vector<16x32xbf16>, vector<32x128xbf16>, vector<16x128xf32> -> vector<16x128xf32>
    %56 = arith.addf %53, %55 : vector<16x128xf32>
    %57 = arith.negf %56 : vector<16x128xf32>
    %58 = math.exp %57 : vector<16x128xf32>
    %cst_21 = arith.constant 1.000000e+00 : f32
    %59 = vector.broadcast %cst_21 : f32 to vector<16x128xf32>
    %60 = arith.addf %59, %58 : vector<16x128xf32>
    %61 = arith.divf %59, %60 : vector<16x128xf32>
    %62 = math.tanh %56 : vector<16x128xf32>
    %63 = vector.extract_strided_slice %61 {offsets = [0, 0], sizes = [16, 32], strides = [1, 1]} : vector<16x128xf32> to vector<16x32xf32>
    %64 = vector.extract_strided_slice %61 {offsets = [0, 32], sizes = [16, 32], strides = [1, 1]} : vector<16x128xf32> to vector<16x32xf32>
    %65 = vector.extract_strided_slice %62 {offsets = [0, 64], sizes = [16, 32], strides = [1, 1]} : vector<16x128xf32> to vector<16x32xf32>
    %66 = vector.extract_strided_slice %61 {offsets = [0, 96], sizes = [16, 32], strides = [1, 1]} : vector<16x128xf32> to vector<16x32xf32>
    %67 = arith.mulf %64, %29 : vector<16x32xf32>
    %68 = arith.mulf %63, %65 : vector<16x32xf32>
    %69 = arith.addf %67, %68 : vector<16x32xf32>
    %70 = math.tanh %69 : vector<16x32xf32>
    %71 = arith.mulf %66, %70 : vector<16x32xf32>
    %72 = arith.extf %52 : vector<16x128xbf16> to vector<16x128xf32>
    %73 = arith.truncf %50 : vector<16x32xf32> to vector<16x32xbf16>
    %cst_22 = arith.constant dense<0.000000e+00> : vector<16x128xf32>
    %74 = tpu.matmul %73, %9, %cst_22 {dimension_numbers = #tpu.dot_dimension_numbers<[1], [0], [0], [1], [0, 0, 1, 1], [], []>} : vector<16x32xbf16>, vector<32x128xbf16>, vector<16x128xf32> -> vector<16x128xf32>
    %75 = arith.addf %72, %74 : vector<16x128xf32>
    %76 = arith.negf %75 : vector<16x128xf32>
    %77 = math.exp %76 : vector<16x128xf32>
    %cst_23 = arith.constant 1.000000e+00 : f32
    %78 = vector.broadcast %cst_23 : f32 to vector<16x128xf32>
    %79 = arith.addf %78, %77 : vector<16x128xf32>
    %80 = arith.divf %78, %79 : vector<16x128xf32>
    %81 = math.tanh %75 : vector<16x128xf32>
    %82 = vector.extract_strided_slice %80 {offsets = [0, 0], sizes = [16, 32], strides = [1, 1]} : vector<16x128xf32> to vector<16x32xf32>
    %83 = vector.extract_strided_slice %80 {offsets = [0, 32], sizes = [16, 32], strides = [1, 1]} : vector<16x128xf32> to vector<16x32xf32>
    %84 = vector.extract_strided_slice %81 {offsets = [0, 64], sizes = [16, 32], strides = [1, 1]} : vector<16x128xf32> to vector<16x32xf32>
    %85 = vector.extract_strided_slice %80 {offsets = [0, 96], sizes = [16, 32], strides = [1, 1]} : vector<16x128xf32> to vector<16x32xf32>
    %86 = arith.mulf %83, %48 : vector<16x32xf32>
    %87 = arith.mulf %82, %84 : vector<16x32xf32>
    %88 = arith.addf %86, %87 : vector<16x32xf32>
    %89 = math.tanh %88 : vector<16x32xf32>
    %90 = arith.mulf %85, %89 : vector<16x32xf32>
    %c32 = arith.constant 32 : index
    %c0_24 = arith.constant 0 : index
    %91 = vector.load %arg10[%c32, %c0_24] : memref<128x256xbf16, #tpu.memory_space<vmem>>, vector<16x128xbf16>
    %c80 = arith.constant 80 : index
    %c128_25 = arith.constant 128 : index
    %92 = vector.load %arg10[%c80, %c128_25] : memref<128x256xbf16, #tpu.memory_space<vmem>>, vector<16x128xbf16>
    %93 = arith.extf %91 : vector<16x128xbf16> to vector<16x128xf32>
    %94 = arith.truncf %71 : vector<16x32xf32> to vector<16x32xbf16>
    %cst_26 = arith.constant dense<0.000000e+00> : vector<16x128xf32>
    %95 = tpu.matmul %94, %8, %cst_26 {dimension_numbers = #tpu.dot_dimension_numbers<[1], [0], [0], [1], [0, 0, 1, 1], [], []>} : vector<16x32xbf16>, vector<32x128xbf16>, vector<16x128xf32> -> vector<16x128xf32>
    %96 = arith.addf %93, %95 : vector<16x128xf32>
    %97 = arith.negf %96 : vector<16x128xf32>
    %98 = math.exp %97 : vector<16x128xf32>
    %cst_27 = arith.constant 1.000000e+00 : f32
    %99 = vector.broadcast %cst_27 : f32 to vector<16x128xf32>
    %100 = arith.addf %99, %98 : vector<16x128xf32>
    %101 = arith.divf %99, %100 : vector<16x128xf32>
    %102 = math.tanh %96 : vector<16x128xf32>
    %103 = vector.extract_strided_slice %101 {offsets = [0, 0], sizes = [16, 32], strides = [1, 1]} : vector<16x128xf32> to vector<16x32xf32>
    %104 = vector.extract_strided_slice %101 {offsets = [0, 32], sizes = [16, 32], strides = [1, 1]} : vector<16x128xf32> to vector<16x32xf32>
    %105 = vector.extract_strided_slice %102 {offsets = [0, 64], sizes = [16, 32], strides = [1, 1]} : vector<16x128xf32> to vector<16x32xf32>
    %106 = vector.extract_strided_slice %101 {offsets = [0, 96], sizes = [16, 32], strides = [1, 1]} : vector<16x128xf32> to vector<16x32xf32>
    %107 = arith.mulf %104, %69 : vector<16x32xf32>
    %108 = arith.mulf %103, %105 : vector<16x32xf32>
    %109 = arith.addf %107, %108 : vector<16x32xf32>
    %110 = math.tanh %109 : vector<16x32xf32>
    %111 = arith.mulf %106, %110 : vector<16x32xf32>
    %112 = arith.extf %92 : vector<16x128xbf16> to vector<16x128xf32>
    %113 = arith.truncf %90 : vector<16x32xf32> to vector<16x32xbf16>
    %cst_28 = arith.constant dense<0.000000e+00> : vector<16x128xf32>
    %114 = tpu.matmul %113, %9, %cst_28 {dimension_numbers = #tpu.dot_dimension_numbers<[1], [0], [0], [1], [0, 0, 1, 1], [], []>} : vector<16x32xbf16>, vector<32x128xbf16>, vector<16x128xf32> -> vector<16x128xf32>
    %115 = arith.addf %112, %114 : vector<16x128xf32>
    %116 = arith.negf %115 : vector<16x128xf32>
    %117 = math.exp %116 : vector<16x128xf32>
    %cst_29 = arith.constant 1.000000e+00 : f32
    %118 = vector.broadcast %cst_29 : f32 to vector<16x128xf32>
    %119 = arith.addf %118, %117 : vector<16x128xf32>
    %120 = arith.divf %118, %119 : vector<16x128xf32>
    %121 = math.tanh %115 : vector<16x128xf32>
    %122 = vector.extract_strided_slice %120 {offsets = [0, 0], sizes = [16, 32], strides = [1, 1]} : vector<16x128xf32> to vector<16x32xf32>
    %123 = vector.extract_strided_slice %120 {offsets = [0, 32], sizes = [16, 32], strides = [1, 1]} : vector<16x128xf32> to vector<16x32xf32>
    %124 = vector.extract_strided_slice %121 {offsets = [0, 64], sizes = [16, 32], strides = [1, 1]} : vector<16x128xf32> to vector<16x32xf32>
    %125 = vector.extract_strided_slice %120 {offsets = [0, 96], sizes = [16, 32], strides = [1, 1]} : vector<16x128xf32> to vector<16x32xf32>
    %126 = arith.mulf %123, %88 : vector<16x32xf32>
    %127 = arith.mulf %122, %124 : vector<16x32xf32>
    %128 = arith.addf %126, %127 : vector<16x32xf32>
    %129 = math.tanh %128 : vector<16x32xf32>
    %130 = arith.mulf %125, %129 : vector<16x32xf32>
    %c48 = arith.constant 48 : index
    %c0_30 = arith.constant 0 : index
    %131 = vector.load %arg10[%c48, %c0_30] : memref<128x256xbf16, #tpu.memory_space<vmem>>, vector<16x128xbf16>
    %c64 = arith.constant 64 : index
    %c128_31 = arith.constant 128 : index
    %132 = vector.load %arg10[%c64, %c128_31] : memref<128x256xbf16, #tpu.memory_space<vmem>>, vector<16x128xbf16>
    %133 = arith.extf %131 : vector<16x128xbf16> to vector<16x128xf32>
    %134 = arith.truncf %111 : vector<16x32xf32> to vector<16x32xbf16>
    %cst_32 = arith.constant dense<0.000000e+00> : vector<16x128xf32>
    %135 = tpu.matmul %134, %8, %cst_32 {dimension_numbers = #tpu.dot_dimension_numbers<[1], [0], [0], [1], [0, 0, 1, 1], [], []>} : vector<16x32xbf16>, vector<32x128xbf16>, vector<16x128xf32> -> vector<16x128xf32>
    %136 = arith.addf %133, %135 : vector<16x128xf32>
    %137 = arith.negf %136 : vector<16x128xf32>
    %138 = math.exp %137 : vector<16x128xf32>
    %cst_33 = arith.constant 1.000000e+00 : f32
    %139 = vector.broadcast %cst_33 : f32 to vector<16x128xf32>
    %140 = arith.addf %139, %138 : vector<16x128xf32>
    %141 = arith.divf %139, %140 : vector<16x128xf32>
    %142 = math.tanh %136 : vector<16x128xf32>
    %143 = vector.extract_strided_slice %141 {offsets = [0, 0], sizes = [16, 32], strides = [1, 1]} : vector<16x128xf32> to vector<16x32xf32>
    %144 = vector.extract_strided_slice %141 {offsets = [0, 32], sizes = [16, 32], strides = [1, 1]} : vector<16x128xf32> to vector<16x32xf32>
    %145 = vector.extract_strided_slice %142 {offsets = [0, 64], sizes = [16, 32], strides = [1, 1]} : vector<16x128xf32> to vector<16x32xf32>
    %146 = vector.extract_strided_slice %141 {offsets = [0, 96], sizes = [16, 32], strides = [1, 1]} : vector<16x128xf32> to vector<16x32xf32>
    %147 = arith.mulf %144, %109 : vector<16x32xf32>
    %148 = arith.mulf %143, %145 : vector<16x32xf32>
    %149 = arith.addf %147, %148 : vector<16x32xf32>
    %150 = math.tanh %149 : vector<16x32xf32>
    %151 = arith.mulf %146, %150 : vector<16x32xf32>
    %152 = arith.extf %132 : vector<16x128xbf16> to vector<16x128xf32>
    %153 = arith.truncf %130 : vector<16x32xf32> to vector<16x32xbf16>
    %cst_34 = arith.constant dense<0.000000e+00> : vector<16x128xf32>
    %154 = tpu.matmul %153, %9, %cst_34 {dimension_numbers = #tpu.dot_dimension_numbers<[1], [0], [0], [1], [0, 0, 1, 1], [], []>} : vector<16x32xbf16>, vector<32x128xbf16>, vector<16x128xf32> -> vector<16x128xf32>
    %155 = arith.addf %152, %154 : vector<16x128xf32>
    %156 = arith.negf %155 : vector<16x128xf32>
    %157 = math.exp %156 : vector<16x128xf32>
    %cst_35 = arith.constant 1.000000e+00 : f32
    %158 = vector.broadcast %cst_35 : f32 to vector<16x128xf32>
    %159 = arith.addf %158, %157 : vector<16x128xf32>
    %160 = arith.divf %158, %159 : vector<16x128xf32>
    %161 = math.tanh %155 : vector<16x128xf32>
    %162 = vector.extract_strided_slice %160 {offsets = [0, 0], sizes = [16, 32], strides = [1, 1]} : vector<16x128xf32> to vector<16x32xf32>
    %163 = vector.extract_strided_slice %160 {offsets = [0, 32], sizes = [16, 32], strides = [1, 1]} : vector<16x128xf32> to vector<16x32xf32>
    %164 = vector.extract_strided_slice %161 {offsets = [0, 64], sizes = [16, 32], strides = [1, 1]} : vector<16x128xf32> to vector<16x32xf32>
    %165 = vector.extract_strided_slice %160 {offsets = [0, 96], sizes = [16, 32], strides = [1, 1]} : vector<16x128xf32> to vector<16x32xf32>
    %166 = arith.mulf %163, %128 : vector<16x32xf32>
    %167 = arith.mulf %162, %164 : vector<16x32xf32>
    %168 = arith.addf %166, %167 : vector<16x32xf32>
    %169 = math.tanh %168 : vector<16x32xf32>
    %170 = arith.mulf %165, %169 : vector<16x32xf32>
    %c64_36 = arith.constant 64 : index
    %c0_37 = arith.constant 0 : index
    %171 = vector.load %arg10[%c64_36, %c0_37] : memref<128x256xbf16, #tpu.memory_space<vmem>>, vector<16x128xbf16>
    %c48_38 = arith.constant 48 : index
    %c128_39 = arith.constant 128 : index
    %172 = vector.load %arg10[%c48_38, %c128_39] : memref<128x256xbf16, #tpu.memory_space<vmem>>, vector<16x128xbf16>
    %173 = arith.extf %171 : vector<16x128xbf16> to vector<16x128xf32>
    %174 = arith.truncf %151 : vector<16x32xf32> to vector<16x32xbf16>
    %cst_40 = arith.constant dense<0.000000e+00> : vector<16x128xf32>
    %175 = tpu.matmul %174, %8, %cst_40 {dimension_numbers = #tpu.dot_dimension_numbers<[1], [0], [0], [1], [0, 0, 1, 1], [], []>} : vector<16x32xbf16>, vector<32x128xbf16>, vector<16x128xf32> -> vector<16x128xf32>
    %176 = arith.addf %173, %175 : vector<16x128xf32>
    %177 = arith.negf %176 : vector<16x128xf32>
    %178 = math.exp %177 : vector<16x128xf32>
    %cst_41 = arith.constant 1.000000e+00 : f32
    %179 = vector.broadcast %cst_41 : f32 to vector<16x128xf32>
    %180 = arith.addf %179, %178 : vector<16x128xf32>
    %181 = arith.divf %179, %180 : vector<16x128xf32>
    %182 = math.tanh %176 : vector<16x128xf32>
    %183 = vector.extract_strided_slice %181 {offsets = [0, 0], sizes = [16, 32], strides = [1, 1]} : vector<16x128xf32> to vector<16x32xf32>
    %184 = vector.extract_strided_slice %181 {offsets = [0, 32], sizes = [16, 32], strides = [1, 1]} : vector<16x128xf32> to vector<16x32xf32>
    %185 = vector.extract_strided_slice %182 {offsets = [0, 64], sizes = [16, 32], strides = [1, 1]} : vector<16x128xf32> to vector<16x32xf32>
    %186 = vector.extract_strided_slice %181 {offsets = [0, 96], sizes = [16, 32], strides = [1, 1]} : vector<16x128xf32> to vector<16x32xf32>
    %187 = arith.mulf %184, %149 : vector<16x32xf32>
    %188 = arith.mulf %183, %185 : vector<16x32xf32>
    %189 = arith.addf %187, %188 : vector<16x32xf32>
    %190 = math.tanh %189 : vector<16x32xf32>
    %191 = arith.mulf %186, %190 : vector<16x32xf32>
    %192 = arith.extf %172 : vector<16x128xbf16> to vector<16x128xf32>
    %193 = arith.truncf %170 : vector<16x32xf32> to vector<16x32xbf16>
    %cst_42 = arith.constant dense<0.000000e+00> : vector<16x128xf32>
    %194 = tpu.matmul %193, %9, %cst_42 {dimension_numbers = #tpu.dot_dimension_numbers<[1], [0], [0], [1], [0, 0, 1, 1], [], []>} : vector<16x32xbf16>, vector<32x128xbf16>, vector<16x128xf32> -> vector<16x128xf32>
    %195 = arith.addf %192, %194 : vector<16x128xf32>
    %196 = arith.negf %195 : vector<16x128xf32>
    %197 = math.exp %196 : vector<16x128xf32>
    %cst_43 = arith.constant 1.000000e+00 : f32
    %198 = vector.broadcast %cst_43 : f32 to vector<16x128xf32>
    %199 = arith.addf %198, %197 : vector<16x128xf32>
    %200 = arith.divf %198, %199 : vector<16x128xf32>
    %201 = math.tanh %195 : vector<16x128xf32>
    %202 = vector.extract_strided_slice %200 {offsets = [0, 0], sizes = [16, 32], strides = [1, 1]} : vector<16x128xf32> to vector<16x32xf32>
    %203 = vector.extract_strided_slice %200 {offsets = [0, 32], sizes = [16, 32], strides = [1, 1]} : vector<16x128xf32> to vector<16x32xf32>
    %204 = vector.extract_strided_slice %201 {offsets = [0, 64], sizes = [16, 32], strides = [1, 1]} : vector<16x128xf32> to vector<16x32xf32>
    %205 = vector.extract_strided_slice %200 {offsets = [0, 96], sizes = [16, 32], strides = [1, 1]} : vector<16x128xf32> to vector<16x32xf32>
    %206 = arith.mulf %203, %168 : vector<16x32xf32>
    %207 = arith.mulf %202, %204 : vector<16x32xf32>
    %208 = arith.addf %206, %207 : vector<16x32xf32>
    %209 = math.tanh %208 : vector<16x32xf32>
    %210 = arith.mulf %205, %209 : vector<16x32xf32>
    %c80_44 = arith.constant 80 : index
    %c0_45 = arith.constant 0 : index
    %211 = vector.load %arg10[%c80_44, %c0_45] : memref<128x256xbf16, #tpu.memory_space<vmem>>, vector<16x128xbf16>
    %c32_46 = arith.constant 32 : index
    %c128_47 = arith.constant 128 : index
    %212 = vector.load %arg10[%c32_46, %c128_47] : memref<128x256xbf16, #tpu.memory_space<vmem>>, vector<16x128xbf16>
    %213 = arith.extf %211 : vector<16x128xbf16> to vector<16x128xf32>
    %214 = arith.truncf %191 : vector<16x32xf32> to vector<16x32xbf16>
    %cst_48 = arith.constant dense<0.000000e+00> : vector<16x128xf32>
    %215 = tpu.matmul %214, %8, %cst_48 {dimension_numbers = #tpu.dot_dimension_numbers<[1], [0], [0], [1], [0, 0, 1, 1], [], []>} : vector<16x32xbf16>, vector<32x128xbf16>, vector<16x128xf32> -> vector<16x128xf32>
    %216 = arith.addf %213, %215 : vector<16x128xf32>
    %217 = arith.negf %216 : vector<16x128xf32>
    %218 = math.exp %217 : vector<16x128xf32>
    %cst_49 = arith.constant 1.000000e+00 : f32
    %219 = vector.broadcast %cst_49 : f32 to vector<16x128xf32>
    %220 = arith.addf %219, %218 : vector<16x128xf32>
    %221 = arith.divf %219, %220 : vector<16x128xf32>
    %222 = math.tanh %216 : vector<16x128xf32>
    %223 = vector.extract_strided_slice %221 {offsets = [0, 0], sizes = [16, 32], strides = [1, 1]} : vector<16x128xf32> to vector<16x32xf32>
    %224 = vector.extract_strided_slice %221 {offsets = [0, 32], sizes = [16, 32], strides = [1, 1]} : vector<16x128xf32> to vector<16x32xf32>
    %225 = vector.extract_strided_slice %222 {offsets = [0, 64], sizes = [16, 32], strides = [1, 1]} : vector<16x128xf32> to vector<16x32xf32>
    %226 = vector.extract_strided_slice %221 {offsets = [0, 96], sizes = [16, 32], strides = [1, 1]} : vector<16x128xf32> to vector<16x32xf32>
    %227 = arith.mulf %224, %189 : vector<16x32xf32>
    %228 = arith.mulf %223, %225 : vector<16x32xf32>
    %229 = arith.addf %227, %228 : vector<16x32xf32>
    %230 = math.tanh %229 : vector<16x32xf32>
    %231 = arith.mulf %226, %230 : vector<16x32xf32>
    %232 = arith.extf %212 : vector<16x128xbf16> to vector<16x128xf32>
    %233 = arith.truncf %210 : vector<16x32xf32> to vector<16x32xbf16>
    %cst_50 = arith.constant dense<0.000000e+00> : vector<16x128xf32>
    %234 = tpu.matmul %233, %9, %cst_50 {dimension_numbers = #tpu.dot_dimension_numbers<[1], [0], [0], [1], [0, 0, 1, 1], [], []>} : vector<16x32xbf16>, vector<32x128xbf16>, vector<16x128xf32> -> vector<16x128xf32>
    %235 = arith.addf %232, %234 : vector<16x128xf32>
    %236 = arith.negf %235 : vector<16x128xf32>
    %237 = math.exp %236 : vector<16x128xf32>
    %cst_51 = arith.constant 1.000000e+00 : f32
    %238 = vector.broadcast %cst_51 : f32 to vector<16x128xf32>
    %239 = arith.addf %238, %237 : vector<16x128xf32>
    %240 = arith.divf %238, %239 : vector<16x128xf32>
    %241 = math.tanh %235 : vector<16x128xf32>
    %242 = vector.extract_strided_slice %240 {offsets = [0, 0], sizes = [16, 32], strides = [1, 1]} : vector<16x128xf32> to vector<16x32xf32>
    %243 = vector.extract_strided_slice %240 {offsets = [0, 32], sizes = [16, 32], strides = [1, 1]} : vector<16x128xf32> to vector<16x32xf32>
    %244 = vector.extract_strided_slice %241 {offsets = [0, 64], sizes = [16, 32], strides = [1, 1]} : vector<16x128xf32> to vector<16x32xf32>
    %245 = vector.extract_strided_slice %240 {offsets = [0, 96], sizes = [16, 32], strides = [1, 1]} : vector<16x128xf32> to vector<16x32xf32>
    %246 = arith.mulf %243, %208 : vector<16x32xf32>
    %247 = arith.mulf %242, %244 : vector<16x32xf32>
    %248 = arith.addf %246, %247 : vector<16x32xf32>
    %249 = math.tanh %248 : vector<16x32xf32>
    %250 = arith.mulf %245, %249 : vector<16x32xf32>
    %c96_52 = arith.constant 96 : index
    %c0_53 = arith.constant 0 : index
    %251 = vector.load %arg10[%c96_52, %c0_53] : memref<128x256xbf16, #tpu.memory_space<vmem>>, vector<16x128xbf16>
    %c16_54 = arith.constant 16 : index
    %c128_55 = arith.constant 128 : index
    %252 = vector.load %arg10[%c16_54, %c128_55] : memref<128x256xbf16, #tpu.memory_space<vmem>>, vector<16x128xbf16>
    %253 = arith.extf %251 : vector<16x128xbf16> to vector<16x128xf32>
    %254 = arith.truncf %231 : vector<16x32xf32> to vector<16x32xbf16>
    %cst_56 = arith.constant dense<0.000000e+00> : vector<16x128xf32>
    %255 = tpu.matmul %254, %8, %cst_56 {dimension_numbers = #tpu.dot_dimension_numbers<[1], [0], [0], [1], [0, 0, 1, 1], [], []>} : vector<16x32xbf16>, vector<32x128xbf16>, vector<16x128xf32> -> vector<16x128xf32>
    %256 = arith.addf %253, %255 : vector<16x128xf32>
    %257 = arith.negf %256 : vector<16x128xf32>
    %258 = math.exp %257 : vector<16x128xf32>
    %cst_57 = arith.constant 1.000000e+00 : f32
    %259 = vector.broadcast %cst_57 : f32 to vector<16x128xf32>
    %260 = arith.addf %259, %258 : vector<16x128xf32>
    %261 = arith.divf %259, %260 : vector<16x128xf32>
    %262 = math.tanh %256 : vector<16x128xf32>
    %263 = vector.extract_strided_slice %261 {offsets = [0, 0], sizes = [16, 32], strides = [1, 1]} : vector<16x128xf32> to vector<16x32xf32>
    %264 = vector.extract_strided_slice %261 {offsets = [0, 32], sizes = [16, 32], strides = [1, 1]} : vector<16x128xf32> to vector<16x32xf32>
    %265 = vector.extract_strided_slice %262 {offsets = [0, 64], sizes = [16, 32], strides = [1, 1]} : vector<16x128xf32> to vector<16x32xf32>
    %266 = vector.extract_strided_slice %261 {offsets = [0, 96], sizes = [16, 32], strides = [1, 1]} : vector<16x128xf32> to vector<16x32xf32>
    %267 = arith.mulf %264, %229 : vector<16x32xf32>
    %268 = arith.mulf %263, %265 : vector<16x32xf32>
    %269 = arith.addf %267, %268 : vector<16x32xf32>
    %270 = math.tanh %269 : vector<16x32xf32>
    %271 = arith.mulf %266, %270 : vector<16x32xf32>
    %272 = arith.extf %252 : vector<16x128xbf16> to vector<16x128xf32>
    %273 = arith.truncf %250 : vector<16x32xf32> to vector<16x32xbf16>
    %cst_58 = arith.constant dense<0.000000e+00> : vector<16x128xf32>
    %274 = tpu.matmul %273, %9, %cst_58 {dimension_numbers = #tpu.dot_dimension_numbers<[1], [0], [0], [1], [0, 0, 1, 1], [], []>} : vector<16x32xbf16>, vector<32x128xbf16>, vector<16x128xf32> -> vector<16x128xf32>
    %275 = arith.addf %272, %274 : vector<16x128xf32>
    %276 = arith.negf %275 : vector<16x128xf32>
    %277 = math.exp %276 : vector<16x128xf32>
    %cst_59 = arith.constant 1.000000e+00 : f32
    %278 = vector.broadcast %cst_59 : f32 to vector<16x128xf32>
    %279 = arith.addf %278, %277 : vector<16x128xf32>
    %280 = arith.divf %278, %279 : vector<16x128xf32>
    %281 = math.tanh %275 : vector<16x128xf32>
    %282 = vector.extract_strided_slice %280 {offsets = [0, 0], sizes = [16, 32], strides = [1, 1]} : vector<16x128xf32> to vector<16x32xf32>
    %283 = vector.extract_strided_slice %280 {offsets = [0, 32], sizes = [16, 32], strides = [1, 1]} : vector<16x128xf32> to vector<16x32xf32>
    %284 = vector.extract_strided_slice %281 {offsets = [0, 64], sizes = [16, 32], strides = [1, 1]} : vector<16x128xf32> to vector<16x32xf32>
    %285 = vector.extract_strided_slice %280 {offsets = [0, 96], sizes = [16, 32], strides = [1, 1]} : vector<16x128xf32> to vector<16x32xf32>
    %286 = arith.mulf %283, %248 : vector<16x32xf32>
    %287 = arith.mulf %282, %284 : vector<16x32xf32>
    %288 = arith.addf %286, %287 : vector<16x32xf32>
    %289 = math.tanh %288 : vector<16x32xf32>
    %290 = arith.mulf %285, %289 : vector<16x32xf32>
    %c112_60 = arith.constant 112 : index
    %c0_61 = arith.constant 0 : index
    %291 = vector.load %arg10[%c112_60, %c0_61] : memref<128x256xbf16, #tpu.memory_space<vmem>>, vector<16x128xbf16>
    %c0_62 = arith.constant 0 : index
    %c128_63 = arith.constant 128 : index
    %292 = vector.load %arg10[%c0_62, %c128_63] : memref<128x256xbf16, #tpu.memory_space<vmem>>, vector<16x128xbf16>
    %293 = arith.extf %291 : vector<16x128xbf16> to vector<16x128xf32>
    %294 = arith.truncf %271 : vector<16x32xf32> to vector<16x32xbf16>
    %cst_64 = arith.constant dense<0.000000e+00> : vector<16x128xf32>
    %295 = tpu.matmul %294, %8, %cst_64 {dimension_numbers = #tpu.dot_dimension_numbers<[1], [0], [0], [1], [0, 0, 1, 1], [], []>} : vector<16x32xbf16>, vector<32x128xbf16>, vector<16x128xf32> -> vector<16x128xf32>
    %296 = arith.addf %293, %295 : vector<16x128xf32>
    %297 = arith.negf %296 : vector<16x128xf32>
    %298 = math.exp %297 : vector<16x128xf32>
    %cst_65 = arith.constant 1.000000e+00 : f32
    %299 = vector.broadcast %cst_65 : f32 to vector<16x128xf32>
    %300 = arith.addf %299, %298 : vector<16x128xf32>
    %301 = arith.divf %299, %300 : vector<16x128xf32>
    %302 = math.tanh %296 : vector<16x128xf32>
    %303 = vector.extract_strided_slice %301 {offsets = [0, 0], sizes = [16, 32], strides = [1, 1]} : vector<16x128xf32> to vector<16x32xf32>
    %304 = vector.extract_strided_slice %301 {offsets = [0, 32], sizes = [16, 32], strides = [1, 1]} : vector<16x128xf32> to vector<16x32xf32>
    %305 = vector.extract_strided_slice %302 {offsets = [0, 64], sizes = [16, 32], strides = [1, 1]} : vector<16x128xf32> to vector<16x32xf32>
    %306 = vector.extract_strided_slice %301 {offsets = [0, 96], sizes = [16, 32], strides = [1, 1]} : vector<16x128xf32> to vector<16x32xf32>
    %307 = arith.mulf %304, %269 : vector<16x32xf32>
    %308 = arith.mulf %303, %305 : vector<16x32xf32>
    %309 = arith.addf %307, %308 : vector<16x32xf32>
    %310 = math.tanh %309 : vector<16x32xf32>
    %311 = arith.mulf %306, %310 : vector<16x32xf32>
    %312 = arith.extf %292 : vector<16x128xbf16> to vector<16x128xf32>
    %313 = arith.truncf %290 : vector<16x32xf32> to vector<16x32xbf16>
    %cst_66 = arith.constant dense<0.000000e+00> : vector<16x128xf32>
    %314 = tpu.matmul %313, %9, %cst_66 {dimension_numbers = #tpu.dot_dimension_numbers<[1], [0], [0], [1], [0, 0, 1, 1], [], []>} : vector<16x32xbf16>, vector<32x128xbf16>, vector<16x128xf32> -> vector<16x128xf32>
    %315 = arith.addf %312, %314 : vector<16x128xf32>
    %316 = arith.negf %315 : vector<16x128xf32>
    %317 = math.exp %316 : vector<16x128xf32>
    %cst_67 = arith.constant 1.000000e+00 : f32
    %318 = vector.broadcast %cst_67 : f32 to vector<16x128xf32>
    %319 = arith.addf %318, %317 : vector<16x128xf32>
    %320 = arith.divf %318, %319 : vector<16x128xf32>
    %321 = math.tanh %315 : vector<16x128xf32>
    %322 = vector.extract_strided_slice %320 {offsets = [0, 0], sizes = [16, 32], strides = [1, 1]} : vector<16x128xf32> to vector<16x32xf32>
    %323 = vector.extract_strided_slice %320 {offsets = [0, 32], sizes = [16, 32], strides = [1, 1]} : vector<16x128xf32> to vector<16x32xf32>
    %324 = vector.extract_strided_slice %321 {offsets = [0, 64], sizes = [16, 32], strides = [1, 1]} : vector<16x128xf32> to vector<16x32xf32>
    %325 = vector.extract_strided_slice %320 {offsets = [0, 96], sizes = [16, 32], strides = [1, 1]} : vector<16x128xf32> to vector<16x32xf32>
    %326 = arith.mulf %323, %288 : vector<16x32xf32>
    %327 = arith.mulf %322, %324 : vector<16x32xf32>
    %328 = arith.addf %326, %327 : vector<16x32xf32>
    %329 = math.tanh %328 : vector<16x32xf32>
    %330 = arith.mulf %325, %329 : vector<16x32xf32>
    %331 = tpu.concatenate %311, %330 in 1 : vector<16x32xf32>, vector<16x32xf32> -> vector<16x64xf32>
    %332 = arith.truncf %331 : vector<16x64xf32> to vector<16x64xbf16>
    %cst_68 = arith.constant 0.000000e+00 : f32
    %333 = vector.broadcast %cst_68 : f32 to vector<2x64xf32>
    %334 = vector.extract_strided_slice %332 {offsets = [0, 0], sizes = [2, 64], strides = [1, 1]} : vector<16x64xbf16> to vector<2x64xbf16>
    %c0_69 = arith.constant 0 : index
    %c0_70 = arith.constant 0 : index
    %c0_71 = arith.constant 0 : index
    %335 = vector.load %arg5[%c0_69, %c0_70, %c0_71] : memref<7x64x64xbf16, #tpu.memory_space<vmem>>, vector<1x64x64xbf16>
    %336 = vector.shape_cast %335 : vector<1x64x64xbf16> to vector<64x64xbf16>
    %cst_72 = arith.constant dense<0.000000e+00> : vector<2x64xf32>
    %337 = tpu.matmul %334, %336, %cst_72 {dimension_numbers = #tpu.dot_dimension_numbers<[1], [0], [0], [1], [0, 0, 1, 1], [], []>} : vector<2x64xbf16>, vector<64x64xbf16>, vector<2x64xf32> -> vector<2x64xf32>
    %338 = arith.addf %333, %337 : vector<2x64xf32>
    %339 = vector.extract_strided_slice %332 {offsets = [2, 0], sizes = [2, 64], strides = [1, 1]} : vector<16x64xbf16> to vector<2x64xbf16>
    %c1 = arith.constant 1 : index
    %c0_73 = arith.constant 0 : index
    %c0_74 = arith.constant 0 : index
    %340 = vector.load %arg5[%c1, %c0_73, %c0_74] : memref<7x64x64xbf16, #tpu.memory_space<vmem>>, vector<1x64x64xbf16>
    %341 = vector.shape_cast %340 : vector<1x64x64xbf16> to vector<64x64xbf16>
    %cst_75 = arith.constant dense<0.000000e+00> : vector<2x64xf32>
    %342 = tpu.matmul %339, %341, %cst_75 {dimension_numbers = #tpu.dot_dimension_numbers<[1], [0], [0], [1], [0, 0, 1, 1], [], []>} : vector<2x64xbf16>, vector<64x64xbf16>, vector<2x64xf32> -> vector<2x64xf32>
    %343 = arith.addf %338, %342 : vector<2x64xf32>
    %344 = vector.extract_strided_slice %332 {offsets = [4, 0], sizes = [2, 64], strides = [1, 1]} : vector<16x64xbf16> to vector<2x64xbf16>
    %c2 = arith.constant 2 : index
    %c0_76 = arith.constant 0 : index
    %c0_77 = arith.constant 0 : index
    %345 = vector.load %arg5[%c2, %c0_76, %c0_77] : memref<7x64x64xbf16, #tpu.memory_space<vmem>>, vector<1x64x64xbf16>
    %346 = vector.shape_cast %345 : vector<1x64x64xbf16> to vector<64x64xbf16>
    %cst_78 = arith.constant dense<0.000000e+00> : vector<2x64xf32>
    %347 = tpu.matmul %344, %346, %cst_78 {dimension_numbers = #tpu.dot_dimension_numbers<[1], [0], [0], [1], [0, 0, 1, 1], [], []>} : vector<2x64xbf16>, vector<64x64xbf16>, vector<2x64xf32> -> vector<2x64xf32>
    %348 = arith.addf %343, %347 : vector<2x64xf32>
    %349 = vector.extract_strided_slice %332 {offsets = [6, 0], sizes = [2, 64], strides = [1, 1]} : vector<16x64xbf16> to vector<2x64xbf16>
    %c3 = arith.constant 3 : index
    %c0_79 = arith.constant 0 : index
    %c0_80 = arith.constant 0 : index
    %350 = vector.load %arg5[%c3, %c0_79, %c0_80] : memref<7x64x64xbf16, #tpu.memory_space<vmem>>, vector<1x64x64xbf16>
    %351 = vector.shape_cast %350 : vector<1x64x64xbf16> to vector<64x64xbf16>
    %cst_81 = arith.constant dense<0.000000e+00> : vector<2x64xf32>
    %352 = tpu.matmul %349, %351, %cst_81 {dimension_numbers = #tpu.dot_dimension_numbers<[1], [0], [0], [1], [0, 0, 1, 1], [], []>} : vector<2x64xbf16>, vector<64x64xbf16>, vector<2x64xf32> -> vector<2x64xf32>
    %353 = arith.addf %348, %352 : vector<2x64xf32>
    %354 = vector.extract_strided_slice %332 {offsets = [8, 0], sizes = [2, 64], strides = [1, 1]} : vector<16x64xbf16> to vector<2x64xbf16>
    %c4 = arith.constant 4 : index
    %c0_82 = arith.constant 0 : index
    %c0_83 = arith.constant 0 : index
    %355 = vector.load %arg5[%c4, %c0_82, %c0_83] : memref<7x64x64xbf16, #tpu.memory_space<vmem>>, vector<1x64x64xbf16>
    %356 = vector.shape_cast %355 : vector<1x64x64xbf16> to vector<64x64xbf16>
    %cst_84 = arith.constant dense<0.000000e+00> : vector<2x64xf32>
    %357 = tpu.matmul %354, %356, %cst_84 {dimension_numbers = #tpu.dot_dimension_numbers<[1], [0], [0], [1], [0, 0, 1, 1], [], []>} : vector<2x64xbf16>, vector<64x64xbf16>, vector<2x64xf32> -> vector<2x64xf32>
    %358 = arith.addf %353, %357 : vector<2x64xf32>
    %359 = vector.extract_strided_slice %332 {offsets = [10, 0], sizes = [2, 64], strides = [1, 1]} : vector<16x64xbf16> to vector<2x64xbf16>
    %c5 = arith.constant 5 : index
    %c0_85 = arith.constant 0 : index
    %c0_86 = arith.constant 0 : index
    %360 = vector.load %arg5[%c5, %c0_85, %c0_86] : memref<7x64x64xbf16, #tpu.memory_space<vmem>>, vector<1x64x64xbf16>
    %361 = vector.shape_cast %360 : vector<1x64x64xbf16> to vector<64x64xbf16>
    %cst_87 = arith.constant dense<0.000000e+00> : vector<2x64xf32>
    %362 = tpu.matmul %359, %361, %cst_87 {dimension_numbers = #tpu.dot_dimension_numbers<[1], [0], [0], [1], [0, 0, 1, 1], [], []>} : vector<2x64xbf16>, vector<64x64xbf16>, vector<2x64xf32> -> vector<2x64xf32>
    %363 = arith.addf %358, %362 : vector<2x64xf32>
    %364 = vector.extract_strided_slice %332 {offsets = [12, 0], sizes = [2, 64], strides = [1, 1]} : vector<16x64xbf16> to vector<2x64xbf16>
    %c6 = arith.constant 6 : index
    %c0_88 = arith.constant 0 : index
    %c0_89 = arith.constant 0 : index
    %365 = vector.load %arg5[%c6, %c0_88, %c0_89] : memref<7x64x64xbf16, #tpu.memory_space<vmem>>, vector<1x64x64xbf16>
    %366 = vector.shape_cast %365 : vector<1x64x64xbf16> to vector<64x64xbf16>
    %cst_90 = arith.constant dense<0.000000e+00> : vector<2x64xf32>
    %367 = tpu.matmul %364, %366, %cst_90 {dimension_numbers = #tpu.dot_dimension_numbers<[1], [0], [0], [1], [0, 0, 1, 1], [], []>} : vector<2x64xbf16>, vector<64x64xbf16>, vector<2x64xf32> -> vector<2x64xf32>
    %368 = arith.addf %363, %367 : vector<2x64xf32>
    %c0_91 = arith.constant 0 : index
    %c0_92 = arith.constant 0 : index
    %369 = vector.load %arg6[%c0_91, %c0_92] : memref<1x64xf32, #tpu.memory_space<vmem>>, vector<1x64xf32>
    %370 = vector.broadcast %369 : vector<1x64xf32> to vector<2x64xf32>
    %371 = arith.addf %368, %370 : vector<2x64xf32>
    %cst_93 = arith.constant 0.000000e+00 : f32
    %372 = vector.broadcast %cst_93 : f32 to vector<2x64xf32>
    %373 = arith.maximumf %371, %372 : vector<2x64xf32>
    %c0_94 = arith.constant 0 : index
    %c0_95 = arith.constant 0 : index
    %374 = vector.load %arg7[%c0_94, %c0_95] : memref<64x1xf32, #tpu.memory_space<vmem>>, vector<64x1xf32>
    %cst_96 = arith.constant dense<0.000000e+00> : vector<2x1xf32>
    %375 = tpu.matmul %373, %374, %cst_96 {dimension_numbers = #tpu.dot_dimension_numbers<[1], [0], [0], [1], [0, 0, 1, 1], [], []>} : vector<2x64xf32>, vector<64x1xf32>, vector<2x1xf32> -> vector<2x1xf32>
    %c0_97 = arith.constant 0 : index
    %c0_98 = arith.constant 0 : index
    %376 = vector.load %arg8[%c0_97, %c0_98] : memref<1x1xf32, #tpu.memory_space<vmem>>, vector<1x1xf32>
    %377 = vector.broadcast %376 : vector<1x1xf32> to vector<2x1xf32>
    %378 = arith.addf %375, %377 : vector<2x1xf32>
    %379 = arith.negf %378 : vector<2x1xf32>
    %380 = math.exp %379 : vector<2x1xf32>
    %cst_99 = arith.constant 1.000000e+00 : f32
    %381 = vector.broadcast %cst_99 : f32 to vector<2x1xf32>
    %382 = arith.addf %381, %380 : vector<2x1xf32>
    %383 = arith.divf %381, %382 : vector<2x1xf32>
    %c0_100 = arith.constant 0 : index
    %c0_101 = arith.constant 0 : index
    %384 = vector.load %arg9[%c0_100, %c0_101] : memref<2x1xf32, #tpu.memory_space<vmem>>, vector<2x1xf32>
    tpu.vector_store %arg9[%c0_100, %c0_101], %383 {strides = array<i32>} : memref<2x1xf32, #tpu.memory_space<vmem>>, vector<2x1xf32>,
    return
  }
}

</mosaic_0001>

<llo_original>
// kernel: cdr123_bilstm_forward.1
$region0: #{cdr123_bilstm_forward.1}
  #allocation0 [shape = 'u32[]', space=smem, size = 0x4, offset = 0x4, fixed_abs, tag = 'smem constant byte address 0x4 - core index']
  #allocation1 [shape = 'u32[144,128]{1,0:T(1,128)}', space=vmem, size = 0x12000, scoped, tag = 'internal scratch']
  #allocation2 [shape = 'bf16[128,256]{1,0:T(16,128)(2,1)}', space=vmem, size = 0x10000, scoped, tag = 'scratch operand']
  #allocation3 [shape = 'f32[1,1]{1,0:T(1,128)S(1)}', space=vmem, size = 0x200, scoped, tag = 'scoped memory for cdr123_bilstm_forward.1']
  %s0 = inlined_call_operand.vmem [shape: bf16[128,20], index: 0, kind: input, shape index: {}]
  %s1 = inlined_call_operand.vmem [shape: bf16[20,256], index: 1, kind: input, shape index: {}]
  %s2 = inlined_call_operand.vmem [shape: f32[1,256], index: 2, kind: input, shape index: {}]
  %s3 = inlined_call_operand.vmem [shape: bf16[32,128], index: 3, kind: input, shape index: {}]
  %s4 = inlined_call_operand.vmem [shape: bf16[32,128], index: 4, kind: input, shape index: {}]
  %s5 = inlined_call_operand.vmem [shape: bf16[7,64,64], index: 5, kind: input, shape index: {}]
  %s6 = inlined_call_operand.vmem [shape: f32[1,64], index: 6, kind: input, shape index: {}]
  %s7 = inlined_call_operand.vmem [shape: f32[64,1], index: 7, kind: input, shape index: {}]
  %s8 = inlined_call_operand.<no memory space> [shape: f32[1,1], index: 8, kind: input, shape index: {}]
  %s9 = inlined_call_operand.vmem [shape: f32[2,1], index: 9, kind: output, shape index: {}]
  %s10 = sld [smem:[#allocation0]]
  $region46: #{cdr123_bilstm_forward.1} parent=0
    _
  %s12 = ssub.s32 1, %s10
  %s13 = scalar_select 0, %s12, %s10
  %v14 = vstv %s8
  %15 = vst [vmem:[#allocation3] sm:$0x1] %v14
  // Predicated region
  $region2: #{cdr123_bilstm_forward.1} parent=0 // pred_check
    _
  $region3: #{cdr123_bilstm_forward.1} parent=0 // pred_check_branch
    %17 = sbr.rel (0) target = $region5
  $region4: #{cdr123_bilstm_forward.1} parent=0 // pred_region
    _
  $region5: #{cdr123_bilstm_forward.1} parent=0 // pred_fallthru
    _
  // Predicated region
  $region6: #{cdr123_bilstm_forward.1} parent=0 // pred_check
    _
  $region7: #{cdr123_bilstm_forward.1} parent=0 // pred_check_branch
    %19 = sbr.rel (0) target = $region9
  $region8: #{cdr123_bilstm_forward.1} parent=0 // pred_region
    _
  $region9: #{cdr123_bilstm_forward.1} parent=0 // pred_fallthru
    _
  // Predicated region
  $region10: #{cdr123_bilstm_forward.1} parent=0 // pred_check
    _
  $region11: #{cdr123_bilstm_forward.1} parent=0 // pred_check_branch
    %21 = sbr.rel (0) target = $region13
  $region12: #{cdr123_bilstm_forward.1} parent=0 // pred_region
    _
  $region13: #{cdr123_bilstm_forward.1} parent=0 // pred_fallthru
    _
  // Predicated region
  $region14: #{cdr123_bilstm_forward.1} parent=0 // pred_check
    _
  $region15: #{cdr123_bilstm_forward.1} parent=0 // pred_check_branch
    %23 = sbr.rel (0) target = $region17
  $region16: #{cdr123_bilstm_forward.1} parent=0 // pred_region
    _
  $region17: #{cdr123_bilstm_forward.1} parent=0 // pred_fallthru
    _
  // Predicated region
  $region18: #{cdr123_bilstm_forward.1} parent=0 // pred_check
    _
  $region19: #{cdr123_bilstm_forward.1} parent=0 // pred_check_branch
    %25 = sbr.rel (0) target = $region21
  $region20: #{cdr123_bilstm_forward.1} parent=0 // pred_region
    _
  $region21: #{cdr123_bilstm_forward.1} parent=0 // pred_fallthru
    _
  // Predicated region
  $region22: #{cdr123_bilstm_forward.1} parent=0 // pred_check
    _
  $region23: #{cdr123_bilstm_forward.1} parent=0 // pred_check_branch
    %27 = sbr.rel (0) target = $region25
  $region24: #{cdr123_bilstm_forward.1} parent=0 // pred_region
    _
  $region25: #{cdr123_bilstm_forward.1} parent=0 // pred_fallthru
    _
  // Predicated region
  $region26: #{cdr123_bilstm_forward.1} parent=0 // pred_check
    _
  $region27: #{cdr123_bilstm_forward.1} parent=0 // pred_check_branch
    %29 = sbr.rel (0) target = $region29
  $region28: #{cdr123_bilstm_forward.1} parent=0 // pred_region
    _
  $region29: #{cdr123_bilstm_forward.1} parent=0 // pred_fallthru
    _
  // Predicated region
  $region30: #{cdr123_bilstm_forward.1} parent=0 // pred_check
    _
  $region31: #{cdr123_bilstm_forward.1} parent=0 // pred_check_branch
    %31 = sbr.rel (0) target = $region33
  $region32: #{cdr123_bilstm_forward.1} parent=0 // pred_region
    _
  $region33: #{cdr123_bilstm_forward.1} parent=0 // pred_fallthru
    _
  // Predicated region
  $region34: #{cdr123_bilstm_forward.1} parent=0 // pred_check
    _
  $region35: #{cdr123_bilstm_forward.1} parent=0 // pred_check_branch
    %33 = sbr.rel (0) target = $region37
  $region36: #{cdr123_bilstm_forward.1} parent=0 // pred_region
    _
  $region37: #{cdr123_bilstm_forward.1} parent=0 // pred_fallthru
    _
  %v35 = vld [vmem:[%s0] sm:$0xf]
  %v36 = vld [vmem:[%s0 + $0x4] sm:$0xf]
  %v37 = vld [vmem:[%s0 + $0x8] sm:$0xf]
  %v38 = vld [vmem:[%s0 + $0xc] sm:$0xf]
  %v39 = vld [vmem:[%s0 + $0x10] sm:$0xf]
  %v40 = vld [vmem:[%s0 + $0x14] sm:$0xf]
  %v41 = vld [vmem:[%s0 + $0x18] sm:$0xf]
  %v42 = vld [vmem:[%s0 + $0x1c] sm:$0xf]
  %v43 = vld [vmem:[%s0 + $0x20] sm:$0xf]
  %v44 = vld [vmem:[%s0 + $0x24] sm:$0xf]
  %v45 = vld [vmem:[%s0 + $0x28] sm:$0xf]
  %v46 = vld [vmem:[%s0 + $0x2c] sm:$0xf]
  %v47 = vld [vmem:[%s0 + $0x30] sm:$0xf]
  %v48 = vld [vmem:[%s0 + $0x34] sm:$0xf]
  %v49 = vld [vmem:[%s0 + $0x38] sm:$0xf]
  %v50 = vld [vmem:[%s0 + $0x3c] sm:$0xf]
  %v51 = vld [vmem:[%s1] sm:$0xff]
  %v52 = vld [vmem:[%s1 + $0x8] sm:$0xff]
  %v53 = vld [vmem:[%s1 + $0x10] sm:$0x33]
  %v54 = vld [vmem:[%s2] sm:$0x3]
  %v56 = vlaneseq
  %v57 = vshrl.u32 %v56, 7
  %v58 = vsub.s32 0, %v57
  %v59 = vrot.slane %v54, %v58
  %v60 = vlaneseq
  %v61 = vshrl.u32 %v60, 7
  %v62 = vsub.s32 1, %v61
  %v63 = vrot.slane %v54, %v62
  %v82 = vunpack.c.l.b16 %v35
  %v83 = vunpack.c.l.b16 %v36
  %v84 = vunpack.c.l.b16 %v37
  %v85 = vunpack.c.l.b16 %v38
  %v86 = vunpack.c.l.b16 %v39
  %v87 = vunpack.c.l.b16 %v40
  %v88 = vunpack.c.l.b16 %v41
  %v89 = vunpack.c.l.b16 %v42
  %v90 = vunpack.c.l.b16 %v43
  %v91 = vunpack.c.l.b16 %v44
  %v92 = vunpack.c.l.b16 %v45
  %v93 = vunpack.c.l.b16 %v46
  %v94 = vunpack.c.l.b16 %v47
  %v95 = vunpack.c.l.b16 %v48
  %v96 = vunpack.c.l.b16 %v49
  %v97 = vunpack.c.l.b16 %v50
  %v98 = vpack.c.b16 %v83, %v82
  %v99 = vpack.c.b16 %v85, %v84
  %v100 = vpack.c.b16 %v87, %v86
  %v101 = vpack.c.b16 %v89, %v88
  %v102 = vpack.c.b16 %v91, %v90
  %v103 = vpack.c.b16 %v93, %v92
  %v104 = vpack.c.b16 %v95, %v94
  %v105 = vpack.c.b16 %v97, %v96
  %v109 = vunpack.c.l.b16 %v51
  %v110 = vunpack.c.h.b16 %v51
  %v111 = vunpack.c.l.b16 %v52
  %v112 = vunpack.c.h.b16 %v52
  %v113 = vunpack.c.l.b16 %v53
  %v114 = vunpack.c.h.b16 %v53
  %v115 = vpack.c.b16 %v111, %v109
  %v116 = vpack.c.b16 %v112, %v110
  %v117 = vpack.c.b16 %v113, %v113
  %v118 = vpack.c.b16 %v114, %v114
  %vm121 = vcmask 162816
  %v123 = vsel %vm121, %v98, 0
  %v126 = vsel %vm121, %v99, 0
  %v129 = vsel %vm121, %v100, 0
  %v132 = vsel %vm121, %v101, 0
  %v135 = vsel %vm121, %v102, 0
  %v138 = vsel %vm121, %v103, 0
  %v141 = vsel %vm121, %v104, 0
  %v144 = vsel %vm121, %v105, 0
  %vm146 = vcmask 1041408
  %v148 = vsel %vm146, %v117, 0
  %v151 = vsel %vm146, %v118, 0
  %153 = vmatprep.subr.bf16.mxu0 %v116
  %154 = vmatpush1.bf16.msra.mxu0 %v115
  %155 = vmatprep.subr.bf16.mxu0 %v151
  %156 = vmatpush1.bf16.msra.mxu0 %v148
  %157 = vmatprep.subr.bf16.mxu0 0
  %158 = vmatpush1.bf16.msra.mxu0 0
  %159 = vmatprep.subr.bf16.mxu0 0
  %160 = vmatpush1.bf16.msra.mxu0 0
  %161 = vmatprep.subr.bf16.mxu0 0
  %162 = vmatpush1.bf16.msra.mxu0 0
  %163 = vmatprep.subr.bf16.mxu0 0
  %164 = vmatpush1.bf16.msra.mxu0 0
  %165 = vmatprep.subr.bf16.mxu0 0
  %166 = vmatpush1.bf16.msra.mxu0 0
  %167 = vmatprep.subr.bf16.mxu0 0
  %168 = vmatpush1.bf16.msra.mxu0 0
  %169 = vmatprep.subr.bf16.mxu0 0
  %170 = vmatpush1.bf16.msra.mxu0 0
  %171 = vmatprep.subr.bf16.mxu0 0
  %172 = vmatpush1.bf16.msra.mxu0 0
  %173 = vmatprep.subr.bf16.mxu0 0
  %174 = vmatpush1.bf16.msra.mxu0 0
  %175 = vmatprep.subr.bf16.mxu0 0
  %176 = vmatpush1.bf16.msra.mxu0 0
  %177 = vmatprep.subr.bf16.mxu0 0
  %178 = vmatpush1.bf16.msra.mxu0 0
  %179 = vmatprep.subr.bf16.mxu0 0
  %180 = vmatpush1.bf16.msra.mxu0 0
  %181 = vmatprep.subr.bf16.mxu0 0
  %182 = vmatpush1.bf16.msra.mxu0 0
  %183 = vmatprep.subr.bf16.mxu0 0
  %184 = vmatpush1.bf16.msra.mxu0 0
  %185 = vmatprep.mubr.bf16.mxu0 0
  %186 = vmatmul.mubr.bf16.gmra.mrb[0].mxu0 %v123
  %v187 = vpop.f32.mrb[0].mxu0
  %v188 = vadd.f32 %v59, %v187
  %v189 = vpop.f32.mrb[0].mxu0
  %v190 = vadd.f32 %v63, %v189
  %v191 = vpop.f32.mrb[0].mxu0
  %v192 = vadd.f32 %v59, %v191
  %v193 = vpop.f32.mrb[0].mxu0
  %v194 = vadd.f32 %v63, %v193
  %195 = vmatprep.mubr.bf16.mxu0 0
  %196 = vmatmul.mubr.bf16.gmra.mrb[0].mxu0 %v126
  %v197 = vpop.f32.mrb[0].mxu0
  %v198 = vadd.f32 %v59, %v197
  %v199 = vpop.f32.mrb[0].mxu0
  %v200 = vadd.f32 %v63, %v199
  %v201 = vpop.f32.mrb[0].mxu0
  %v202 = vadd.f32 %v59, %v201
  %v203 = vpop.f32.mrb[0].mxu0
  %v204 = vadd.f32 %v63, %v203
  %205 = vmatprep.mubr.bf16.mxu0 0
  %206 = vmatmul.mubr.bf16.gmra.mrb[0].mxu0 %v129
  %v207 = vpop.f32.mrb[0].mxu0
  %v208 = vadd.f32 %v59, %v207
  %v209 = vpop.f32.mrb[0].mxu0
  %v210 = vadd.f32 %v63, %v209
  %v211 = vpop.f32.mrb[0].mxu0
  %v212 = vadd.f32 %v59, %v211
  %v213 = vpop.f32.mrb[0].mxu0
  %v214 = vadd.f32 %v63, %v213
  %215 = vmatprep.mubr.bf16.mxu0 0
  %216 = vmatmul.mubr.bf16.gmra.mrb[0].mxu0 %v132
  %v217 = vpop.f32.mrb[0].mxu0
  %v218 = vadd.f32 %v59, %v217
  %v219 = vpop.f32.mrb[0].mxu0
  %v220 = vadd.f32 %v63, %v219
  %v221 = vpop.f32.mrb[0].mxu0
  %v222 = vadd.f32 %v59, %v221
  %v223 = vpop.f32.mrb[0].mxu0
  %v224 = vadd.f32 %v63, %v223
  %225 = vmatprep.mubr.bf16.mxu0 0
  %226 = vmatmul.mubr.bf16.gmra.mrb[0].mxu0 %v135
  %v227 = vpop.f32.mrb[0].mxu0
  %v228 = vadd.f32 %v59, %v227
  %v229 = vpop.f32.mrb[0].mxu0
  %v230 = vadd.f32 %v63, %v229
  %v231 = vpop.f32.mrb[0].mxu0
  %v232 = vadd.f32 %v59, %v231
  %v233 = vpop.f32.mrb[0].mxu0
  %v234 = vadd.f32 %v63, %v233
  %235 = vmatprep.mubr.bf16.mxu0 0
  %236 = vmatmul.mubr.bf16.gmra.mrb[0].mxu0 %v138
  %v237 = vpop.f32.mrb[0].mxu0
  %v238 = vadd.f32 %v59, %v237
  %v239 = vpop.f32.mrb[0].mxu0
  %v240 = vadd.f32 %v63, %v239
  %v241 = vpop.f32.mrb[0].mxu0
  %v242 = vadd.f32 %v59, %v241
  %v243 = vpop.f32.mrb[0].mxu0
  %v244 = vadd.f32 %v63, %v243
  %245 = vmatprep.mubr.bf16.mxu0 0
  %246 = vmatmul.mubr.bf16.gmra.mrb[0].mxu0 %v141
  %v247 = vpop.f32.mrb[0].mxu0
  %v248 = vadd.f32 %v59, %v247
  %v249 = vpop.f32.mrb[0].mxu0
  %v250 = vadd.f32 %v63, %v249
  %v251 = vpop.f32.mrb[0].mxu0
  %v252 = vadd.f32 %v59, %v251
  %v253 = vpop.f32.mrb[0].mxu0
  %v254 = vadd.f32 %v63, %v253
  %255 = vmatprep.mubr.bf16.mxu0 0
  %256 = vmatmul.mubr.bf16.gmra.mrb[0].mxu0 %v144
  %v257 = vpop.f32.mrb[0].mxu0
  %v258 = vadd.f32 %v59, %v257
  %v259 = vpop.f32.mrb[0].mxu0
  %v260 = vadd.f32 %v63, %v259
  %v261 = vpop.f32.mrb[0].mxu0
  %v262 = vadd.f32 %v59, %v261
  %v263 = vpop.f32.mrb[0].mxu0
  %v264 = vadd.f32 %v63, %v263
  %265 = vdwg.mxu0
  %v266 = vpack.c.bf16 %v192, %v188
  %v267 = vpack.c.bf16 %v194, %v190
  %v268 = vpack.c.bf16 %v202, %v198
  %v269 = vpack.c.bf16 %v204, %v200
  %v270 = vpack.c.bf16 %v212, %v208
  %v271 = vpack.c.bf16 %v214, %v210
  %v272 = vpack.c.bf16 %v222, %v218
  %v273 = vpack.c.bf16 %v224, %v220
  %v274 = vpack.c.bf16 %v232, %v228
  %v275 = vpack.c.bf16 %v234, %v230
  %v276 = vpack.c.bf16 %v242, %v238
  %v277 = vpack.c.bf16 %v244, %v240
  %v278 = vpack.c.bf16 %v252, %v248
  %v279 = vpack.c.bf16 %v254, %v250
  %v280 = vpack.c.bf16 %v262, %v258
  %v281 = vpack.c.bf16 %v264, %v260
  %282 = vst [vmem:[#allocation2] sm:$0xff] %v266
  %283 = vst [vmem:[#allocation2 + $0x8] sm:$0xff] %v267
  %284 = vst [vmem:[#allocation2 + $0x10] sm:$0xff] %v268
  %285 = vst [vmem:[#allocation2 + $0x18] sm:$0xff] %v269
  %286 = vst [vmem:[#allocation2 + $0x20] sm:$0xff] %v270
  %287 = vst [vmem:[#allocation2 + $0x28] sm:$0xff] %v271
  %288 = vst [vmem:[#allocation2 + $0x30] sm:$0xff] %v272
  %289 = vst [vmem:[#allocation2 + $0x38] sm:$0xff] %v273
  %290 = vst [vmem:[#allocation2 + $0x40] sm:$0xff] %v274
  %291 = vst [vmem:[#allocation2 + $0x48] sm:$0xff] %v275
  %292 = vst [vmem:[#allocation2 + $0x50] sm:$0xff] %v276
  %293 = vst [vmem:[#allocation2 + $0x58] sm:$0xff] %v277
  %294 = vst [vmem:[#allocation2 + $0x60] sm:$0xff] %v278
  %295 = vst [vmem:[#allocation2 + $0x68] sm:$0xff] %v279
  %296 = vst [vmem:[#allocation2 + $0x70] sm:$0xff] %v280
  %297 = vst [vmem:[#allocation2 + $0x78] sm:$0xff] %v281
  %v298 = vld [vmem:[%s3] sm:$0xf]
  %v299 = vld [vmem:[%s3 + $0x4] sm:$0xf]
  %v300 = vld [vmem:[%s3 + $0x8] sm:$0xf]
  %v301 = vld [vmem:[%s3 + $0xc] sm:$0xf]
  %v302 = vld [vmem:[%s4] sm:$0xf]
  %v303 = vld [vmem:[%s4 + $0x4] sm:$0xf]
  %v304 = vld [vmem:[%s4 + $0x8] sm:$0xf]
  %v305 = vld [vmem:[%s4 + $0xc] sm:$0xf]
  %v306 = vld [vmem:[#allocation2] sm:$0xff]
  %v307 = vld [vmem:[#allocation2 + $0x78] sm:$0xff]
  %v308 = vunpack.c.l.bf16 %v306
  %v309 = vunpack.c.h.bf16 %v306
  %v314 = vunpack.c.l.b16 %v298
  %v315 = vunpack.c.l.b16 %v299
  %v316 = vunpack.c.l.b16 %v300
  %v317 = vunpack.c.l.b16 %v301
  %v318 = vpack.c.b16 %v315, %v314
  %v319 = vpack.c.b16 %v317, %v316
  %vm322 = vcmask 261120
  %v324 = vsel %vm322, 0, 0
  %326 = vmatprep.subr.bf16.mxu0 0
  %327 = vmatpush1.bf16.msra.mxu0 %v318
  %328 = vmatprep.subr.bf16.mxu0 0
  %329 = vmatpush1.bf16.msra.mxu0 %v319
  %330 = vmatprep.subr.bf16.mxu0 0
  %331 = vmatpush1.bf16.msra.mxu0 0
  %332 = vmatprep.subr.bf16.mxu0 0
  %333 = vmatpush1.bf16.msra.mxu0 0
  %334 = vmatprep.subr.bf16.mxu0 0
  %335 = vmatpush1.bf16.msra.mxu0 0
  %336 = vmatprep.subr.bf16.mxu0 0
  %337 = vmatpush1.bf16.msra.mxu0 0
  %338 = vmatprep.subr.bf16.mxu0 0
  %339 = vmatpush1.bf16.msra.mxu0 0
  %340 = vmatprep.subr.bf16.mxu0 0
  %341 = vmatpush1.bf16.msra.mxu0 0
  %342 = vmatprep.subr.bf16.mxu0 0
  %343 = vmatpush1.bf16.msra.mxu0 0
  %344 = vmatprep.subr.bf16.mxu0 0
  %345 = vmatpush1.bf16.msra.mxu0 0
  %346 = vmatprep.subr.bf16.mxu0 0
  %347 = vmatpush1.bf16.msra.mxu0 0
  %348 = vmatprep.subr.bf16.mxu0 0
  %349 = vmatpush1.bf16.msra.mxu0 0
  %350 = vmatprep.subr.bf16.mxu0 0
  %351 = vmatpush1.bf16.msra.mxu0 0
  %352 = vmatprep.subr.bf16.mxu0 0
  %353 = vmatpush1.bf16.msra.mxu0 0
  %354 = vmatprep.subr.bf16.mxu0 0
  %355 = vmatpush1.bf16.msra.mxu0 0
  %356 = vmatprep.subr.bf16.mxu0 0
  %357 = vmatpush1.bf16.msra.mxu0 0
  %358 = vmatprep.mubr.bf16.mxu0 0
  %359 = vmatmul.mubr.bf16.gmra.mrb[0].mxu0 %v324
  %v360 = vpop.f32.mrb[0].mxu0
  %v361 = vadd.f32 0.0, %v360
  %v362 = vpop.f32.mrb[0].mxu0
  %v363 = vpop.f32.mrb[0].mxu0
  %v364 = vadd.f32 0.0, %v363
  %v365 = vpop.f32.mrb[0].mxu0
  %366 = vdwg.mxu0
  %v367 = vadd.f32 %v308, %v361
  %v368 = vadd.f32 %v309, %v364
  %v369 = vxor.u32 %v367, 2147483648
  %v370 = vxor.u32 %v368, 2147483648
  %v371 = vmul.f32 %v369, 1.442695
  %v372 = vpow.pop %v371
  %v373 = vmul.f32 %v370, 1.442695
  %v374 = vpow.pop %v373
  %v375 = vadd.f32 %v372, 1.0
  %v376 = vadd.f32 %v374, 1.0
  %v377 = vrcp.pop %v375
  %v378 = vmul.f32 1.0, %v377
  %v379 = vrcp.pop %v376
  %v380 = vmul.f32 1.0, %v379
  %v381 = vtanh.pop %v367
  %v382 = vtanh.pop %v368
  %v383 = vmul.f32 %v378, 0.0
  %v384 = vmul.f32 %v380, 0.0
  %387 = vrot.lane.b32.xlu0 %v381, 64
  %v388 = vpop.permute.xlu0 %387
  %389 = vrot.lane.b32.xlu0 %v382, 64
  %v390 = vpop.permute.xlu0 %389
  %v393 = vmul.f32 %v378, %v388
  %v394 = vmul.f32 %v380, %v390
  %397 = vrot.lane.b32.xlu0 %v393, 32
  %v398 = vpop.permute.xlu0 %397
  %399 = vrot.lane.b32.xlu0 %v394, 32
  %v400 = vpop.permute.xlu0 %399
  %v403 = vadd.f32 %v383, %v398
  %v404 = vadd.f32 %v384, %v400
  %v405 = vtanh.pop %v403
  %v406 = vtanh.pop %v404
  %409 = vrot.lane.b32.xlu0 %v405, 64
  %v410 = vpop.permute.xlu0 %409
  %411 = vrot.lane.b32.xlu0 %v406, 64
  %v412 = vpop.permute.xlu0 %411
  %v415 = vmul.f32 %v378, %v410
  %v416 = vmul.f32 %v380, %v412
  %v417 = vunpack.c.l.bf16 %v307
  %v418 = vunpack.c.h.bf16 %v307
  %v423 = vunpack.c.l.b16 %v302
  %v424 = vunpack.c.l.b16 %v303
  %v425 = vunpack.c.l.b16 %v304
  %v426 = vunpack.c.l.b16 %v305
  %v427 = vpack.c.b16 %v424, %v423
  %v428 = vpack.c.b16 %v426, %v425
  %431 = vmatprep.subr.bf16.mxu0 0
  %432 = vmatpush1.bf16.msra.mxu0 %v427
  %433 = vmatprep.subr.bf16.mxu0 0
  %434 = vmatpush1.bf16.msra.mxu0 %v428
  %435 = vmatprep.subr.bf16.mxu0 0
  %436 = vmatpush1.bf16.msra.mxu0 0
  %437 = vmatprep.subr.bf16.mxu0 0
  %438 = vmatpush1.bf16.msra.mxu0 0
  %439 = vmatprep.subr.bf16.mxu0 0
  %440 = vmatpush1.bf16.msra.mxu0 0
  %441 = vmatprep.subr.bf16.mxu0 0
  %442 = vmatpush1.bf16.msra.mxu0 0
  %443 = vmatprep.subr.bf16.mxu0 0
  %444 = vmatpush1.bf16.msra.mxu0 0
  %445 = vmatprep.subr.bf16.mxu0 0
  %446 = vmatpush1.bf16.msra.mxu0 0
  %447 = vmatprep.subr.bf16.mxu0 0
  %448 = vmatpush1.bf16.msra.mxu0 0
  %449 = vmatprep.subr.bf16.mxu0 0
  %450 = vmatpush1.bf16.msra.mxu0 0
  %451 = vmatprep.subr.bf16.mxu0 0
  %452 = vmatpush1.bf16.msra.mxu0 0
  %453 = vmatprep.subr.bf16.mxu0 0
  %454 = vmatpush1.bf16.msra.mxu0 0
  %455 = vmatprep.subr.bf16.mxu0 0
  %456 = vmatpush1.bf16.msra.mxu0 0
  %457 = vmatprep.subr.bf16.mxu0 0
  %458 = vmatpush1.bf16.msra.mxu0 0
  %459 = vmatprep.subr.bf16.mxu0 0
  %460 = vmatpush1.bf16.msra.mxu0 0
  %461 = vmatprep.subr.bf16.mxu0 0
  %462 = vmatpush1.bf16.msra.mxu0 0
  %463 = vmatprep.mubr.bf16.mxu0 0
  %464 = vmatmul.mubr.bf16.gmra.mrb[0].mxu0 %v324
  %v465 = vpop.f32.mrb[0].mxu0
  %v466 = vadd.f32 0.0, %v465
  %v467 = vpop.f32.mrb[0].mxu0
  %v468 = vpop.f32.mrb[0].mxu0
  %v469 = vadd.f32 0.0, %v468
  %v470 = vpop.f32.mrb[0].mxu0
  %471 = vdwg.mxu0
  %v472 = vadd.f32 %v417, %v466
  %v473 = vadd.f32 %v418, %v469
  %v474 = vxor.u32 %v472, 2147483648
  %v475 = vxor.u32 %v473, 2147483648
  %v476 = vmul.f32 %v474, 1.442695
  %v477 = vpow.pop %v476
  %v478 = vmul.f32 %v475, 1.442695
  %v479 = vpow.pop %v478
  %v480 = vadd.f32 %v477, 1.0
  %v481 = vadd.f32 %v479, 1.0
  %v482 = vrcp.pop %v480
  %v483 = vmul.f32 1.0, %v482
  %v484 = vrcp.pop %v481
  %v485 = vmul.f32 1.0, %v484
  %v486 = vtanh.pop %v472
  %v487 = vtanh.pop %v473
  %v488 = vmul.f32 %v483, 0.0
  %v489 = vmul.f32 %v485, 0.0
  %492 = vrot.lane.b32.xlu0 %v486, 64
  %v493 = vpop.permute.xlu0 %492
  %494 = vrot.lane.b32.xlu0 %v487, 64
  %v495 = vpop.permute.xlu0 %494
  %v498 = vmul.f32 %v483, %v493
  %v499 = vmul.f32 %v485, %v495
  %502 = vrot.lane.b32.xlu0 %v498, 32
  %v503 = vpop.permute.xlu0 %502
  %504 = vrot.lane.b32.xlu0 %v499, 32
  %v505 = vpop.permute.xlu0 %504
  %v508 = vadd.f32 %v488, %v503
  %v509 = vadd.f32 %v489, %v505
  %v510 = vtanh.pop %v508
  %v511 = vtanh.pop %v509
  %514 = vrot.lane.b32.xlu0 %v510, 64
  %v515 = vpop.permute.xlu0 %514
  %516 = vrot.lane.b32.xlu0 %v511, 64
  %v517 = vpop.permute.xlu0 %516
  %v520 = vmul.f32 %v483, %v515
  %v521 = vmul.f32 %v485, %v517
  %v522 = vld [vmem:[#allocation2 + $0x10] sm:$0xff]
  %v523 = vld [vmem:[#allocation2 + $0x68] sm:$0xff]
  %v524 = vunpack.c.l.bf16 %v522
  %v525 = vunpack.c.h.bf16 %v522
  %v526 = vpack.c.bf16 %v416, %v415
  %528 = vrot.lane.b32.xlu0 %v526, 32
  %v529 = vpop.permute.xlu0 %528
  %v531 = vsel %vm322, %v529, 0
  %533 = vmatprep.subr.bf16.mxu0 0
  %534 = vmatpush1.bf16.msra.mxu0 %v318
  %535 = vmatprep.subr.bf16.mxu0 0
  %536 = vmatpush1.bf16.msra.mxu0 %v319
  %537 = vmatprep.subr.bf16.mxu0 0
  %538 = vmatpush1.bf16.msra.mxu0 0
  %539 = vmatprep.subr.bf16.mxu0 0
  %540 = vmatpush1.bf16.msra.mxu0 0
  %541 = vmatprep.subr.bf16.mxu0 0
  %542 = vmatpush1.bf16.msra.mxu0 0
  %543 = vmatprep.subr.bf16.mxu0 0
  %544 = vmatpush1.bf16.msra.mxu0 0
  %545 = vmatprep.subr.bf16.mxu0 0
  %546 = vmatpush1.bf16.msra.mxu0 0
  %547 = vmatprep.subr.bf16.mxu0 0
  %548 = vmatpush1.bf16.msra.mxu0 0
  %549 = vmatprep.subr.bf16.mxu0 0
  %550 = vmatpush1.bf16.msra.mxu0 0
  %551 = vmatprep.subr.bf16.mxu0 0
  %552 = vmatpush1.bf16.msra.mxu0 0
  %553 = vmatprep.subr.bf16.mxu0 0
  %554 = vmatpush1.bf16.msra.mxu0 0
  %555 = vmatprep.subr.bf16.mxu0 0
  %556 = vmatpush1.bf16.msra.mxu0 0
  %557 = vmatprep.subr.bf16.mxu0 0
  %558 = vmatpush1.bf16.msra.mxu0 0
  %559 = vmatprep.subr.bf16.mxu0 0
  %560 = vmatpush1.bf16.msra.mxu0 0
  %561 = vmatprep.subr.bf16.mxu0 0
  %562 = vmatpush1.bf16.msra.mxu0 0
  %563 = vmatprep.subr.bf16.mxu0 0
  %564 = vmatpush1.bf16.msra.mxu0 0
  %565 = vmatprep.mubr.bf16.mxu0 0
  %566 = vmatmul.mubr.bf16.gmra.mrb[0].mxu0 %v531
  %v567 = vpop.f32.mrb[0].mxu0
  %v568 = vadd.f32 0.0, %v567
  %v569 = vpop.f32.mrb[0].mxu0
  %v570 = vpop.f32.mrb[0].mxu0
  %v571 = vadd.f32 0.0, %v570
  %v572 = vpop.f32.mrb[0].mxu0
  %573 = vdwg.mxu0
  %v574 = vadd.f32 %v524, %v568
  %v575 = vadd.f32 %v525, %v571
  %v576 = vxor.u32 %v574, 2147483648
  %v577 = vxor.u32 %v575, 2147483648
  %v578 = vmul.f32 %v576, 1.442695
  %v579 = vpow.pop %v578
  %v580 = vmul.f32 %v577, 1.442695
  %v581 = vpow.pop %v580
  %v582 = vadd.f32 %v579, 1.0
  %v583 = vadd.f32 %v581, 1.0
  %v584 = vrcp.pop %v582
  %v585 = vmul.f32 1.0, %v584
  %v586 = vrcp.pop %v583
  %v587 = vmul.f32 1.0, %v586
  %v588 = vtanh.pop %v574
  %v589 = vtanh.pop %v575
  %v590 = vmul.f32 %v585, %v403
  %v591 = vmul.f32 %v587, %v404
  %594 = vrot.lane.b32.xlu0 %v588, 64
  %v595 = vpop.permute.xlu0 %594
  %596 = vrot.lane.b32.xlu0 %v589, 64
  %v597 = vpop.permute.xlu0 %596
  %v600 = vmul.f32 %v585, %v595
  %v601 = vmul.f32 %v587, %v597
  %604 = vrot.lane.b32.xlu0 %v600, 32
  %v605 = vpop.permute.xlu0 %604
  %606 = vrot.lane.b32.xlu0 %v601, 32
  %v607 = vpop.permute.xlu0 %606
  %v610 = vadd.f32 %v590, %v605
  %v611 = vadd.f32 %v591, %v607
  %v612 = vtanh.pop %v610
  %v613 = vtanh.pop %v611
  %616 = vrot.lane.b32.xlu0 %v612, 64
  %v617 = vpop.permute.xlu0 %616
  %618 = vrot.lane.b32.xlu0 %v613, 64
  %v619 = vpop.permute.xlu0 %618
  %v622 = vmul.f32 %v585, %v617
  %v623 = vmul.f32 %v587, %v619
  %v624 = vunpack.c.l.bf16 %v523
  %v625 = vunpack.c.h.bf16 %v523
  %v626 = vpack.c.bf16 %v521, %v520
  %628 = vrot.lane.b32.xlu0 %v626, 32
  %v629 = vpop.permute.xlu0 %628
  %v631 = vsel %vm322, %v629, 0
  %633 = vmatprep.subr.bf16.mxu0 0
  %634 = vmatpush1.bf16.msra.mxu0 %v427
  %635 = vmatprep.subr.bf16.mxu0 0
  %636 = vmatpush1.bf16.msra.mxu0 %v428
  %637 = vmatprep.subr.bf16.mxu0 0
  %638 = vmatpush1.bf16.msra.mxu0 0
  %639 = vmatprep.subr.bf16.mxu0 0
  %640 = vmatpush1.bf16.msra.mxu0 0
  %641 = vmatprep.subr.bf16.mxu0 0
  %642 = vmatpush1.bf16.msra.mxu0 0
  %643 = vmatprep.subr.bf16.mxu0 0
  %644 = vmatpush1.bf16.msra.mxu0 0
  %645 = vmatprep.subr.bf16.mxu0 0
  %646 = vmatpush1.bf16.msra.mxu0 0
  %647 = vmatprep.subr.bf16.mxu0 0
  %648 = vmatpush1.bf16.msra.mxu0 0
  %649 = vmatprep.subr.bf16.mxu0 0
  %650 = vmatpush1.bf16.msra.mxu0 0
  %651 = vmatprep.subr.bf16.mxu0 0
  %652 = vmatpush1.bf16.msra.mxu0 0
  %653 = vmatprep.subr.bf16.mxu0 0
  %654 = vmatpush1.bf16.msra.mxu0 0
  %655 = vmatprep.subr.bf16.mxu0 0
  %656 = vmatpush1.bf16.msra.mxu0 0
  %657 = vmatprep.subr.bf16.mxu0 0
  %658 = vmatpush1.bf16.msra.mxu0 0
  %659 = vmatprep.subr.bf16.mxu0 0
  %660 = vmatpush1.bf16.msra.mxu0 0
  %661 = vmatprep.subr.bf16.mxu0 0
  %662 = vmatpush1.bf16.msra.mxu0 0
  %663 = vmatprep.subr.bf16.mxu0 0
  %664 = vmatpush1.bf16.msra.mxu0 0
  %665 = vmatprep.mubr.bf16.mxu0 0
  %666 = vmatmul.mubr.bf16.gmra.mrb[0].mxu0 %v631
  %v667 = vpop.f32.mrb[0].mxu0
  %v668 = vadd.f32 0.0, %v667
  %v669 = vpop.f32.mrb[0].mxu0
  %v670 = vpop.f32.mrb[0].mxu0
  %v671 = vadd.f32 0.0, %v670
  %v672 = vpop.f32.mrb[0].mxu0
  %673 = vdwg.mxu0
  %v674 = vadd.f32 %v624, %v668
  %v675 = vadd.f32 %v625, %v671
  %v676 = vxor.u32 %v674, 2147483648
  %v677 = vxor.u32 %v675, 2147483648
  %v678 = vmul.f32 %v676, 1.442695
  %v679 = vpow.pop %v678
  %v680 = vmul.f32 %v677, 1.442695
  %v681 = vpow.pop %v680
  %v682 = vadd.f32 %v679, 1.0
  %v683 = vadd.f32 %v681, 1.0
  %v684 = vrcp.pop %v682
  %v685 = vmul.f32 1.0, %v684
  %v686 = vrcp.pop %v683
  %v687 = vmul.f32 1.0, %v686
  %v688 = vtanh.pop %v674
  %v689 = vtanh.pop %v675
  %v690 = vmul.f32 %v685, %v508
  %v691 = vmul.f32 %v687, %v509
  %694 = vrot.lane.b32.xlu0 %v688, 64
  %v695 = vpop.permute.xlu0 %694
  %696 = vrot.lane.b32.xlu0 %v689, 64
  %v697 = vpop.permute.xlu0 %696
  %v700 = vmul.f32 %v685, %v695
  %v701 = vmul.f32 %v687, %v697
  %704 = vrot.lane.b32.xlu0 %v700, 32
  %v705 = vpop.permute.xlu0 %704
  %706 = vrot.lane.b32.xlu0 %v701, 32
  %v707 = vpop.permute.xlu0 %706
  %v710 = vadd.f32 %v690, %v705
  %v711 = vadd.f32 %v691, %v707
  %v712 = vtanh.pop %v710
  %v713 = vtanh.pop %v711
  %716 = vrot.lane.b32.xlu0 %v712, 64
  %v717 = vpop.permute.xlu0 %716
  %718 = vrot.lane.b32.xlu0 %v713, 64
  %v719 = vpop.permute.xlu0 %718
  %v722 = vmul.f32 %v685, %v717
  %v723 = vmul.f32 %v687, %v719
  %v724 = vld [vmem:[#allocation2 + $0x20] sm:$0xff]
  %v725 = vld [vmem:[#allocation2 + $0x58] sm:$0xff]
  %v726 = vunpack.c.l.bf16 %v724
  %v727 = vunpack.c.h.bf16 %v724
  %v728 = vpack.c.bf16 %v623, %v622
  %730 = vrot.lane.b32.xlu0 %v728, 32
  %v731 = vpop.permute.xlu0 %730
  %v733 = vsel %vm322, %v731, 0
  %735 = vmatprep.subr.bf16.mxu0 0
  %736 = vmatpush1.bf16.msra.mxu0 %v318
  %737 = vmatprep.subr.bf16.mxu0 0
  %738 = vmatpush1.bf16.msra.mxu0 %v319
  %739 = vmatprep.subr.bf16.mxu0 0
  %740 = vmatpush1.bf16.msra.mxu0 0
  %741 = vmatprep.subr.bf16.mxu0 0
  %742 = vmatpush1.bf16.msra.mxu0 0
  %743 = vmatprep.subr.bf16.mxu0 0
  %744 = vmatpush1.bf16.msra.mxu0 0
  %745 = vmatprep.subr.bf16.mxu0 0
  %746 = vmatpush1.bf16.msra.mxu0 0
  %747 = vmatprep.subr.bf16.mxu0 0
  %748 = vmatpush1.bf16.msra.mxu0 0
  %749 = vmatprep.subr.bf16.mxu0 0
  %750 = vmatpush1.bf16.msra.mxu0 0
  %751 = vmatprep.subr.bf16.mxu0 0
  %752 = vmatpush1.bf16.msra.mxu0 0
  %753 = vmatprep.subr.bf16.mxu0 0
  %754 = vmatpush1.bf16.msra.mxu0 0
  %755 = vmatprep.subr.bf16.mxu0 0
  %756 = vmatpush1.bf16.msra.mxu0 0
  %757 = vmatprep.subr.bf16.mxu0 0
  %758 = vmatpush1.bf16.msra.mxu0 0
  %759 = vmatprep.subr.bf16.mxu0 0
  %760 = vmatpush1.bf16.msra.mxu0 0
  %761 = vmatprep.subr.bf16.mxu0 0
  %762 = vmatpush1.bf16.msra.mxu0 0
  %763 = vmatprep.subr.bf16.mxu0 0
  %764 = vmatpush1.bf16.msra.mxu0 0
  %765 = vmatprep.subr.bf16.mxu0 0
  %766 = vmatpush1.bf16.msra.mxu0 0
  %767 = vmatprep.mubr.bf16.mxu0 0
  %768 = vmatmul.mubr.bf16.gmra.mrb[0].mxu0 %v733
  %v769 = vpop.f32.mrb[0].mxu0
  %v770 = vadd.f32 0.0, %v769
  %v771 = vpop.f32.mrb[0].mxu0
  %v772 = vpop.f32.mrb[0].mxu0
  %v773 = vadd.f32 0.0, %v772
  %v774 = vpop.f32.mrb[0].mxu0
  %775 = vdwg.mxu0
  %v776 = vadd.f32 %v726, %v770
  %v777 = vadd.f32 %v727, %v773
  %v778 = vxor.u32 %v776, 2147483648
  %v779 = vxor.u32 %v777, 2147483648
  %v780 = vmul.f32 %v778, 1.442695
  %v781 = vpow.pop %v780
  %v782 = vmul.f32 %v779, 1.442695
  %v783 = vpow.pop %v782
  %v784 = vadd.f32 %v781, 1.0
  %v785 = vadd.f32 %v783, 1.0
  %v786 = vrcp.pop %v784
  %v787 = vmul.f32 1.0, %v786
  %v788 = vrcp.pop %v785
  %v789 = vmul.f32 1.0, %v788
  %v790 = vtanh.pop %v776
  %v791 = vtanh.pop %v777
  %v792 = vmul.f32 %v787, %v610
  %v793 = vmul.f32 %v789, %v611
  %796 = vrot.lane.b32.xlu0 %v790, 64
  %v797 = vpop.permute.xlu0 %796
  %798 = vrot.lane.b32.xlu0 %v791, 64
  %v799 = vpop.permute.xlu0 %798
  %v802 = vmul.f32 %v787, %v797
  %v803 = vmul.f32 %v789, %v799
  %806 = vrot.lane.b32.xlu0 %v802, 32
  %v807 = vpop.permute.xlu0 %806
  %808 = vrot.lane.b32.xlu0 %v803, 32
  %v809 = vpop.permute.xlu0 %808
  %v812 = vadd.f32 %v792, %v807
  %v813 = vadd.f32 %v793, %v809
  %v814 = vtanh.pop %v812
  %v815 = vtanh.pop %v813
  %818 = vrot.lane.b32.xlu0 %v814, 64
  %v819 = vpop.permute.xlu0 %818
  %820 = vrot.lane.b32.xlu0 %v815, 64
  %v821 = vpop.permute.xlu0 %820
  %v824 = vmul.f32 %v787, %v819
  %v825 = vmul.f32 %v789, %v821
  %v826 = vunpack.c.l.bf16 %v725
  %v827 = vunpack.c.h.bf16 %v725
  %v828 = vpack.c.bf16 %v723, %v722
  %830 = vrot.lane.b32.xlu0 %v828, 32
  %v831 = vpop.permute.xlu0 %830
  %v833 = vsel %vm322, %v831, 0
  %835 = vmatprep.subr.bf16.mxu0 0
  %836 = vmatpush1.bf16.msra.mxu0 %v427
  %837 = vmatprep.subr.bf16.mxu0 0
  %838 = vmatpush1.bf16.msra.mxu0 %v428
  %839 = vmatprep.subr.bf16.mxu0 0
  %840 = vmatpush1.bf16.msra.mxu0 0
  %841 = vmatprep.subr.bf16.mxu0 0
  %842 = vmatpush1.bf16.msra.mxu0 0
  %843 = vmatprep.subr.bf16.mxu0 0
  %844 = vmatpush1.bf16.msra.mxu0 0
  %845 = vmatprep.subr.bf16.mxu0 0
  %846 = vmatpush1.bf16.msra.mxu0 0
  %847 = vmatprep.subr.bf16.mxu0 0
  %848 = vmatpush1.bf16.msra.mxu0 0
  %849 = vmatprep.subr.bf16.mxu0 0
  %850 = vmatpush1.bf16.msra.mxu0 0
  %851 = vmatprep.subr.bf16.mxu0 0
  %852 = vmatpush1.bf16.msra.mxu0 0
  %853 = vmatprep.subr.bf16.mxu0 0
  %854 = vmatpush1.bf16.msra.mxu0 0
  %855 = vmatprep.subr.bf16.mxu0 0
  %856 = vmatpush1.bf16.msra.mxu0 0
  %857 = vmatprep.subr.bf16.mxu0 0
  %858 = vmatpush1.bf16.msra.mxu0 0
  %859 = vmatprep.subr.bf16.mxu0 0
  %860 = vmatpush1.bf16.msra.mxu0 0
  %861 = vmatprep.subr.bf16.mxu0 0
  %862 = vmatpush1.bf16.msra.mxu0 0
  %863 = vmatprep.subr.bf16.mxu0 0
  %864 = vmatpush1.bf16.msra.mxu0 0
  %865 = vmatprep.subr.bf16.mxu0 0
  %866 = vmatpush1.bf16.msra.mxu0 0
  %867 = vmatprep.mubr.bf16.mxu0 0
  %868 = vmatmul.mubr.bf16.gmra.mrb[0].mxu0 %v833
  %v869 = vpop.f32.mrb[0].mxu0
  %v870 = vadd.f32 0.0, %v869
  %v871 = vpop.f32.mrb[0].mxu0
  %v872 = vpop.f32.mrb[0].mxu0
  %v873 = vadd.f32 0.0, %v872
  %v874 = vpop.f32.mrb[0].mxu0
  %875 = vdwg.mxu0
  %v876 = vadd.f32 %v826, %v870
  %v877 = vadd.f32 %v827, %v873
  %v878 = vxor.u32 %v876, 2147483648
  %v879 = vxor.u32 %v877, 2147483648
  %v880 = vmul.f32 %v878, 1.442695
  %v881 = vpow.pop %v880
  %v882 = vmul.f32 %v879, 1.442695
  %v883 = vpow.pop %v882
  %v884 = vadd.f32 %v881, 1.0
  %v885 = vadd.f32 %v883, 1.0
  %v886 = vrcp.pop %v884
  %v887 = vmul.f32 1.0, %v886
  %v888 = vrcp.pop %v885
  %v889 = vmul.f32 1.0, %v888
  %v890 = vtanh.pop %v876
  %v891 = vtanh.pop %v877
  %v892 = vmul.f32 %v887, %v710
  %v893 = vmul.f32 %v889, %v711
  %896 = vrot.lane.b32.xlu0 %v890, 64
  %v897 = vpop.permute.xlu0 %896
  %898 = vrot.lane.b32.xlu0 %v891, 64
  %v899 = vpop.permute.xlu0 %898
  %v902 = vmul.f32 %v887, %v897
  %v903 = vmul.f32 %v889, %v899
  %906 = vrot.lane.b32.xlu0 %v902, 32
  %v907 = vpop.permute.xlu0 %906
  %908 = vrot.lane.b32.xlu0 %v903, 32
  %v909 = vpop.permute.xlu0 %908
  %v912 = vadd.f32 %v892, %v907
  %v913 = vadd.f32 %v893, %v909
  %v914 = vtanh.pop %v912
  %v915 = vtanh.pop %v913
  %918 = vrot.lane.b32.xlu0 %v914, 64
  %v919 = vpop.permute.xlu0 %918
  %920 = vrot.lane.b32.xlu0 %v915, 64
  %v921 = vpop.permute.xlu0 %920
  %v924 = vmul.f32 %v887, %v919
  %v925 = vmul.f32 %v889, %v921
  %v926 = vld [vmem:[#allocation2 + $0x30] sm:$0xff]
  %v927 = vld [vmem:[#allocation2 + $0x48] sm:$0xff]
  %v928 = vunpack.c.l.bf16 %v926
  %v929 = vunpack.c.h.bf16 %v926
  %v930 = vpack.c.bf16 %v825, %v824
  %932 = vrot.lane.b32.xlu0 %v930, 32
  %v933 = vpop.permute.xlu0 %932
  %v935 = vsel %vm322, %v933, 0
  %937 = vmatprep.subr.bf16.mxu0 0
  %938 = vmatpush1.bf16.msra.mxu0 %v318
  %939 = vmatprep.subr.bf16.mxu0 0
  %940 = vmatpush1.bf16.msra.mxu0 %v319
  %941 = vmatprep.subr.bf16.mxu0 0
  %942 = vmatpush1.bf16.msra.mxu0 0
  %943 = vmatprep.subr.bf16.mxu0 0
  %944 = vmatpush1.bf16.msra.mxu0 0
  %945 = vmatprep.subr.bf16.mxu0 0
  %946 = vmatpush1.bf16.msra.mxu0 0
  %947 = vmatprep.subr.bf16.mxu0 0
  %948 = vmatpush1.bf16.msra.mxu0 0
  %949 = vmatprep.subr.bf16.mxu0 0
  %950 = vmatpush1.bf16.msra.mxu0 0
  %951 = vmatprep.subr.bf16.mxu0 0
  %952 = vmatpush1.bf16.msra.mxu0 0
  %953 = vmatprep.subr.bf16.mxu0 0
  %954 = vmatpush1.bf16.msra.mxu0 0
  %955 = vmatprep.subr.bf16.mxu0 0
  %956 = vmatpush1.bf16.msra.mxu0 0
  %957 = vmatprep.subr.bf16.mxu0 0
  %958 = vmatpush1.bf16.msra.mxu0 0
  %959 = vmatprep.subr.bf16.mxu0 0
  %960 = vmatpush1.bf16.msra.mxu0 0
  %961 = vmatprep.subr.bf16.mxu0 0
  %962 = vmatpush1.bf16.msra.mxu0 0
  %963 = vmatprep.subr.bf16.mxu0 0
  %964 = vmatpush1.bf16.msra.mxu0 0
  %965 = vmatprep.subr.bf16.mxu0 0
  %966 = vmatpush1.bf16.msra.mxu0 0
  %967 = vmatprep.subr.bf16.mxu0 0
  %968 = vmatpush1.bf16.msra.mxu0 0
  %969 = vmatprep.mubr.bf16.mxu0 0
  %970 = vmatmul.mubr.bf16.gmra.mrb[0].mxu0 %v935
  %v971 = vpop.f32.mrb[0].mxu0
  %v972 = vadd.f32 0.0, %v971
  %v973 = vpop.f32.mrb[0].mxu0
  %v974 = vpop.f32.mrb[0].mxu0
  %v975 = vadd.f32 0.0, %v974
  %v976 = vpop.f32.mrb[0].mxu0
  %977 = vdwg.mxu0
  %v978 = vadd.f32 %v928, %v972
  %v979 = vadd.f32 %v929, %v975
  %v980 = vxor.u32 %v978, 2147483648
  %v981 = vxor.u32 %v979, 2147483648
  %v982 = vmul.f32 %v980, 1.442695
  %v983 = vpow.pop %v982
  %v984 = vmul.f32 %v981, 1.442695
  %v985 = vpow.pop %v984
  %v986 = vadd.f32 %v983, 1.0
  %v987 = vadd.f32 %v985, 1.0
  %v988 = vrcp.pop %v986
  %v989 = vmul.f32 1.0, %v988
  %v990 = vrcp.pop %v987
  %v991 = vmul.f32 1.0, %v990
  %v992 = vtanh.pop %v978
  %v993 = vtanh.pop %v979
  %v994 = vmul.f32 %v989, %v812
  %v995 = vmul.f32 %v991, %v813
  %998 = vrot.lane.b32.xlu0 %v992, 64
  %v999 = vpop.permute.xlu0 %998
  %1000 = vrot.lane.b32.xlu0 %v993, 64
  %v1001 = vpop.permute.xlu0 %1000
  %v1004 = vmul.f32 %v989, %v999
  %v1005 = vmul.f32 %v991, %v1001
  %1008 = vrot.lane.b32.xlu0 %v1004, 32
  %v1009 = vpop.permute.xlu0 %1008
  %1010 = vrot.lane.b32.xlu0 %v1005, 32
  %v1011 = vpop.permute.xlu0 %1010
  %v1014 = vadd.f32 %v994, %v1009
  %v1015 = vadd.f32 %v995, %v1011
  %v1016 = vtanh.pop %v1014
  %v1017 = vtanh.pop %v1015
  %1020 = vrot.lane.b32.xlu0 %v1016, 64
  %v1021 = vpop.permute.xlu0 %1020
  %1022 = vrot.lane.b32.xlu0 %v1017, 64
  %v1023 = vpop.permute.xlu0 %1022
  %v1026 = vmul.f32 %v989, %v1021
  %v1027 = vmul.f32 %v991, %v1023
  %v1028 = vunpack.c.l.bf16 %v927
  %v1029 = vunpack.c.h.bf16 %v927
  %v1030 = vpack.c.bf16 %v925, %v924
  %1032 = vrot.lane.b32.xlu0 %v1030, 32
  %v1033 = vpop.permute.xlu0 %1032
  %v1035 = vsel %vm322, %v1033, 0
  %1037 = vmatprep.subr.bf16.mxu0 0
  %1038 = vmatpush1.bf16.msra.mxu0 %v427
  %1039 = vmatprep.subr.bf16.mxu0 0
  %1040 = vmatpush1.bf16.msra.mxu0 %v428
  %1041 = vmatprep.subr.bf16.mxu0 0
  %1042 = vmatpush1.bf16.msra.mxu0 0
  %1043 = vmatprep.subr.bf16.mxu0 0
  %1044 = vmatpush1.bf16.msra.mxu0 0
  %1045 = vmatprep.subr.bf16.mxu0 0
  %1046 = vmatpush1.bf16.msra.mxu0 0
  %1047 = vmatprep.subr.bf16.mxu0 0
  %1048 = vmatpush1.bf16.msra.mxu0 0
  %1049 = vmatprep.subr.bf16.mxu0 0
  %1050 = vmatpush1.bf16.msra.mxu0 0
  %1051 = vmatprep.subr.bf16.mxu0 0
  %1052 = vmatpush1.bf16.msra.mxu0 0
  %1053 = vmatprep.subr.bf16.mxu0 0
  %1054 = vmatpush1.bf16.msra.mxu0 0
  %1055 = vmatprep.subr.bf16.mxu0 0
  %1056 = vmatpush1.bf16.msra.mxu0 0
  %1057 = vmatprep.subr.bf16.mxu0 0
  %1058 = vmatpush1.bf16.msra.mxu0 0
  %1059 = vmatprep.subr.bf16.mxu0 0
  %1060 = vmatpush1.bf16.msra.mxu0 0
  %1061 = vmatprep.subr.bf16.mxu0 0
  %1062 = vmatpush1.bf16.msra.mxu0 0
  %1063 = vmatprep.subr.bf16.mxu0 0
  %1064 = vmatpush1.bf16.msra.mxu0 0
  %1065 = vmatprep.subr.bf16.mxu0 0
  %1066 = vmatpush1.bf16.msra.mxu0 0
  %1067 = vmatprep.subr.bf16.mxu0 0
  %1068 = vmatpush1.bf16.msra.mxu0 0
  %1069 = vmatprep.mubr.bf16.mxu0 0
  %1070 = vmatmul.mubr.bf16.gmra.mrb[0].mxu0 %v1035
  %v1071 = vpop.f32.mrb[0].mxu0
  %v1072 = vadd.f32 0.0, %v1071
  %v1073 = vpop.f32.mrb[0].mxu0
  %v1074 = vpop.f32.mrb[0].mxu0
  %v1075 = vadd.f32 0.0, %v1074
  %v1076 = vpop.f32.mrb[0].mxu0
  %1077 = vdwg.mxu0
  %v1078 = vadd.f32 %v1028, %v1072
  %v1079 = vadd.f32 %v1029, %v1075
  %v1080 = vxor.u32 %v1078, 2147483648
  %v1081 = vxor.u32 %v1079, 2147483648
  %v1082 = vmul.f32 %v1080, 1.442695
  %v1083 = vpow.pop %v1082
  %v1084 = vmul.f32 %v1081, 1.442695
  %v1085 = vpow.pop %v1084
  %v1086 = vadd.f32 %v1083, 1.0
  %v1087 = vadd.f32 %v1085, 1.0
  %v1088 = vrcp.pop %v1086
  %v1089 = vmul.f32 1.0, %v1088
  %v1090 = vrcp.pop %v1087
  %v1091 = vmul.f32 1.0, %v1090
  %v1092 = vtanh.pop %v1078
  %v1093 = vtanh.pop %v1079
  %v1094 = vmul.f32 %v1089, %v912
  %v1095 = vmul.f32 %v1091, %v913
  %1098 = vrot.lane.b32.xlu0 %v1092, 64
  %v1099 = vpop.permute.xlu0 %1098
  %1100 = vrot.lane.b32.xlu0 %v1093, 64
  %v1101 = vpop.permute.xlu0 %1100
  %v1104 = vmul.f32 %v1089, %v1099
  %v1105 = vmul.f32 %v1091, %v1101
  %1108 = vrot.lane.b32.xlu0 %v1104, 32
  %v1109 = vpop.permute.xlu0 %1108
  %1110 = vrot.lane.b32.xlu0 %v1105, 32
  %v1111 = vpop.permute.xlu0 %1110
  %v1114 = vadd.f32 %v1094, %v1109
  %v1115 = vadd.f32 %v1095, %v1111
  %v1116 = vtanh.pop %v1114
  %v1117 = vtanh.pop %v1115
  %1120 = vrot.lane.b32.xlu0 %v1116, 64
  %v1121 = vpop.permute.xlu0 %1120
  %1122 = vrot.lane.b32.xlu0 %v1117, 64
  %v1123 = vpop.permute.xlu0 %1122
  %v1126 = vmul.f32 %v1089, %v1121
  %v1127 = vmul.f32 %v1091, %v1123
  %v1128 = vld [vmem:[#allocation2 + $0x40] sm:$0xff]
  %v1129 = vld [vmem:[#allocation2 + $0x38] sm:$0xff]
  %v1130 = vunpack.c.l.bf16 %v1128
  %v1131 = vunpack.c.h.bf16 %v1128
  %v1132 = vpack.c.bf16 %v1027, %v1026
  %1134 = vrot.lane.b32.xlu0 %v1132, 32
  %v1135 = vpop.permute.xlu0 %1134
  %v1137 = vsel %vm322, %v1135, 0
  %1139 = vmatprep.subr.bf16.mxu0 0
  %1140 = vmatpush1.bf16.msra.mxu0 %v318
  %1141 = vmatprep.subr.bf16.mxu0 0
  %1142 = vmatpush1.bf16.msra.mxu0 %v319
  %1143 = vmatprep.subr.bf16.mxu0 0
  %1144 = vmatpush1.bf16.msra.mxu0 0
  %1145 = vmatprep.subr.bf16.mxu0 0
  %1146 = vmatpush1.bf16.msra.mxu0 0
  %1147 = vmatprep.subr.bf16.mxu0 0
  %1148 = vmatpush1.bf16.msra.mxu0 0
  %1149 = vmatprep.subr.bf16.mxu0 0
  %1150 = vmatpush1.bf16.msra.mxu0 0
  %1151 = vmatprep.subr.bf16.mxu0 0
  %1152 = vmatpush1.bf16.msra.mxu0 0
  %1153 = vmatprep.subr.bf16.mxu0 0
  %1154 = vmatpush1.bf16.msra.mxu0 0
  %1155 = vmatprep.subr.bf16.mxu0 0
  %1156 = vmatpush1.bf16.msra.mxu0 0
  %1157 = vmatprep.subr.bf16.mxu0 0
  %1158 = vmatpush1.bf16.msra.mxu0 0
  %1159 = vmatprep.subr.bf16.mxu0 0
  %1160 = vmatpush1.bf16.msra.mxu0 0
  %1161 = vmatprep.subr.bf16.mxu0 0
  %1162 = vmatpush1.bf16.msra.mxu0 0
  %1163 = vmatprep.subr.bf16.mxu0 0
  %1164 = vmatpush1.bf16.msra.mxu0 0
  %1165 = vmatprep.subr.bf16.mxu0 0
  %1166 = vmatpush1.bf16.msra.mxu0 0
  %1167 = vmatprep.subr.bf16.mxu0 0
  %1168 = vmatpush1.bf16.msra.mxu0 0
  %1169 = vmatprep.subr.bf16.mxu0 0
  %1170 = vmatpush1.bf16.msra.mxu0 0
  %1171 = vmatprep.mubr.bf16.mxu0 0
  %1172 = vmatmul.mubr.bf16.gmra.mrb[0].mxu0 %v1137
  %v1173 = vpop.f32.mrb[0].mxu0
  %v1174 = vadd.f32 0.0, %v1173
  %v1175 = vpop.f32.mrb[0].mxu0
  %v1176 = vpop.f32.mrb[0].mxu0
  %v1177 = vadd.f32 0.0, %v1176
  %v1178 = vpop.f32.mrb[0].mxu0
  %1179 = vdwg.mxu0
  %v1180 = vadd.f32 %v1130, %v1174
  %v1181 = vadd.f32 %v1131, %v1177
  %v1182 = vxor.u32 %v1180, 2147483648
  %v1183 = vxor.u32 %v1181, 2147483648
  %v1184 = vmul.f32 %v1182, 1.442695
  %v1185 = vpow.pop %v1184
  %v1186 = vmul.f32 %v1183, 1.442695
  %v1187 = vpow.pop %v1186
  %v1188 = vadd.f32 %v1185, 1.0
  %v1189 = vadd.f32 %v1187, 1.0
  %v1190 = vrcp.pop %v1188
  %v1191 = vmul.f32 1.0, %v1190
  %v1192 = vrcp.pop %v1189
  %v1193 = vmul.f32 1.0, %v1192
  %v1194 = vtanh.pop %v1180
  %v1195 = vtanh.pop %v1181
  %v1196 = vmul.f32 %v1191, %v1014
  %v1197 = vmul.f32 %v1193, %v1015
  %1200 = vrot.lane.b32.xlu0 %v1194, 64
  %v1201 = vpop.permute.xlu0 %1200
  %1202 = vrot.lane.b32.xlu0 %v1195, 64
  %v1203 = vpop.permute.xlu0 %1202
  %v1206 = vmul.f32 %v1191, %v1201
  %v1207 = vmul.f32 %v1193, %v1203
  %1210 = vrot.lane.b32.xlu0 %v1206, 32
  %v1211 = vpop.permute.xlu0 %1210
  %1212 = vrot.lane.b32.xlu0 %v1207, 32
  %v1213 = vpop.permute.xlu0 %1212
  %v1216 = vadd.f32 %v1196, %v1211
  %v1217 = vadd.f32 %v1197, %v1213
  %v1218 = vtanh.pop %v1216
  %v1219 = vtanh.pop %v1217
  %1222 = vrot.lane.b32.xlu0 %v1218, 64
  %v1223 = vpop.permute.xlu0 %1222
  %1224 = vrot.lane.b32.xlu0 %v1219, 64
  %v1225 = vpop.permute.xlu0 %1224
  %v1228 = vmul.f32 %v1191, %v1223
  %v1229 = vmul.f32 %v1193, %v1225
  %v1230 = vunpack.c.l.bf16 %v1129
  %v1231 = vunpack.c.h.bf16 %v1129
  %v1232 = vpack.c.bf16 %v1127, %v1126
  %1234 = vrot.lane.b32.xlu0 %v1232, 32
  %v1235 = vpop.permute.xlu0 %1234
  %v1237 = vsel %vm322, %v1235, 0
  %1239 = vmatprep.subr.bf16.mxu0 0
  %1240 = vmatpush1.bf16.msra.mxu0 %v427
  %1241 = vmatprep.subr.bf16.mxu0 0
  %1242 = vmatpush1.bf16.msra.mxu0 %v428
  %1243 = vmatprep.subr.bf16.mxu0 0
  %1244 = vmatpush1.bf16.msra.mxu0 0
  %1245 = vmatprep.subr.bf16.mxu0 0
  %1246 = vmatpush1.bf16.msra.mxu0 0
  %1247 = vmatprep.subr.bf16.mxu0 0
  %1248 = vmatpush1.bf16.msra.mxu0 0
  %1249 = vmatprep.subr.bf16.mxu0 0
  %1250 = vmatpush1.bf16.msra.mxu0 0
  %1251 = vmatprep.subr.bf16.mxu0 0
  %1252 = vmatpush1.bf16.msra.mxu0 0
  %1253 = vmatprep.subr.bf16.mxu0 0
  %1254 = vmatpush1.bf16.msra.mxu0 0
  %1255 = vmatprep.subr.bf16.mxu0 0
  %1256 = vmatpush1.bf16.msra.mxu0 0
  %1257 = vmatprep.subr.bf16.mxu0 0
  %1258 = vmatpush1.bf16.msra.mxu0 0
  %1259 = vmatprep.subr.bf16.mxu0 0
  %1260 = vmatpush1.bf16.msra.mxu0 0
  %1261 = vmatprep.subr.bf16.mxu0 0
  %1262 = vmatpush1.bf16.msra.mxu0 0
  %1263 = vmatprep.subr.bf16.mxu0 0
  %1264 = vmatpush1.bf16.msra.mxu0 0
  %1265 = vmatprep.subr.bf16.mxu0 0
  %1266 = vmatpush1.bf16.msra.mxu0 0
  %1267 = vmatprep.subr.bf16.mxu0 0
  %1268 = vmatpush1.bf16.msra.mxu0 0
  %1269 = vmatprep.subr.bf16.mxu0 0
  %1270 = vmatpush1.bf16.msra.mxu0 0
  %1271 = vmatprep.mubr.bf16.mxu0 0
  %1272 = vmatmul.mubr.bf16.gmra.mrb[0].mxu0 %v1237
  %v1273 = vpop.f32.mrb[0].mxu0
  %v1274 = vadd.f32 0.0, %v1273
  %v1275 = vpop.f32.mrb[0].mxu0
  %v1276 = vpop.f32.mrb[0].mxu0
  %v1277 = vadd.f32 0.0, %v1276
  %v1278 = vpop.f32.mrb[0].mxu0
  %1279 = vdwg.mxu0
  %v1280 = vadd.f32 %v1230, %v1274
  %v1281 = vadd.f32 %v1231, %v1277
  %v1282 = vxor.u32 %v1280, 2147483648
  %v1283 = vxor.u32 %v1281, 2147483648
  %v1284 = vmul.f32 %v1282, 1.442695
  %v1285 = vpow.pop %v1284
  %v1286 = vmul.f32 %v1283, 1.442695
  %v1287 = vpow.pop %v1286
  %v1288 = vadd.f32 %v1285, 1.0
  %v1289 = vadd.f32 %v1287, 1.0
  %v1290 = vrcp.pop %v1288
  %v1291 = vmul.f32 1.0, %v1290
  %v1292 = vrcp.pop %v1289
  %v1293 = vmul.f32 1.0, %v1292
  %v1294 = vtanh.pop %v1280
  %v1295 = vtanh.pop %v1281
  %v1296 = vmul.f32 %v1291, %v1114
  %v1297 = vmul.f32 %v1293, %v1115
  %1300 = vrot.lane.b32.xlu0 %v1294, 64
  %v1301 = vpop.permute.xlu0 %1300
  %1302 = vrot.lane.b32.xlu0 %v1295, 64
  %v1303 = vpop.permute.xlu0 %1302
  %v1306 = vmul.f32 %v1291, %v1301
  %v1307 = vmul.f32 %v1293, %v1303
  %1310 = vrot.lane.b32.xlu0 %v1306, 32
  %v1311 = vpop.permute.xlu0 %1310
  %1312 = vrot.lane.b32.xlu0 %v1307, 32
  %v1313 = vpop.permute.xlu0 %1312
  %v1316 = vadd.f32 %v1296, %v1311
  %v1317 = vadd.f32 %v1297, %v1313
  %v1318 = vtanh.pop %v1316
  %v1319 = vtanh.pop %v1317
  %1322 = vrot.lane.b32.xlu0 %v1318, 64
  %v1323 = vpop.permute.xlu0 %1322
  %1324 = vrot.lane.b32.xlu0 %v1319, 64
  %v1325 = vpop.permute.xlu0 %1324
  %v1328 = vmul.f32 %v1291, %v1323
  %v1329 = vmul.f32 %v1293, %v1325
  %v1330 = vld [vmem:[#allocation2 + $0x50] sm:$0xff]
  %v1331 = vld [vmem:[#allocation2 + $0x28] sm:$0xff]
  %v1332 = vunpack.c.l.bf16 %v1330
  %v1333 = vunpack.c.h.bf16 %v1330
  %v1334 = vpack.c.bf16 %v1229, %v1228
  %1336 = vrot.lane.b32.xlu0 %v1334, 32
  %v1337 = vpop.permute.xlu0 %1336
  %v1339 = vsel %vm322, %v1337, 0
  %1341 = vmatprep.subr.bf16.mxu0 0
  %1342 = vmatpush1.bf16.msra.mxu0 %v318
  %1343 = vmatprep.subr.bf16.mxu0 0
  %1344 = vmatpush1.bf16.msra.mxu0 %v319
  %1345 = vmatprep.subr.bf16.mxu0 0
  %1346 = vmatpush1.bf16.msra.mxu0 0
  %1347 = vmatprep.subr.bf16.mxu0 0
  %1348 = vmatpush1.bf16.msra.mxu0 0
  %1349 = vmatprep.subr.bf16.mxu0 0
  %1350 = vmatpush1.bf16.msra.mxu0 0
  %1351 = vmatprep.subr.bf16.mxu0 0
  %1352 = vmatpush1.bf16.msra.mxu0 0
  %1353 = vmatprep.subr.bf16.mxu0 0
  %1354 = vmatpush1.bf16.msra.mxu0 0
  %1355 = vmatprep.subr.bf16.mxu0 0
  %1356 = vmatpush1.bf16.msra.mxu0 0
  %1357 = vmatprep.subr.bf16.mxu0 0
  %1358 = vmatpush1.bf16.msra.mxu0 0
  %1359 = vmatprep.subr.bf16.mxu0 0
  %1360 = vmatpush1.bf16.msra.mxu0 0
  %1361 = vmatprep.subr.bf16.mxu0 0
  %1362 = vmatpush1.bf16.msra.mxu0 0
  %1363 = vmatprep.subr.bf16.mxu0 0
  %1364 = vmatpush1.bf16.msra.mxu0 0
  %1365 = vmatprep.subr.bf16.mxu0 0
  %1366 = vmatpush1.bf16.msra.mxu0 0
  %1367 = vmatprep.subr.bf16.mxu0 0
  %1368 = vmatpush1.bf16.msra.mxu0 0
  %1369 = vmatprep.subr.bf16.mxu0 0
  %1370 = vmatpush1.bf16.msra.mxu0 0
  %1371 = vmatprep.subr.bf16.mxu0 0
  %1372 = vmatpush1.bf16.msra.mxu0 0
  %1373 = vmatprep.mubr.bf16.mxu0 0
  %1374 = vmatmul.mubr.bf16.gmra.mrb[0].mxu0 %v1339
  %v1375 = vpop.f32.mrb[0].mxu0
  %v1376 = vadd.f32 0.0, %v1375
  %v1377 = vpop.f32.mrb[0].mxu0
  %v1378 = vpop.f32.mrb[0].mxu0
  %v1379 = vadd.f32 0.0, %v1378
  %v1380 = vpop.f32.mrb[0].mxu0
  %1381 = vdwg.mxu0
  %v1382 = vadd.f32 %v1332, %v1376
  %v1383 = vadd.f32 %v1333, %v1379
  %v1384 = vxor.u32 %v1382, 2147483648
  %v1385 = vxor.u32 %v1383, 2147483648
  %v1386 = vmul.f32 %v1384, 1.442695
  %v1387 = vpow.pop %v1386
  %v1388 = vmul.f32 %v1385, 1.442695
  %v1389 = vpow.pop %v1388
  %v1390 = vadd.f32 %v1387, 1.0
  %v1391 = vadd.f32 %v1389, 1.0
  %v1392 = vrcp.pop %v1390
  %v1393 = vmul.f32 1.0, %v1392
  %v1394 = vrcp.pop %v1391
  %v1395 = vmul.f32 1.0, %v1394
  %v1396 = vtanh.pop %v1382
  %v1397 = vtanh.pop %v1383
  %v1398 = vmul.f32 %v1393, %v1216
  %v1399 = vmul.f32 %v1395, %v1217
  %1402 = vrot.lane.b32.xlu0 %v1396, 64
  %v1403 = vpop.permute.xlu0 %1402
  %1404 = vrot.lane.b32.xlu0 %v1397, 64
  %v1405 = vpop.permute.xlu0 %1404
  %v1408 = vmul.f32 %v1393, %v1403
  %v1409 = vmul.f32 %v1395, %v1405
  %1412 = vrot.lane.b32.xlu0 %v1408, 32
  %v1413 = vpop.permute.xlu0 %1412
  %1414 = vrot.lane.b32.xlu0 %v1409, 32
  %v1415 = vpop.permute.xlu0 %1414
  %v1418 = vadd.f32 %v1398, %v1413
  %v1419 = vadd.f32 %v1399, %v1415
  %v1420 = vtanh.pop %v1418
  %v1421 = vtanh.pop %v1419
  %1424 = vrot.lane.b32.xlu0 %v1420, 64
  %v1425 = vpop.permute.xlu0 %1424
  %1426 = vrot.lane.b32.xlu0 %v1421, 64
  %v1427 = vpop.permute.xlu0 %1426
  %v1430 = vmul.f32 %v1393, %v1425
  %v1431 = vmul.f32 %v1395, %v1427
  %v1432 = vunpack.c.l.bf16 %v1331
  %v1433 = vunpack.c.h.bf16 %v1331
  %v1434 = vpack.c.bf16 %v1329, %v1328
  %1436 = vrot.lane.b32.xlu0 %v1434, 32
  %v1437 = vpop.permute.xlu0 %1436
  %v1439 = vsel %vm322, %v1437, 0
  %1441 = vmatprep.subr.bf16.mxu0 0
  %1442 = vmatpush1.bf16.msra.mxu0 %v427
  %1443 = vmatprep.subr.bf16.mxu0 0
  %1444 = vmatpush1.bf16.msra.mxu0 %v428
  %1445 = vmatprep.subr.bf16.mxu0 0
  %1446 = vmatpush1.bf16.msra.mxu0 0
  %1447 = vmatprep.subr.bf16.mxu0 0
  %1448 = vmatpush1.bf16.msra.mxu0 0
  %1449 = vmatprep.subr.bf16.mxu0 0
  %1450 = vmatpush1.bf16.msra.mxu0 0
  %1451 = vmatprep.subr.bf16.mxu0 0
  %1452 = vmatpush1.bf16.msra.mxu0 0
  %1453 = vmatprep.subr.bf16.mxu0 0
  %1454 = vmatpush1.bf16.msra.mxu0 0
  %1455 = vmatprep.subr.bf16.mxu0 0
  %1456 = vmatpush1.bf16.msra.mxu0 0
  %1457 = vmatprep.subr.bf16.mxu0 0
  %1458 = vmatpush1.bf16.msra.mxu0 0
  %1459 = vmatprep.subr.bf16.mxu0 0
  %1460 = vmatpush1.bf16.msra.mxu0 0
  %1461 = vmatprep.subr.bf16.mxu0 0
  %1462 = vmatpush1.bf16.msra.mxu0 0
  %1463 = vmatprep.subr.bf16.mxu0 0
  %1464 = vmatpush1.bf16.msra.mxu0 0
  %1465 = vmatprep.subr.bf16.mxu0 0
  %1466 = vmatpush1.bf16.msra.mxu0 0
  %1467 = vmatprep.subr.bf16.mxu0 0
  %1468 = vmatpush1.bf16.msra.mxu0 0
  %1469 = vmatprep.subr.bf16.mxu0 0
  %1470 = vmatpush1.bf16.msra.mxu0 0
  %1471 = vmatprep.subr.bf16.mxu0 0
  %1472 = vmatpush1.bf16.msra.mxu0 0
  %1473 = vmatprep.mubr.bf16.mxu0 0
  %1474 = vmatmul.mubr.bf16.gmra.mrb[0].mxu0 %v1439
  %v1475 = vpop.f32.mrb[0].mxu0
  %v1476 = vadd.f32 0.0, %v1475
  %v1477 = vpop.f32.mrb[0].mxu0
  %v1478 = vpop.f32.mrb[0].mxu0
  %v1479 = vadd.f32 0.0, %v1478
  %v1480 = vpop.f32.mrb[0].mxu0
  %1481 = vdwg.mxu0
  %v1482 = vadd.f32 %v1432, %v1476
  %v1483 = vadd.f32 %v1433, %v1479
  %v1484 = vxor.u32 %v1482, 2147483648
  %v1485 = vxor.u32 %v1483, 2147483648
  %v1486 = vmul.f32 %v1484, 1.442695
  %v1487 = vpow.pop %v1486
  %v1488 = vmul.f32 %v1485, 1.442695
  %v1489 = vpow.pop %v1488
  %v1490 = vadd.f32 %v1487, 1.0
  %v1491 = vadd.f32 %v1489, 1.0
  %v1492 = vrcp.pop %v1490
  %v1493 = vmul.f32 1.0, %v1492
  %v1494 = vrcp.pop %v1491
  %v1495 = vmul.f32 1.0, %v1494
  %v1496 = vtanh.pop %v1482
  %v1497 = vtanh.pop %v1483
  %v1498 = vmul.f32 %v1493, %v1316
  %v1499 = vmul.f32 %v1495, %v1317
  %1502 = vrot.lane.b32.xlu0 %v1496, 64
  %v1503 = vpop.permute.xlu0 %1502
  %1504 = vrot.lane.b32.xlu0 %v1497, 64
  %v1505 = vpop.permute.xlu0 %1504
  %v1508 = vmul.f32 %v1493, %v1503
  %v1509 = vmul.f32 %v1495, %v1505
  %1512 = vrot.lane.b32.xlu0 %v1508, 32
  %v1513 = vpop.permute.xlu0 %1512
  %1514 = vrot.lane.b32.xlu0 %v1509, 32
  %v1515 = vpop.permute.xlu0 %1514
  %v1518 = vadd.f32 %v1498, %v1513
  %v1519 = vadd.f32 %v1499, %v1515
  %v1520 = vtanh.pop %v1518
  %v1521 = vtanh.pop %v1519
  %1524 = vrot.lane.b32.xlu0 %v1520, 64
  %v1525 = vpop.permute.xlu0 %1524
  %1526 = vrot.lane.b32.xlu0 %v1521, 64
  %v1527 = vpop.permute.xlu0 %1526
  %v1530 = vmul.f32 %v1493, %v1525
  %v1531 = vmul.f32 %v1495, %v1527
  %v1532 = vld [vmem:[#allocation2 + $0x60] sm:$0xff]
  %v1533 = vld [vmem:[#allocation2 + $0x18] sm:$0xff]
  %v1534 = vunpack.c.l.bf16 %v1532
  %v1535 = vunpack.c.h.bf16 %v1532
  %v1536 = vpack.c.bf16 %v1431, %v1430
  %1538 = vrot.lane.b32.xlu0 %v1536, 32
  %v1539 = vpop.permute.xlu0 %1538
  %v1541 = vsel %vm322, %v1539, 0
  %1543 = vmatprep.subr.bf16.mxu0 0
  %1544 = vmatpush1.bf16.msra.mxu0 %v318
  %1545 = vmatprep.subr.bf16.mxu0 0
  %1546 = vmatpush1.bf16.msra.mxu0 %v319
  %1547 = vmatprep.subr.bf16.mxu0 0
  %1548 = vmatpush1.bf16.msra.mxu0 0
  %1549 = vmatprep.subr.bf16.mxu0 0
  %1550 = vmatpush1.bf16.msra.mxu0 0
  %1551 = vmatprep.subr.bf16.mxu0 0
  %1552 = vmatpush1.bf16.msra.mxu0 0
  %1553 = vmatprep.subr.bf16.mxu0 0
  %1554 = vmatpush1.bf16.msra.mxu0 0
  %1555 = vmatprep.subr.bf16.mxu0 0
  %1556 = vmatpush1.bf16.msra.mxu0 0
  %1557 = vmatprep.subr.bf16.mxu0 0
  %1558 = vmatpush1.bf16.msra.mxu0 0
  %1559 = vmatprep.subr.bf16.mxu0 0
  %1560 = vmatpush1.bf16.msra.mxu0 0
  %1561 = vmatprep.subr.bf16.mxu0 0
  %1562 = vmatpush1.bf16.msra.mxu0 0
  %1563 = vmatprep.subr.bf16.mxu0 0
  %1564 = vmatpush1.bf16.msra.mxu0 0
  %1565 = vmatprep.subr.bf16.mxu0 0
  %1566 = vmatpush1.bf16.msra.mxu0 0
  %1567 = vmatprep.subr.bf16.mxu0 0
  %1568 = vmatpush1.bf16.msra.mxu0 0
  %1569 = vmatprep.subr.bf16.mxu0 0
  %1570 = vmatpush1.bf16.msra.mxu0 0
  %1571 = vmatprep.subr.bf16.mxu0 0
  %1572 = vmatpush1.bf16.msra.mxu0 0
  %1573 = vmatprep.subr.bf16.mxu0 0
  %1574 = vmatpush1.bf16.msra.mxu0 0
  %1575 = vmatprep.mubr.bf16.mxu0 0
  %1576 = vmatmul.mubr.bf16.gmra.mrb[0].mxu0 %v1541
  %v1577 = vpop.f32.mrb[0].mxu0
  %v1578 = vadd.f32 0.0, %v1577
  %v1579 = vpop.f32.mrb[0].mxu0
  %v1580 = vpop.f32.mrb[0].mxu0
  %v1581 = vadd.f32 0.0, %v1580
  %v1582 = vpop.f32.mrb[0].mxu0
  %1583 = vdwg.mxu0
  %v1584 = vadd.f32 %v1534, %v1578
  %v1585 = vadd.f32 %v1535, %v1581
  %v1586 = vxor.u32 %v1584, 2147483648
  %v1587 = vxor.u32 %v1585, 2147483648
  %v1588 = vmul.f32 %v1586, 1.442695
  %v1589 = vpow.pop %v1588
  %v1590 = vmul.f32 %v1587, 1.442695
  %v1591 = vpow.pop %v1590
  %v1592 = vadd.f32 %v1589, 1.0
  %v1593 = vadd.f32 %v1591, 1.0
  %v1594 = vrcp.pop %v1592
  %v1595 = vmul.f32 1.0, %v1594
  %v1596 = vrcp.pop %v1593
  %v1597 = vmul.f32 1.0, %v1596
  %v1598 = vtanh.pop %v1584
  %v1599 = vtanh.pop %v1585
  %v1600 = vmul.f32 %v1595, %v1418
  %v1601 = vmul.f32 %v1597, %v1419
  %1604 = vrot.lane.b32.xlu0 %v1598, 64
  %v1605 = vpop.permute.xlu0 %1604
  %1606 = vrot.lane.b32.xlu0 %v1599, 64
  %v1607 = vpop.permute.xlu0 %1606
  %v1610 = vmul.f32 %v1595, %v1605
  %v1611 = vmul.f32 %v1597, %v1607
  %1614 = vrot.lane.b32.xlu0 %v1610, 32
  %v1615 = vpop.permute.xlu0 %1614
  %1616 = vrot.lane.b32.xlu0 %v1611, 32
  %v1617 = vpop.permute.xlu0 %1616
  %v1620 = vadd.f32 %v1600, %v1615
  %v1621 = vadd.f32 %v1601, %v1617
  %v1622 = vtanh.pop %v1620
  %v1623 = vtanh.pop %v1621
  %1626 = vrot.lane.b32.xlu0 %v1622, 64
  %v1627 = vpop.permute.xlu0 %1626
  %1628 = vrot.lane.b32.xlu0 %v1623, 64
  %v1629 = vpop.permute.xlu0 %1628
  %v1632 = vmul.f32 %v1595, %v1627
  %v1633 = vmul.f32 %v1597, %v1629
  %v1634 = vunpack.c.l.bf16 %v1533
  %v1635 = vunpack.c.h.bf16 %v1533
  %v1636 = vpack.c.bf16 %v1531, %v1530
  %1638 = vrot.lane.b32.xlu0 %v1636, 32
  %v1639 = vpop.permute.xlu0 %1638
  %v1641 = vsel %vm322, %v1639, 0
  %1643 = vmatprep.subr.bf16.mxu0 0
  %1644 = vmatpush1.bf16.msra.mxu0 %v427
  %1645 = vmatprep.subr.bf16.mxu0 0
  %1646 = vmatpush1.bf16.msra.mxu0 %v428
  %1647 = vmatprep.subr.bf16.mxu0 0
  %1648 = vmatpush1.bf16.msra.mxu0 0
  %1649 = vmatprep.subr.bf16.mxu0 0
  %1650 = vmatpush1.bf16.msra.mxu0 0
  %1651 = vmatprep.subr.bf16.mxu0 0
  %1652 = vmatpush1.bf16.msra.mxu0 0
  %1653 = vmatprep.subr.bf16.mxu0 0
  %1654 = vmatpush1.bf16.msra.mxu0 0
  %1655 = vmatprep.subr.bf16.mxu0 0
  %1656 = vmatpush1.bf16.msra.mxu0 0
  %1657 = vmatprep.subr.bf16.mxu0 0
  %1658 = vmatpush1.bf16.msra.mxu0 0
  %1659 = vmatprep.subr.bf16.mxu0 0
  %1660 = vmatpush1.bf16.msra.mxu0 0
  %1661 = vmatprep.subr.bf16.mxu0 0
  %1662 = vmatpush1.bf16.msra.mxu0 0
  %1663 = vmatprep.subr.bf16.mxu0 0
  %1664 = vmatpush1.bf16.msra.mxu0 0
  %1665 = vmatprep.subr.bf16.mxu0 0
  %1666 = vmatpush1.bf16.msra.mxu0 0
  %1667 = vmatprep.subr.bf16.mxu0 0
  %1668 = vmatpush1.bf16.msra.mxu0 0
  %1669 = vmatprep.subr.bf16.mxu0 0
  %1670 = vmatpush1.bf16.msra.mxu0 0
  %1671 = vmatprep.subr.bf16.mxu0 0
  %1672 = vmatpush1.bf16.msra.mxu0 0
  %1673 = vmatprep.subr.bf16.mxu0 0
  %1674 = vmatpush1.bf16.msra.mxu0 0
  %1675 = vmatprep.mubr.bf16.mxu0 0
  %1676 = vmatmul.mubr.bf16.gmra.mrb[0].mxu0 %v1641
  %v1677 = vpop.f32.mrb[0].mxu0
  %v1678 = vadd.f32 0.0, %v1677
  %v1679 = vpop.f32.mrb[0].mxu0
  %v1680 = vpop.f32.mrb[0].mxu0
  %v1681 = vadd.f32 0.0, %v1680
  %v1682 = vpop.f32.mrb[0].mxu0
  %1683 = vdwg.mxu0
  %v1684 = vadd.f32 %v1634, %v1678
  %v1685 = vadd.f32 %v1635, %v1681
  %v1686 = vxor.u32 %v1684, 2147483648
  %v1687 = vxor.u32 %v1685, 2147483648
  %v1688 = vmul.f32 %v1686, 1.442695
  %v1689 = vpow.pop %v1688
  %v1690 = vmul.f32 %v1687, 1.442695
  %v1691 = vpow.pop %v1690
  %v1692 = vadd.f32 %v1689, 1.0
  %v1693 = vadd.f32 %v1691, 1.0
  %v1694 = vrcp.pop %v1692
  %v1695 = vmul.f32 1.0, %v1694
  %v1696 = vrcp.pop %v1693
  %v1697 = vmul.f32 1.0, %v1696
  %v1698 = vtanh.pop %v1684
  %v1699 = vtanh.pop %v1685
  %v1700 = vmul.f32 %v1695, %v1518
  %v1701 = vmul.f32 %v1697, %v1519
  %1704 = vrot.lane.b32.xlu0 %v1698, 64
  %v1705 = vpop.permute.xlu0 %1704
  %1706 = vrot.lane.b32.xlu0 %v1699, 64
  %v1707 = vpop.permute.xlu0 %1706
  %v1710 = vmul.f32 %v1695, %v1705
  %v1711 = vmul.f32 %v1697, %v1707
  %1714 = vrot.lane.b32.xlu0 %v1710, 32
  %v1715 = vpop.permute.xlu0 %1714
  %1716 = vrot.lane.b32.xlu0 %v1711, 32
  %v1717 = vpop.permute.xlu0 %1716
  %v1720 = vadd.f32 %v1700, %v1715
  %v1721 = vadd.f32 %v1701, %v1717
  %v1722 = vtanh.pop %v1720
  %v1723 = vtanh.pop %v1721
  %1726 = vrot.lane.b32.xlu0 %v1722, 64
  %v1727 = vpop.permute.xlu0 %1726
  %1728 = vrot.lane.b32.xlu0 %v1723, 64
  %v1729 = vpop.permute.xlu0 %1728
  %v1732 = vmul.f32 %v1695, %v1727
  %v1733 = vmul.f32 %v1697, %v1729
  %v1734 = vld [vmem:[#allocation2 + $0x70] sm:$0xff]
  %v1735 = vld [vmem:[#allocation2 + $0x8] sm:$0xff]
  %v1736 = vunpack.c.l.bf16 %v1734
  %v1737 = vunpack.c.h.bf16 %v1734
  %v1738 = vpack.c.bf16 %v1633, %v1632
  %1740 = vrot.lane.b32.xlu0 %v1738, 32
  %v1741 = vpop.permute.xlu0 %1740
  %v1743 = vsel %vm322, %v1741, 0
  %1745 = vmatprep.subr.bf16.mxu0 0
  %1746 = vmatpush1.bf16.msra.mxu0 %v318
  %1747 = vmatprep.subr.bf16.mxu0 0
  %1748 = vmatpush1.bf16.msra.mxu0 %v319
  %1749 = vmatprep.subr.bf16.mxu0 0
  %1750 = vmatpush1.bf16.msra.mxu0 0
  %1751 = vmatprep.subr.bf16.mxu0 0
  %1752 = vmatpush1.bf16.msra.mxu0 0
  %1753 = vmatprep.subr.bf16.mxu0 0
  %1754 = vmatpush1.bf16.msra.mxu0 0
  %1755 = vmatprep.subr.bf16.mxu0 0
  %1756 = vmatpush1.bf16.msra.mxu0 0
  %1757 = vmatprep.subr.bf16.mxu0 0
  %1758 = vmatpush1.bf16.msra.mxu0 0
  %1759 = vmatprep.subr.bf16.mxu0 0
  %1760 = vmatpush1.bf16.msra.mxu0 0
  %1761 = vmatprep.subr.bf16.mxu0 0
  %1762 = vmatpush1.bf16.msra.mxu0 0
  %1763 = vmatprep.subr.bf16.mxu0 0
  %1764 = vmatpush1.bf16.msra.mxu0 0
  %1765 = vmatprep.subr.bf16.mxu0 0
  %1766 = vmatpush1.bf16.msra.mxu0 0
  %1767 = vmatprep.subr.bf16.mxu0 0
  %1768 = vmatpush1.bf16.msra.mxu0 0
  %1769 = vmatprep.subr.bf16.mxu0 0
  %1770 = vmatpush1.bf16.msra.mxu0 0
  %1771 = vmatprep.subr.bf16.mxu0 0
  %1772 = vmatpush1.bf16.msra.mxu0 0
  %1773 = vmatprep.subr.bf16.mxu0 0
  %1774 = vmatpush1.bf16.msra.mxu0 0
  %1775 = vmatprep.subr.bf16.mxu0 0
  %1776 = vmatpush1.bf16.msra.mxu0 0
  %1777 = vmatprep.mubr.bf16.mxu0 0
  %1778 = vmatmul.mubr.bf16.gmra.mrb[0].mxu0 %v1743
  %v1779 = vpop.f32.mrb[0].mxu0
  %v1780 = vadd.f32 0.0, %v1779
  %v1781 = vpop.f32.mrb[0].mxu0
  %v1782 = vpop.f32.mrb[0].mxu0
  %v1783 = vadd.f32 0.0, %v1782
  %v1784 = vpop.f32.mrb[0].mxu0
  %1785 = vdwg.mxu0
  %v1786 = vadd.f32 %v1736, %v1780
  %v1787 = vadd.f32 %v1737, %v1783
  %v1788 = vxor.u32 %v1786, 2147483648
  %v1789 = vxor.u32 %v1787, 2147483648
  %v1790 = vmul.f32 %v1788, 1.442695
  %v1791 = vpow.pop %v1790
  %v1792 = vmul.f32 %v1789, 1.442695
  %v1793 = vpow.pop %v1792
  %v1794 = vadd.f32 %v1791, 1.0
  %v1795 = vadd.f32 %v1793, 1.0
  %v1796 = vrcp.pop %v1794
  %v1797 = vmul.f32 1.0, %v1796
  %v1798 = vrcp.pop %v1795
  %v1799 = vmul.f32 1.0, %v1798
  %v1800 = vtanh.pop %v1786
  %v1801 = vtanh.pop %v1787
  %v1802 = vmul.f32 %v1797, %v1620
  %v1803 = vmul.f32 %v1799, %v1621
  %1806 = vrot.lane.b32.xlu0 %v1800, 64
  %v1807 = vpop.permute.xlu0 %1806
  %1808 = vrot.lane.b32.xlu0 %v1801, 64
  %v1809 = vpop.permute.xlu0 %1808
  %v1812 = vmul.f32 %v1797, %v1807
  %v1813 = vmul.f32 %v1799, %v1809
  %1816 = vrot.lane.b32.xlu0 %v1812, 32
  %v1817 = vpop.permute.xlu0 %1816
  %1818 = vrot.lane.b32.xlu0 %v1813, 32
  %v1819 = vpop.permute.xlu0 %1818
  %v1822 = vadd.f32 %v1802, %v1817
  %v1823 = vadd.f32 %v1803, %v1819
  %v1824 = vtanh.pop %v1822
  %v1825 = vtanh.pop %v1823
  %1828 = vrot.lane.b32.xlu0 %v1824, 64
  %v1829 = vpop.permute.xlu0 %1828
  %1830 = vrot.lane.b32.xlu0 %v1825, 64
  %v1831 = vpop.permute.xlu0 %1830
  %v1834 = vmul.f32 %v1797, %v1829
  %v1835 = vmul.f32 %v1799, %v1831
  %v1836 = vunpack.c.l.bf16 %v1735
  %v1837 = vunpack.c.h.bf16 %v1735
  %v1838 = vpack.c.bf16 %v1733, %v1732
  %1840 = vrot.lane.b32.xlu0 %v1838, 32
  %v1841 = vpop.permute.xlu0 %1840
  %v1843 = vsel %vm322, %v1841, 0
  %1845 = vmatprep.subr.bf16.mxu0 0
  %1846 = vmatpush1.bf16.msra.mxu0 %v427
  %1847 = vmatprep.subr.bf16.mxu0 0
  %1848 = vmatpush1.bf16.msra.mxu0 %v428
  %1849 = vmatprep.subr.bf16.mxu0 0
  %1850 = vmatpush1.bf16.msra.mxu0 0
  %1851 = vmatprep.subr.bf16.mxu0 0
  %1852 = vmatpush1.bf16.msra.mxu0 0
  %1853 = vmatprep.subr.bf16.mxu0 0
  %1854 = vmatpush1.bf16.msra.mxu0 0
  %1855 = vmatprep.subr.bf16.mxu0 0
  %1856 = vmatpush1.bf16.msra.mxu0 0
  %1857 = vmatprep.subr.bf16.mxu0 0
  %1858 = vmatpush1.bf16.msra.mxu0 0
  %1859 = vmatprep.subr.bf16.mxu0 0
  %1860 = vmatpush1.bf16.msra.mxu0 0
  %1861 = vmatprep.subr.bf16.mxu0 0
  %1862 = vmatpush1.bf16.msra.mxu0 0
  %1863 = vmatprep.subr.bf16.mxu0 0
  %1864 = vmatpush1.bf16.msra.mxu0 0
  %1865 = vmatprep.subr.bf16.mxu0 0
  %1866 = vmatpush1.bf16.msra.mxu0 0
  %1867 = vmatprep.subr.bf16.mxu0 0
  %1868 = vmatpush1.bf16.msra.mxu0 0
  %1869 = vmatprep.subr.bf16.mxu0 0
  %1870 = vmatpush1.bf16.msra.mxu0 0
  %1871 = vmatprep.subr.bf16.mxu0 0
  %1872 = vmatpush1.bf16.msra.mxu0 0
  %1873 = vmatprep.subr.bf16.mxu0 0
  %1874 = vmatpush1.bf16.msra.mxu0 0
  %1875 = vmatprep.subr.bf16.mxu0 0
  %1876 = vmatpush1.bf16.msra.mxu0 0
  %1877 = vmatprep.mubr.bf16.mxu0 0
  %1878 = vmatmul.mubr.bf16.gmra.mrb[0].mxu0 %v1843
  %v1879 = vpop.f32.mrb[0].mxu0
  %v1880 = vadd.f32 0.0, %v1879
  %v1881 = vpop.f32.mrb[0].mxu0
  %v1882 = vpop.f32.mrb[0].mxu0
  %v1883 = vadd.f32 0.0, %v1882
  %v1884 = vpop.f32.mrb[0].mxu0
  %1885 = vdwg.mxu0
  %v1886 = vadd.f32 %v1836, %v1880
  %v1887 = vadd.f32 %v1837, %v1883
  %v1888 = vxor.u32 %v1886, 2147483648
  %v1889 = vxor.u32 %v1887, 2147483648
  %v1890 = vmul.f32 %v1888, 1.442695
  %v1891 = vpow.pop %v1890
  %v1892 = vmul.f32 %v1889, 1.442695
  %v1893 = vpow.pop %v1892
  %v1894 = vadd.f32 %v1891, 1.0
  %v1895 = vadd.f32 %v1893, 1.0
  %v1896 = vrcp.pop %v1894
  %v1897 = vmul.f32 1.0, %v1896
  %v1898 = vrcp.pop %v1895
  %v1899 = vmul.f32 1.0, %v1898
  %v1900 = vtanh.pop %v1886
  %v1901 = vtanh.pop %v1887
  %v1902 = vmul.f32 %v1897, %v1720
  %v1903 = vmul.f32 %v1899, %v1721
  %1906 = vrot.lane.b32.xlu0 %v1900, 64
  %v1907 = vpop.permute.xlu0 %1906
  %1908 = vrot.lane.b32.xlu0 %v1901, 64
  %v1909 = vpop.permute.xlu0 %1908
  %v1912 = vmul.f32 %v1897, %v1907
  %v1913 = vmul.f32 %v1899, %v1909
  %1916 = vrot.lane.b32.xlu0 %v1912, 32
  %v1917 = vpop.permute.xlu0 %1916
  %1918 = vrot.lane.b32.xlu0 %v1913, 32
  %v1919 = vpop.permute.xlu0 %1918
  %v1922 = vadd.f32 %v1902, %v1917
  %v1923 = vadd.f32 %v1903, %v1919
  %v1924 = vtanh.pop %v1922
  %v1925 = vtanh.pop %v1923
  %1928 = vrot.lane.b32.xlu0 %v1924, 64
  %v1929 = vpop.permute.xlu0 %1928
  %1930 = vrot.lane.b32.xlu0 %v1925, 64
  %v1931 = vpop.permute.xlu0 %1930
  %v1934 = vmul.f32 %v1897, %v1929
  %v1935 = vmul.f32 %v1899, %v1931
  %1938 = vrot.lane.b32.xlu0 %v1834, 32
  %v1939 = vpop.permute.xlu0 %1938
  %1940 = vrot.lane.b32.xlu0 %v1835, 32
  %v1941 = vpop.permute.xlu0 %1940
  %1946 = vrot.lane.b32.xlu0 %v1934, 64
  %v1947 = vpop.permute.xlu0 %1946
  %1948 = vrot.lane.b32.xlu0 %v1935, 64
  %v1949 = vpop.permute.xlu0 %1948
  %v1952 = vsel %vm322, %v1939, %v1947
  %v1953 = vsel %vm322, %v1941, %v1949
  %v1954 = vpack.c.bf16 %v1953, %v1952
  %v1955 = vld [vmem:[%s5] sm:$0xf]
  %v1956 = vld [vmem:[%s5 + $0x4] sm:$0xf]
  %v1957 = vld [vmem:[%s5 + $0x8] sm:$0xf]
  %v1958 = vld [vmem:[%s5 + $0xc] sm:$0xf]
  %v1959 = vld [vmem:[%s5 + $0x10] sm:$0xf]
  %v1960 = vld [vmem:[%s5 + $0x14] sm:$0xf]
  %v1961 = vld [vmem:[%s5 + $0x18] sm:$0xf]
  %v1962 = vld [vmem:[%s5 + $0x1c] sm:$0xf]
  %s1963 = scalar_lea.vmem %s5, 32
  %v1964 = vld [vmem:[%s1963] sm:$0xf]
  %v1965 = vld [vmem:[%s1963 + $0x4] sm:$0xf]
  %v1966 = vld [vmem:[%s1963 + $0x8] sm:$0xf]
  %v1967 = vld [vmem:[%s1963 + $0xc] sm:$0xf]
  %v1968 = vld [vmem:[%s1963 + $0x10] sm:$0xf]
  %v1969 = vld [vmem:[%s1963 + $0x14] sm:$0xf]
  %v1970 = vld [vmem:[%s1963 + $0x18] sm:$0xf]
  %v1971 = vld [vmem:[%s1963 + $0x1c] sm:$0xf]
  %v1973 = vrot.slane %v1954, 1
  %v1982 = vunpack.c.l.b16 %v1964
  %v1983 = vunpack.c.l.b16 %v1965
  %v1984 = vunpack.c.l.b16 %v1966
  %v1985 = vunpack.c.l.b16 %v1967
  %v1986 = vunpack.c.l.b16 %v1968
  %v1987 = vunpack.c.l.b16 %v1969
  %v1988 = vunpack.c.l.b16 %v1970
  %v1989 = vunpack.c.l.b16 %v1971
  %v1990 = vpack.c.b16 %v1983, %v1982
  %v1991 = vpack.c.b16 %v1985, %v1984
  %v1992 = vpack.c.b16 %v1987, %v1986
  %v1993 = vpack.c.b16 %v1989, %v1988
  %vm1998 = vcmask 523264
  %v2000 = vsel %vm1998, %v1973, 0
  %2002 = vmatprep.subr.bf16.mxu0 0
  %2003 = vmatpush1.bf16.msra.mxu0 %v1990
  %2004 = vmatprep.subr.bf16.mxu0 0
  %2005 = vmatpush1.bf16.msra.mxu0 %v1991
  %2006 = vmatprep.subr.bf16.mxu0 0
  %2007 = vmatpush1.bf16.msra.mxu0 %v1992
  %2008 = vmatprep.subr.bf16.mxu0 0
  %2009 = vmatpush1.bf16.msra.mxu0 %v1993
  %2010 = vmatprep.subr.bf16.mxu0 0
  %2011 = vmatpush1.bf16.msra.mxu0 0
  %2012 = vmatprep.subr.bf16.mxu0 0
  %2013 = vmatpush1.bf16.msra.mxu0 0
  %2014 = vmatprep.subr.bf16.mxu0 0
  %2015 = vmatpush1.bf16.msra.mxu0 0
  %2016 = vmatprep.subr.bf16.mxu0 0
  %2017 = vmatpush1.bf16.msra.mxu0 0
  %2018 = vmatprep.subr.bf16.mxu0 0
  %2019 = vmatpush1.bf16.msra.mxu0 0
  %2020 = vmatprep.subr.bf16.mxu0 0
  %2021 = vmatpush1.bf16.msra.mxu0 0
  %2022 = vmatprep.subr.bf16.mxu0 0
  %2023 = vmatpush1.bf16.msra.mxu0 0
  %2024 = vmatprep.subr.bf16.mxu0 0
  %2025 = vmatpush1.bf16.msra.mxu0 0
  %2026 = vmatprep.subr.bf16.mxu0 0
  %2027 = vmatpush1.bf16.msra.mxu0 0
  %2028 = vmatprep.subr.bf16.mxu0 0
  %2029 = vmatpush1.bf16.msra.mxu0 0
  %2030 = vmatprep.subr.bf16.mxu0 0
  %2031 = vmatpush1.bf16.msra.mxu0 0
  %2032 = vmatprep.subr.bf16.mxu0 0
  %2033 = vmatpush1.bf16.msra.mxu0 0
  %2034 = vmatprep.mubr.bf16.mxu0 0
  %2035 = vmatmul.mubr.bf16.gmra.mrb[0].mxu0 %v2000
  %v2036 = vpop.f32.mrb[0].mxu0
  %v2037 = vadd.f32 0.0, %v2036
  %v2038 = vpop.f32.mrb[0].mxu0
  %v2039 = vpop.f32.mrb[0].mxu0
  %v2040 = vpop.f32.mrb[0].mxu0
  %2041 = vdwg.mxu0
  %v2050 = vunpack.c.l.b16 %v1955
  %v2051 = vunpack.c.l.b16 %v1956
  %v2052 = vunpack.c.l.b16 %v1957
  %v2053 = vunpack.c.l.b16 %v1958
  %v2054 = vunpack.c.l.b16 %v1959
  %v2055 = vunpack.c.l.b16 %v1960
  %v2056 = vunpack.c.l.b16 %v1961
  %v2057 = vunpack.c.l.b16 %v1962
  %v2058 = vpack.c.b16 %v2051, %v2050
  %v2059 = vpack.c.b16 %v2053, %v2052
  %v2060 = vpack.c.b16 %v2055, %v2054
  %v2061 = vpack.c.b16 %v2057, %v2056
  %v2067 = vsel %vm1998, %v1954, 0
  %2069 = vmatprep.subr.bf16.mxu0 0
  %2070 = vmatpush1.bf16.msra.mxu0 %v2058
  %2071 = vmatprep.subr.bf16.mxu0 0
  %2072 = vmatpush1.bf16.msra.mxu0 %v2059
  %2073 = vmatprep.subr.bf16.mxu0 0
  %2074 = vmatpush1.bf16.msra.mxu0 %v2060
  %2075 = vmatprep.subr.bf16.mxu0 0
  %2076 = vmatpush1.bf16.msra.mxu0 %v2061
  %2077 = vmatprep.subr.bf16.mxu0 0
  %2078 = vmatpush1.bf16.msra.mxu0 0
  %2079 = vmatprep.subr.bf16.mxu0 0
  %2080 = vmatpush1.bf16.msra.mxu0 0
  %2081 = vmatprep.subr.bf16.mxu0 0
  %2082 = vmatpush1.bf16.msra.mxu0 0
  %2083 = vmatprep.subr.bf16.mxu0 0
  %2084 = vmatpush1.bf16.msra.mxu0 0
  %2085 = vmatprep.subr.bf16.mxu0 0
  %2086 = vmatpush1.bf16.msra.mxu0 0
  %2087 = vmatprep.subr.bf16.mxu0 0
  %2088 = vmatpush1.bf16.msra.mxu0 0
  %2089 = vmatprep.subr.bf16.mxu0 0
  %2090 = vmatpush1.bf16.msra.mxu0 0
  %2091 = vmatprep.subr.bf16.mxu0 0
  %2092 = vmatpush1.bf16.msra.mxu0 0
  %2093 = vmatprep.subr.bf16.mxu0 0
  %2094 = vmatpush1.bf16.msra.mxu0 0
  %2095 = vmatprep.subr.bf16.mxu0 0
  %2096 = vmatpush1.bf16.msra.mxu0 0
  %2097 = vmatprep.subr.bf16.mxu0 0
  %2098 = vmatpush1.bf16.msra.mxu0 0
  %2099 = vmatprep.subr.bf16.mxu0 0
  %2100 = vmatpush1.bf16.msra.mxu0 0
  %2101 = vmatprep.mubr.bf16.mxu0 0
  %2102 = vmatmul.mubr.bf16.gmra.mrb[0].mxu0 %v2067
  %v2103 = vpop.f32.mrb[0].mxu0
  %v2104 = vadd.f32 %v2037, %v2103
  %v2105 = vpop.f32.mrb[0].mxu0
  %v2106 = vpop.f32.mrb[0].mxu0
  %v2107 = vpop.f32.mrb[0].mxu0
  %2108 = vdwg.mxu0
  %s2109 = scalar_lea.vmem %s5, 64
  %v2110 = vld [vmem:[%s2109] sm:$0xf]
  %v2111 = vld [vmem:[%s2109 + $0x4] sm:$0xf]
  %v2112 = vld [vmem:[%s2109 + $0x8] sm:$0xf]
  %v2113 = vld [vmem:[%s2109 + $0xc] sm:$0xf]
  %v2114 = vld [vmem:[%s2109 + $0x10] sm:$0xf]
  %v2115 = vld [vmem:[%s2109 + $0x14] sm:$0xf]
  %v2116 = vld [vmem:[%s2109 + $0x18] sm:$0xf]
  %v2117 = vld [vmem:[%s2109 + $0x1c] sm:$0xf]
  %v2118 = vrot.slane %v1954, 2
  %v2127 = vunpack.c.l.b16 %v2110
  %v2128 = vunpack.c.l.b16 %v2111
  %v2129 = vunpack.c.l.b16 %v2112
  %v2130 = vunpack.c.l.b16 %v2113
  %v2131 = vunpack.c.l.b16 %v2114
  %v2132 = vunpack.c.l.b16 %v2115
  %v2133 = vunpack.c.l.b16 %v2116
  %v2134 = vunpack.c.l.b16 %v2117
  %v2135 = vpack.c.b16 %v2128, %v2127
  %v2136 = vpack.c.b16 %v2130, %v2129
  %v2137 = vpack.c.b16 %v2132, %v2131
  %v2138 = vpack.c.b16 %v2134, %v2133
  %v2144 = vsel %vm1998, %v2118, 0
  %2146 = vmatprep.subr.bf16.mxu0 0
  %2147 = vmatpush1.bf16.msra.mxu0 %v2135
  %2148 = vmatprep.subr.bf16.mxu0 0
  %2149 = vmatpush1.bf16.msra.mxu0 %v2136
  %2150 = vmatprep.subr.bf16.mxu0 0
  %2151 = vmatpush1.bf16.msra.mxu0 %v2137
  %2152 = vmatprep.subr.bf16.mxu0 0
  %2153 = vmatpush1.bf16.msra.mxu0 %v2138
  %2154 = vmatprep.subr.bf16.mxu0 0
  %2155 = vmatpush1.bf16.msra.mxu0 0
  %2156 = vmatprep.subr.bf16.mxu0 0
  %2157 = vmatpush1.bf16.msra.mxu0 0
  %2158 = vmatprep.subr.bf16.mxu0 0
  %2159 = vmatpush1.bf16.msra.mxu0 0
  %2160 = vmatprep.subr.bf16.mxu0 0
  %2161 = vmatpush1.bf16.msra.mxu0 0
  %2162 = vmatprep.subr.bf16.mxu0 0
  %2163 = vmatpush1.bf16.msra.mxu0 0
  %2164 = vmatprep.subr.bf16.mxu0 0
  %2165 = vmatpush1.bf16.msra.mxu0 0
  %2166 = vmatprep.subr.bf16.mxu0 0
  %2167 = vmatpush1.bf16.msra.mxu0 0
  %2168 = vmatprep.subr.bf16.mxu0 0
  %2169 = vmatpush1.bf16.msra.mxu0 0
  %2170 = vmatprep.subr.bf16.mxu0 0
  %2171 = vmatpush1.bf16.msra.mxu0 0
  %2172 = vmatprep.subr.bf16.mxu0 0
  %2173 = vmatpush1.bf16.msra.mxu0 0
  %2174 = vmatprep.subr.bf16.mxu0 0
  %2175 = vmatpush1.bf16.msra.mxu0 0
  %2176 = vmatprep.subr.bf16.mxu0 0
  %2177 = vmatpush1.bf16.msra.mxu0 0
  %2178 = vmatprep.mubr.bf16.mxu0 0
  %2179 = vmatmul.mubr.bf16.gmra.mrb[0].mxu0 %v2144
  %v2180 = vpop.f32.mrb[0].mxu0
  %v2181 = vadd.f32 0.0, %v2180
  %v2182 = vpop.f32.mrb[0].mxu0
  %v2183 = vpop.f32.mrb[0].mxu0
  %v2184 = vpop.f32.mrb[0].mxu0
  %2185 = vdwg.mxu0
  %v2186 = vadd.f32 %v2104, %v2181
  %s2187 = scalar_lea.vmem %s5, 96
  %v2188 = vld [vmem:[%s2187] sm:$0xf]
  %v2189 = vld [vmem:[%s2187 + $0x4] sm:$0xf]
  %v2190 = vld [vmem:[%s2187 + $0x8] sm:$0xf]
  %v2191 = vld [vmem:[%s2187 + $0xc] sm:$0xf]
  %v2192 = vld [vmem:[%s2187 + $0x10] sm:$0xf]
  %v2193 = vld [vmem:[%s2187 + $0x14] sm:$0xf]
  %v2194 = vld [vmem:[%s2187 + $0x18] sm:$0xf]
  %v2195 = vld [vmem:[%s2187 + $0x1c] sm:$0xf]
  %v2196 = vrot.slane %v1954, 3
  %v2205 = vunpack.c.l.b16 %v2188
  %v2206 = vunpack.c.l.b16 %v2189
  %v2207 = vunpack.c.l.b16 %v2190
  %v2208 = vunpack.c.l.b16 %v2191
  %v2209 = vunpack.c.l.b16 %v2192
  %v2210 = vunpack.c.l.b16 %v2193
  %v2211 = vunpack.c.l.b16 %v2194
  %v2212 = vunpack.c.l.b16 %v2195
  %v2213 = vpack.c.b16 %v2206, %v2205
  %v2214 = vpack.c.b16 %v2208, %v2207
  %v2215 = vpack.c.b16 %v2210, %v2209
  %v2216 = vpack.c.b16 %v2212, %v2211
  %v2222 = vsel %vm1998, %v2196, 0
  %2224 = vmatprep.subr.bf16.mxu0 0
  %2225 = vmatpush1.bf16.msra.mxu0 %v2213
  %2226 = vmatprep.subr.bf16.mxu0 0
  %2227 = vmatpush1.bf16.msra.mxu0 %v2214
  %2228 = vmatprep.subr.bf16.mxu0 0
  %2229 = vmatpush1.bf16.msra.mxu0 %v2215
  %2230 = vmatprep.subr.bf16.mxu0 0
  %2231 = vmatpush1.bf16.msra.mxu0 %v2216
  %2232 = vmatprep.subr.bf16.mxu0 0
  %2233 = vmatpush1.bf16.msra.mxu0 0
  %2234 = vmatprep.subr.bf16.mxu0 0
  %2235 = vmatpush1.bf16.msra.mxu0 0
  %2236 = vmatprep.subr.bf16.mxu0 0
  %2237 = vmatpush1.bf16.msra.mxu0 0
  %2238 = vmatprep.subr.bf16.mxu0 0
  %2239 = vmatpush1.bf16.msra.mxu0 0
  %2240 = vmatprep.subr.bf16.mxu0 0
  %2241 = vmatpush1.bf16.msra.mxu0 0
  %2242 = vmatprep.subr.bf16.mxu0 0
  %2243 = vmatpush1.bf16.msra.mxu0 0
  %2244 = vmatprep.subr.bf16.mxu0 0
  %2245 = vmatpush1.bf16.msra.mxu0 0
  %2246 = vmatprep.subr.bf16.mxu0 0
  %2247 = vmatpush1.bf16.msra.mxu0 0
  %2248 = vmatprep.subr.bf16.mxu0 0
  %2249 = vmatpush1.bf16.msra.mxu0 0
  %2250 = vmatprep.subr.bf16.mxu0 0
  %2251 = vmatpush1.bf16.msra.mxu0 0
  %2252 = vmatprep.subr.bf16.mxu0 0
  %2253 = vmatpush1.bf16.msra.mxu0 0
  %2254 = vmatprep.subr.bf16.mxu0 0
  %2255 = vmatpush1.bf16.msra.mxu0 0
  %2256 = vmatprep.mubr.bf16.mxu0 0
  %2257 = vmatmul.mubr.bf16.gmra.mrb[0].mxu0 %v2222
  %v2258 = vpop.f32.mrb[0].mxu0
  %v2259 = vadd.f32 0.0, %v2258
  %v2260 = vpop.f32.mrb[0].mxu0
  %v2261 = vpop.f32.mrb[0].mxu0
  %v2262 = vpop.f32.mrb[0].mxu0
  %2263 = vdwg.mxu0
  %v2264 = vadd.f32 %v2186, %v2259
  %s2265 = scalar_lea.vmem %s5, 128
  %v2266 = vld [vmem:[%s2265] sm:$0xf]
  %v2267 = vld [vmem:[%s2265 + $0x4] sm:$0xf]
  %v2268 = vld [vmem:[%s2265 + $0x8] sm:$0xf]
  %v2269 = vld [vmem:[%s2265 + $0xc] sm:$0xf]
  %v2270 = vld [vmem:[%s2265 + $0x10] sm:$0xf]
  %v2271 = vld [vmem:[%s2265 + $0x14] sm:$0xf]
  %v2272 = vld [vmem:[%s2265 + $0x18] sm:$0xf]
  %v2273 = vld [vmem:[%s2265 + $0x1c] sm:$0xf]
  %v2274 = vrot.slane %v1954, 4
  %v2283 = vunpack.c.l.b16 %v2266
  %v2284 = vunpack.c.l.b16 %v2267
  %v2285 = vunpack.c.l.b16 %v2268
  %v2286 = vunpack.c.l.b16 %v2269
  %v2287 = vunpack.c.l.b16 %v2270
  %v2288 = vunpack.c.l.b16 %v2271
  %v2289 = vunpack.c.l.b16 %v2272
  %v2290 = vunpack.c.l.b16 %v2273
  %v2291 = vpack.c.b16 %v2284, %v2283
  %v2292 = vpack.c.b16 %v2286, %v2285
  %v2293 = vpack.c.b16 %v2288, %v2287
  %v2294 = vpack.c.b16 %v2290, %v2289
  %v2300 = vsel %vm1998, %v2274, 0
  %2302 = vmatprep.subr.bf16.mxu0 0
  %2303 = vmatpush1.bf16.msra.mxu0 %v2291
  %2304 = vmatprep.subr.bf16.mxu0 0
  %2305 = vmatpush1.bf16.msra.mxu0 %v2292
  %2306 = vmatprep.subr.bf16.mxu0 0
  %2307 = vmatpush1.bf16.msra.mxu0 %v2293
  %2308 = vmatprep.subr.bf16.mxu0 0
  %2309 = vmatpush1.bf16.msra.mxu0 %v2294
  %2310 = vmatprep.subr.bf16.mxu0 0
  %2311 = vmatpush1.bf16.msra.mxu0 0
  %2312 = vmatprep.subr.bf16.mxu0 0
  %2313 = vmatpush1.bf16.msra.mxu0 0
  %2314 = vmatprep.subr.bf16.mxu0 0
  %2315 = vmatpush1.bf16.msra.mxu0 0
  %2316 = vmatprep.subr.bf16.mxu0 0
  %2317 = vmatpush1.bf16.msra.mxu0 0
  %2318 = vmatprep.subr.bf16.mxu0 0
  %2319 = vmatpush1.bf16.msra.mxu0 0
  %2320 = vmatprep.subr.bf16.mxu0 0
  %2321 = vmatpush1.bf16.msra.mxu0 0
  %2322 = vmatprep.subr.bf16.mxu0 0
  %2323 = vmatpush1.bf16.msra.mxu0 0
  %2324 = vmatprep.subr.bf16.mxu0 0
  %2325 = vmatpush1.bf16.msra.mxu0 0
  %2326 = vmatprep.subr.bf16.mxu0 0
  %2327 = vmatpush1.bf16.msra.mxu0 0
  %2328 = vmatprep.subr.bf16.mxu0 0
  %2329 = vmatpush1.bf16.msra.mxu0 0
  %2330 = vmatprep.subr.bf16.mxu0 0
  %2331 = vmatpush1.bf16.msra.mxu0 0
  %2332 = vmatprep.subr.bf16.mxu0 0
  %2333 = vmatpush1.bf16.msra.mxu0 0
  %2334 = vmatprep.mubr.bf16.mxu0 0
  %2335 = vmatmul.mubr.bf16.gmra.mrb[0].mxu0 %v2300
  %v2336 = vpop.f32.mrb[0].mxu0
  %v2337 = vadd.f32 0.0, %v2336
  %v2338 = vpop.f32.mrb[0].mxu0
  %v2339 = vpop.f32.mrb[0].mxu0
  %v2340 = vpop.f32.mrb[0].mxu0
  %2341 = vdwg.mxu0
  %v2342 = vadd.f32 %v2264, %v2337
  %s2343 = scalar_lea.vmem %s5, 160
  %v2344 = vld [vmem:[%s2343] sm:$0xf]
  %v2345 = vld [vmem:[%s2343 + $0x4] sm:$0xf]
  %v2346 = vld [vmem:[%s2343 + $0x8] sm:$0xf]
  %v2347 = vld [vmem:[%s2343 + $0xc] sm:$0xf]
  %v2348 = vld [vmem:[%s2343 + $0x10] sm:$0xf]
  %v2349 = vld [vmem:[%s2343 + $0x14] sm:$0xf]
  %v2350 = vld [vmem:[%s2343 + $0x18] sm:$0xf]
  %v2351 = vld [vmem:[%s2343 + $0x1c] sm:$0xf]
  %v2352 = vrot.slane %v1954, 5
  %v2361 = vunpack.c.l.b16 %v2344
  %v2362 = vunpack.c.l.b16 %v2345
  %v2363 = vunpack.c.l.b16 %v2346
  %v2364 = vunpack.c.l.b16 %v2347
  %v2365 = vunpack.c.l.b16 %v2348
  %v2366 = vunpack.c.l.b16 %v2349
  %v2367 = vunpack.c.l.b16 %v2350
  %v2368 = vunpack.c.l.b16 %v2351
  %v2369 = vpack.c.b16 %v2362, %v2361
  %v2370 = vpack.c.b16 %v2364, %v2363
  %v2371 = vpack.c.b16 %v2366, %v2365
  %v2372 = vpack.c.b16 %v2368, %v2367
  %v2378 = vsel %vm1998, %v2352, 0
  %2380 = vmatprep.subr.bf16.mxu0 0
  %2381 = vmatpush1.bf16.msra.mxu0 %v2369
  %2382 = vmatprep.subr.bf16.mxu0 0
  %2383 = vmatpush1.bf16.msra.mxu0 %v2370
  %2384 = vmatprep.subr.bf16.mxu0 0
  %2385 = vmatpush1.bf16.msra.mxu0 %v2371
  %2386 = vmatprep.subr.bf16.mxu0 0
  %2387 = vmatpush1.bf16.msra.mxu0 %v2372
  %2388 = vmatprep.subr.bf16.mxu0 0
  %2389 = vmatpush1.bf16.msra.mxu0 0
  %2390 = vmatprep.subr.bf16.mxu0 0
  %2391 = vmatpush1.bf16.msra.mxu0 0
  %2392 = vmatprep.subr.bf16.mxu0 0
  %2393 = vmatpush1.bf16.msra.mxu0 0
  %2394 = vmatprep.subr.bf16.mxu0 0
  %2395 = vmatpush1.bf16.msra.mxu0 0
  %2396 = vmatprep.subr.bf16.mxu0 0
  %2397 = vmatpush1.bf16.msra.mxu0 0
  %2398 = vmatprep.subr.bf16.mxu0 0
  %2399 = vmatpush1.bf16.msra.mxu0 0
  %2400 = vmatprep.subr.bf16.mxu0 0
  %2401 = vmatpush1.bf16.msra.mxu0 0
  %2402 = vmatprep.subr.bf16.mxu0 0
  %2403 = vmatpush1.bf16.msra.mxu0 0
  %2404 = vmatprep.subr.bf16.mxu0 0
  %2405 = vmatpush1.bf16.msra.mxu0 0
  %2406 = vmatprep.subr.bf16.mxu0 0
  %2407 = vmatpush1.bf16.msra.mxu0 0
  %2408 = vmatprep.subr.bf16.mxu0 0
  %2409 = vmatpush1.bf16.msra.mxu0 0
  %2410 = vmatprep.subr.bf16.mxu0 0
  %2411 = vmatpush1.bf16.msra.mxu0 0
  %2412 = vmatprep.mubr.bf16.mxu0 0
  %2413 = vmatmul.mubr.bf16.gmra.mrb[0].mxu0 %v2378
  %v2414 = vpop.f32.mrb[0].mxu0
  %v2415 = vadd.f32 0.0, %v2414
  %v2416 = vpop.f32.mrb[0].mxu0
  %v2417 = vpop.f32.mrb[0].mxu0
  %v2418 = vpop.f32.mrb[0].mxu0
  %2419 = vdwg.mxu0
  %v2420 = vadd.f32 %v2342, %v2415
  %s2421 = scalar_lea.vmem %s5, 192
  %v2422 = vld [vmem:[%s2421] sm:$0xf]
  %v2423 = vld [vmem:[%s2421 + $0x4] sm:$0xf]
  %v2424 = vld [vmem:[%s2421 + $0x8] sm:$0xf]
  %v2425 = vld [vmem:[%s2421 + $0xc] sm:$0xf]
  %v2426 = vld [vmem:[%s2421 + $0x10] sm:$0xf]
  %v2427 = vld [vmem:[%s2421 + $0x14] sm:$0xf]
  %v2428 = vld [vmem:[%s2421 + $0x18] sm:$0xf]
  %v2429 = vld [vmem:[%s2421 + $0x1c] sm:$0xf]
  %v2430 = vrot.slane %v1954, 6
  %v2439 = vunpack.c.l.b16 %v2422
  %v2440 = vunpack.c.l.b16 %v2423
  %v2441 = vunpack.c.l.b16 %v2424
  %v2442 = vunpack.c.l.b16 %v2425
  %v2443 = vunpack.c.l.b16 %v2426
  %v2444 = vunpack.c.l.b16 %v2427
  %v2445 = vunpack.c.l.b16 %v2428
  %v2446 = vunpack.c.l.b16 %v2429
  %v2447 = vpack.c.b16 %v2440, %v2439
  %v2448 = vpack.c.b16 %v2442, %v2441
  %v2449 = vpack.c.b16 %v2444, %v2443
  %v2450 = vpack.c.b16 %v2446, %v2445
  %v2456 = vsel %vm1998, %v2430, 0
  %2458 = vmatprep.subr.bf16.mxu0 0
  %2459 = vmatpush1.bf16.msra.mxu0 %v2447
  %2460 = vmatprep.subr.bf16.mxu0 0
  %2461 = vmatpush1.bf16.msra.mxu0 %v2448
  %2462 = vmatprep.subr.bf16.mxu0 0
  %2463 = vmatpush1.bf16.msra.mxu0 %v2449
  %2464 = vmatprep.subr.bf16.mxu0 0
  %2465 = vmatpush1.bf16.msra.mxu0 %v2450
  %2466 = vmatprep.subr.bf16.mxu0 0
  %2467 = vmatpush1.bf16.msra.mxu0 0
  %2468 = vmatprep.subr.bf16.mxu0 0
  %2469 = vmatpush1.bf16.msra.mxu0 0
  %2470 = vmatprep.subr.bf16.mxu0 0
  %2471 = vmatpush1.bf16.msra.mxu0 0
  %2472 = vmatprep.subr.bf16.mxu0 0
  %2473 = vmatpush1.bf16.msra.mxu0 0
  %2474 = vmatprep.subr.bf16.mxu0 0
  %2475 = vmatpush1.bf16.msra.mxu0 0
  %2476 = vmatprep.subr.bf16.mxu0 0
  %2477 = vmatpush1.bf16.msra.mxu0 0
  %2478 = vmatprep.subr.bf16.mxu0 0
  %2479 = vmatpush1.bf16.msra.mxu0 0
  %2480 = vmatprep.subr.bf16.mxu0 0
  %2481 = vmatpush1.bf16.msra.mxu0 0
  %2482 = vmatprep.subr.bf16.mxu0 0
  %2483 = vmatpush1.bf16.msra.mxu0 0
  %2484 = vmatprep.subr.bf16.mxu0 0
  %2485 = vmatpush1.bf16.msra.mxu0 0
  %2486 = vmatprep.subr.bf16.mxu0 0
  %2487 = vmatpush1.bf16.msra.mxu0 0
  %2488 = vmatprep.subr.bf16.mxu0 0
  %2489 = vmatpush1.bf16.msra.mxu0 0
  %2490 = vmatprep.mubr.bf16.mxu0 0
  %2491 = vmatmul.mubr.bf16.gmra.mrb[0].mxu0 %v2456
  %v2492 = vpop.f32.mrb[0].mxu0
  %v2493 = vadd.f32 0.0, %v2492
  %v2494 = vpop.f32.mrb[0].mxu0
  %v2495 = vpop.f32.mrb[0].mxu0
  %v2496 = vpop.f32.mrb[0].mxu0
  %2497 = vdwg.mxu0
  %v2498 = vadd.f32 %v2420, %v2493
  %v2499 = vld [vmem:[%s6] sm:$0x1]
  %v2501 = vlaneseq
  %v2502 = vshrl.u32 %v2501, 7
  %v2503 = vsub.s32 0, %v2502
  %v2504 = vrot.slane %v2499, %v2503
  %v2506 = vadd.f32 %v2498, %v2504
  %v2507 = vmax.f32 %v2506, 0.0
  %v2508 = vld [vmem:[%s7] sm:$0xff]
  %v2509 = vld [vmem:[%s7 + $0x8] sm:$0xff]
  %v2510 = vld [vmem:[%s7 + $0x10] sm:$0xff]
  %v2511 = vld [vmem:[%s7 + $0x18] sm:$0xff]
  %v2512 = vld [vmem:[%s7 + $0x20] sm:$0xff]
  %v2513 = vld [vmem:[%s7 + $0x28] sm:$0xff]
  %v2514 = vld [vmem:[%s7 + $0x30] sm:$0xff]
  %v2515 = vld [vmem:[%s7 + $0x38] sm:$0xff]
  %v2516 = vld [vmem:[#allocation3] sm:$0x1]
  %v2518 = vlaneseq
  %v2519 = vshrl.u32 %v2518, 7
  %v2520 = vsub.s32 0, %v2519
  %v2521 = vrot.slane %v2516, %v2520
  %v2524 = vsel %vm1998, %v2507, 0
  %2526 = vmatprep.subr.mxu0 0.0
  %2527 = vmatpush1.msra.mxu0 %v2508
  %2528 = vmatprep.subr.mxu0 0.0
  %2529 = vmatpush1.msra.mxu0 %v2509
  %2530 = vmatprep.subr.mxu0 0.0
  %2531 = vmatpush1.msra.mxu0 %v2510
  %2532 = vmatprep.subr.mxu0 0.0
  %2533 = vmatpush1.msra.mxu0 %v2511
  %2534 = vmatprep.subr.mxu0 0.0
  %2535 = vmatpush1.msra.mxu0 %v2512
  %2536 = vmatprep.subr.mxu0 0.0
  %2537 = vmatpush1.msra.mxu0 %v2513
  %2538 = vmatprep.subr.mxu0 0.0
  %2539 = vmatpush1.msra.mxu0 %v2514
  %2540 = vmatprep.subr.mxu0 0.0
  %2541 = vmatpush1.msra.mxu0 %v2515
  %2542 = vmatprep.subr.mxu0 0.0
  %2543 = vmatpush1.msra.mxu0 0.0
  %2544 = vmatprep.subr.mxu0 0.0
  %2545 = vmatpush1.msra.mxu0 0.0
  %2546 = vmatprep.subr.mxu0 0.0
  %2547 = vmatpush1.msra.mxu0 0.0
  %2548 = vmatprep.subr.mxu0 0.0
  %2549 = vmatpush1.msra.mxu0 0.0
  %2550 = vmatprep.subr.mxu0 0.0
  %2551 = vmatpush1.msra.mxu0 0.0
  %2552 = vmatprep.subr.mxu0 0.0
  %2553 = vmatpush1.msra.mxu0 0.0
  %2554 = vmatprep.subr.mxu0 0.0
  %2555 = vmatpush1.msra.mxu0 0.0
  %2556 = vmatprep.subr.mxu0 0.0
  %2557 = vmatpush1.msra.mxu0 0.0
  %2558 = vmatprep.subr.mxu0 0.0
  %2559 = vmatpush1.msra.mxu0 0.0
  %2560 = vmatprep.subr.mxu0 0.0
  %2561 = vmatpush1.msra.mxu0 0.0
  %2562 = vmatprep.subr.mxu0 0.0
  %2563 = vmatpush1.msra.mxu0 0.0
  %2564 = vmatprep.subr.mxu0 0.0
  %2565 = vmatpush1.msra.mxu0 0.0
  %2566 = vmatprep.subr.mxu0 0.0
  %2567 = vmatpush1.msra.mxu0 0.0
  %2568 = vmatprep.subr.mxu0 0.0
  %2569 = vmatpush1.msra.mxu0 0.0
  %2570 = vmatprep.subr.mxu0 0.0
  %2571 = vmatpush1.msra.mxu0 0.0
  %2572 = vmatprep.subr.mxu0 0.0
  %2573 = vmatpush1.msra.mxu0 0.0
  %2574 = vmatprep.subr.mxu0 0.0
  %2575 = vmatpush1.msra.mxu0 0.0
  %2576 = vmatprep.subr.mxu0 0.0
  %2577 = vmatpush1.msra.mxu0 0.0
  %2578 = vmatprep.subr.mxu0 0.0
  %2579 = vmatpush1.msra.mxu0 0.0
  %2580 = vmatprep.subr.mxu0 0.0
  %2581 = vmatpush1.msra.mxu0 0.0
  %2582 = vmatprep.subr.mxu0 0.0
  %2583 = vmatpush1.msra.mxu0 0.0
  %2584 = vmatprep.subr.mxu0 0.0
  %2585 = vmatpush1.msra.mxu0 0.0
  %2586 = vmatprep.subr.mxu0 0.0
  %2587 = vmatpush1.msra.mxu0 0.0
  %2588 = vmatprep.subr.mxu0 0.0
  %2589 = vmatpush1.msra.mxu0 0.0
  %2590 = vmatprep.mubr.f32.mxu0 0.0
  %2591 = vmatmul.mubr.f32.gmra.mrb[0].mxu0 %v2524
  %v2592 = vpop.f32.mrb[0].mxu0
  %v2593 = vadd.f32 %v2521, %v2592
  %v2594 = vpop.f32.mrb[0].mxu0
  %2595 = vdwg.mxu0
  %v2596 = vxor.u32 %v2593, 2147483648
  %v2597 = vmul.f32 %v2596, 1.442695
  %v2598 = vpow.pop %v2597
  %v2599 = vadd.f32 %v2598, 1.0
  %v2600 = vrcp.pop %v2599
  %v2601 = vmul.f32 1.0, %v2600
  %vm2602 = vcmask 1024
  %2603 = vst.msk [vmem:[%s9] sm:$0x3] %vm2602, %v2601
  // Predicated region
  $region38: #{cdr123_bilstm_forward.1} parent=0 // pred_check
    _
  $region39: #{cdr123_bilstm_forward.1} parent=0 // pred_check_branch
    %2605 = sbr.rel (0) target = $region41
  $region40: #{cdr123_bilstm_forward.1} parent=0 // pred_region
    _
  $region41: #{cdr123_bilstm_forward.1} parent=0 // pred_fallthru
    _
  // Predicated region
  $region42: #{cdr123_bilstm_forward.1} parent=0 // pred_check
    _
  $region43: #{cdr123_bilstm_forward.1} parent=0 // pred_check_branch
    %2607 = sbr.rel (0) target = $region45
  $region44: #{cdr123_bilstm_forward.1} parent=0 // pred_region
    _
  $region45: #{cdr123_bilstm_forward.1} parent=0 // pred_fallthru
    _

</llo_original>
